<compile_context>
chip_gen: v6e
topology: v6e:2x2x1
jax: 0.10.0
libtpu: 0.0.40
codegen_flags: <defaults>
</compile_context>

<pallas_src>
import functools

import jax
import jax.numpy as jnp
from jax.experimental import pallas as pl
from jax.experimental.pallas import tpu as pltpu

LANE = 128     # TPU vreg lane width
SUBLANE = 8    # f32 sublane count


def _round_up(x, m):
    return (x + m - 1) // m * m


# ----------------------------------------------------------------------------
# Fused kernel: stacked LSTM over time + linear + sigmoid head, one invocation.
# Gate order matches PyTorch nn.LSTM: [i, f, g, o]; each gate block is padded
# to Hp (multiple of 128) lanes so every slice is lane-aligned.
# ----------------------------------------------------------------------------
def _fused_rnn_kernel(num_layers, T, Bp, Hp, *refs):
    x_ref = refs[0]                                   # (T*Bp, E)      bf16
    layer_refs = refs[1:1 + 3 * num_layers]           # per layer: w_ih, w_hh, b
    linw_ref = refs[1 + 3 * num_layers]               # (1, Hp)        f32
    linb_ref = refs[2 + 3 * num_layers]               # (1, 1)         f32
    out_ref = refs[3 + 3 * num_layers]                # (Bp, 1)        f32
    seq_scr = refs[4 + 3 * num_layers]                # (T*Bp, Hp)     bf16 scratch
    gx_scr = refs[5 + 3 * num_layers]                 # (T*Bp, 4*Hp)   f32 scratch

    h = None
    for layer in range(num_layers):
        wih_ref = layer_refs[3 * layer + 0]           # (in_dim, 4*Hp) bf16
        whh_ref = layer_refs[3 * layer + 1]           # (Hp, 4*Hp)     bf16
        b_ref = layer_refs[3 * layer + 2]             # (1, 4*Hp)      f32

        # Time-parallel input projection + bias, hoisted off the serial path:
        # one large MXU matmul and a single broadcast bias add per layer.
        seq_in = x_ref[...] if layer == 0 else seq_scr[...]
        gx_scr[...] = (
            jnp.dot(seq_in, wih_ref[...], preferred_element_type=jnp.float32)
            + b_ref[...])

        h = jnp.zeros((Bp, Hp), jnp.float32)
        c = jnp.zeros((Bp, Hp), jnp.float32)
        last_layer = layer == num_layers - 1

        # Short static T: fully unrolled -> scheduler sees across timesteps.
        for t in range(T):
            gates = gx_scr[t * Bp:(t + 1) * Bp, :] + jnp.dot(
                h.astype(whh_ref.dtype), whh_ref[...],
                preferred_element_type=jnp.float32)
            # Lane-aligned gate blocks (Hp is a multiple of 128): no shuffles.
            i_g = jax.nn.sigmoid(gates[:, 0 * Hp:1 * Hp])
            f_g = jax.nn.sigmoid(gates[:, 1 * Hp:2 * Hp])
            g_g = jnp.tanh(gates[:, 2 * Hp:3 * Hp])
            o_g = jax.nn.sigmoid(gates[:, 3 * Hp:4 * Hp])
            c = f_g * c + i_g * g_g
            h = o_g * jnp.tanh(c)
            if not last_layer:
                # Bp multiple of 8, Hp multiple of 128 -> unmasked aligned store.
                seq_scr[t * Bp:(t + 1) * Bp, :] = h.astype(seq_scr.dtype)

    # Head: sigmoid(h_last @ W^T + b) as a VPU multiply + lane reduce (fills
    # otherwise-idle VPU/XLU slots; an N=1 MXU matmul would be pure overhead).
    y = jnp.sum(h * linw_ref[...], axis=-1, keepdims=True) + linb_ref[...]
    out_ref[...] = jax.nn.sigmoid(y).astype(out_ref.dtype)  # one tiny (Bp,1) store


def fused_rnn_forward(x_padded, lstm_layers, lin_w, lin_b, T, Bp, Hp, B):
    num_layers = len(lstm_layers)
    args = [x_padded]
    for lp in lstm_layers:
        args += [lp["w_ih"], lp["w_hh"], lp["bias"]]
    args += [lin_w, lin_b]

    kernel = functools.partial(_fused_rnn_kernel, num_layers, T, Bp, Hp)
    vmem = pltpu.MemorySpace.VMEM
    out = pl.pallas_call(
        kernel,
        out_shape=jax.ShapeDtypeStruct((Bp, 1), jnp.float32),
        in_specs=[pl.BlockSpec(memory_space=vmem)] * len(args),
        out_specs=pl.BlockSpec(memory_space=vmem),
        scratch_shapes=[
            pltpu.VMEM((T * Bp, Hp), jnp.bfloat16),     # inter-layer h sequence
            pltpu.VMEM((T * Bp, 4 * Hp), jnp.float32),  # precomputed gate inputs
        ],
    )(*args)
    return out[:B]


# ----------------------------------------------------------------------------
# Forward pass mirroring RNNModel.forward
# ----------------------------------------------------------------------------
@jax.jit
def rnn_model_forward(inp, params):
    B, T = inp.shape
    Hp = params["lstm"][0]["w_hh"].shape[0]
    Bp = _round_up(max(B, SUBLANE), SUBLANE)

    # Embedding lookup (XLA glue), then permute(1,0,2) -> time-major (T, B, E).
    emb = jnp.take(params["embedding"], inp, axis=0)        # (B, T, E)
    x = jnp.transpose(emb, (1, 0, 2))                       # (T, B, E)
    x = jnp.pad(x, ((0, 0), (0, Bp - B), (0, 0)))           # pad batch sublanes
    x = x.reshape(T * Bp, x.shape[-1]).astype(jnp.bfloat16)

    return fused_rnn_forward(x, params["lstm"], params["lin_w"],
                             params["lin_b"], T, Bp, Hp, B)


# ----------------------------------------------------------------------------
# Parameters: PyTorch-shaped init + packing (transpose / lane-pad / bf16 cast)
# ----------------------------------------------------------------------------
def init_torch_params(key, vocab_size, embed_dim, hidden_size, num_layers):
    """Synthetic parameters with the shapes PyTorch nn.LSTM / nn.Linear use."""
    keys = jax.random.split(key, 2 + 4 * num_layers)
    scale = 1.0 / (hidden_size ** 0.5)

    def u(k, shp):
        return jax.random.uniform(k, shp, jnp.float32, -scale, scale)

    params = {
        "embedding": jax.random.normal(
            keys[0], (vocab_size, embed_dim), jnp.float32) * 0.1,
        "lstm": [],
    }
    kidx = 1
    for layer in range(num_layers):
        in_dim = embed_dim if layer == 0 else hidden_size
        params["lstm"].append({
            "weight_ih": u(keys[kidx + 0], (4 * hidden_size, in_dim)),
            "weight_hh": u(keys[kidx + 1], (4 * hidden_size, hidden_size)),
            "bias_ih": u(keys[kidx + 2], (4 * hidden_size,)),
            "bias_hh": u(keys[kidx + 3], (4 * hidden_size,)),
        })
        kidx += 4
    params["linear_w"] = u(keys[-1], (1, hidden_size))
    params["linear_b"] = jnp.zeros((1,), jnp.float32)
    return params


def _pad_gate_lanes(w, H, Hp):
    """(rows, 4*H) -> (rows, 4*Hp): each gate block zero-padded to Hp lanes."""
    rows = w.shape[0]
    w = w.reshape(rows, 4, H)
    w = jnp.pad(w, ((0, 0), (0, 0), (0, Hp - H)))
    return w.reshape(rows, 4 * Hp)


def pack_params(tp, compute_dtype=jnp.bfloat16):
    """Transpose, lane-pad and cast PyTorch-shaped params for the fused kernel.

    Padded gate lanes get zero weights & bias, so their pre-activations are
    always 0 -> i=f=o=0.5, g=0 -> c_pad, h_pad stay exactly 0 and never leak
    into valid lanes (padded W_hh / W_ih rows are also zero).
    """
    H = tp["lstm"][0]["weight_hh"].shape[1]
    Hp = _round_up(H, LANE)
    packed = {"embedding": tp["embedding"], "lstm": []}
    for layer, lp in enumerate(tp["lstm"]):
        w_ih = _pad_gate_lanes(lp["weight_ih"].T, H, Hp)       # (in, 4*Hp)
        if layer > 0:                                          # pad contraction dim
            w_ih = jnp.pad(w_ih, ((0, Hp - H), (0, 0)))        # (Hp, 4*Hp)
        w_hh = _pad_gate_lanes(lp["weight_hh"].T, H, Hp)       # (H, 4*Hp)
        w_hh = jnp.pad(w_hh, ((0, Hp - H), (0, 0)))            # (Hp, 4*Hp)
        bias = _pad_gate_lanes(
            (lp["bias_ih"] + lp["bias_hh"])[None, :], H, Hp)   # (1, 4*Hp)
        packed["lstm"].append({
            "w_ih": w_ih.astype(compute_dtype),
            "w_hh": w_hh.astype(compute_dtype),
            "bias": bias.astype(jnp.float32),                  # VPU add stays f32
        })
    packed["lin_w"] = jnp.pad(
        tp["linear_w"], ((0, 0), (0, Hp - H))).astype(jnp.float32)   # (1, Hp)
    packed["lin_b"] = tp["linear_b"].reshape(1, 1).astype(jnp.float32)
    return packed


# ----------------------------------------------------------------------------
# Plain-JAX reference (PyTorch nn.LSTM semantics) for correctness checking
# ----------------------------------------------------------------------------
def rnn_model_reference(inp, tp, compute_dtype=jnp.bfloat16):
    emb = jnp.take(tp["embedding"], inp, axis=0)
    x = jnp.transpose(emb, (1, 0, 2))                          # (T, B, E)
    T, B, _ = x.shape
    seq = x
    for lp in tp["lstm"]:
        H = lp["weight_hh"].shape[1]
        wih = lp["weight_ih"].T.astype(compute_dtype)
        whh = lp["weight_hh"].T.astype(compute_dtype)
        bias = (lp["bias_ih"] + lp["bias_hh"]).astype(jnp.float32)
        h = jnp.zeros((B, H), jnp.float32)
        c = jnp.zeros((B, H), jnp.float32)
        outs = []
        for t in range(T):
            g = (jnp.dot(seq[t].astype(compute_dtype), wih,
                         preferred_element_type=jnp.float32)
                 + jnp.dot(h.astype(compute_dtype), whh,
                           preferred_element_type=jnp.float32)
                 + bias)
            i_g = jax.nn.sigmoid(g[:, :H])
            f_g = jax.nn.sigmoid(g[:, H:2 * H])
            g_g = jnp.tanh(g[:, 2 * H:3 * H])
            o_g = jax.nn.sigmoid(g[:, 3 * H:])
            c = f_g * c + i_g * g_g
            h = o_g * jnp.tanh(c)
            outs.append(h)
        seq = jnp.stack(outs, axis=0)
    y = jnp.dot(seq[-1], tp["linear_w"].T.astype(jnp.float32)) + tp["linear_b"]
    return jax.nn.sigmoid(y)


if __name__ == "__main__":
    VOCAB = 16
    EMBED_DIM = 32
    HIDDEN = 32
    NUM_LAYERS = 2
    BATCH = 2
    SEQ = 8

    key = jax.random.PRNGKey(0)
    k_param, k_inp = jax.random.split(key)

    torch_params = init_torch_params(k_param, VOCAB, EMBED_DIM, HIDDEN, NUM_LAYERS)
    params = pack_params(torch_params)
    # inp: (B, T) int token ids, as the PyTorch module expects
    inp = jax.random.randint(k_inp, (BATCH, SEQ), 0, VOCAB, dtype=jnp.int32)

    out = jax.block_until_ready(rnn_model_forward(inp, params))
    ref = jax.block_until_ready(rnn_model_reference(inp, torch_params))

    assert out.shape == (BATCH, 1)
    assert bool(jnp.all((out >= 0.0) & (out <= 1.0)))
    assert bool(jnp.allclose(out, ref, atol=2e-2, rtol=2e-2))
    print("KERNEL_OK")
</pallas_src>

<mosaic_0001>
module attributes {stable_mosaic.version = 11 : i64} {
  func.func @_fused_rnn_kernel(%arg0: memref<64x32xbf16, #tpu.memory_space<vmem>>, %arg1: memref<32x512xbf16, #tpu.memory_space<vmem>>, %arg2: memref<128x512xbf16, #tpu.memory_space<vmem>>, %arg3: memref<1x512xf32, #tpu.memory_space<vmem>>, %arg4: memref<128x512xbf16, #tpu.memory_space<vmem>>, %arg5: memref<128x512xbf16, #tpu.memory_space<vmem>>, %arg6: memref<1x512xf32, #tpu.memory_space<vmem>>, %arg7: memref<1x128xf32, #tpu.memory_space<vmem>>, %arg8: memref<1x1xf32, #tpu.memory_space<vmem>>, %arg9: memref<8x1xf32, #tpu.memory_space<vmem>>, %arg10: memref<64x128xbf16, #tpu.memory_space<vmem>>, %arg11: memref<64x512xf32, #tpu.memory_space<vmem>>) attributes {dimension_semantics = [], scalar_prefetch = 0 : i64, scratch_operands = 2 : i64, tpu.core_type = #tpu.core_type<tc>} {
    %c0 = arith.constant 0 : index
    %c0_0 = arith.constant 0 : index
    %0 = vector.load %arg0[%c0, %c0_0] : memref<64x32xbf16, #tpu.memory_space<vmem>>, vector<64x32xbf16>
    %c0_1 = arith.constant 0 : index
    %c0_2 = arith.constant 0 : index
    %1 = vector.load %arg1[%c0_1, %c0_2] : memref<32x512xbf16, #tpu.memory_space<vmem>>, vector<32x512xbf16>
    %cst = arith.constant dense<0.000000e+00> : vector<64x512xf32>
    %2 = tpu.matmul %0, %1, %cst {dimension_numbers = #tpu.dot_dimension_numbers<[1], [0], [0], [1], [0, 0, 1, 1], [], []>} : vector<64x32xbf16>, vector<32x512xbf16>, vector<64x512xf32> -> vector<64x512xf32>
    %c0_3 = arith.constant 0 : index
    %c0_4 = arith.constant 0 : index
    %3 = vector.load %arg3[%c0_3, %c0_4] : memref<1x512xf32, #tpu.memory_space<vmem>>, vector<1x512xf32>
    %4 = vector.broadcast %3 : vector<1x512xf32> to vector<64x512xf32>
    %5 = arith.addf %2, %4 : vector<64x512xf32>
    %c0_5 = arith.constant 0 : index
    %c0_6 = arith.constant 0 : index
    %6 = vector.load %arg11[%c0_5, %c0_6] : memref<64x512xf32, #tpu.memory_space<vmem>>, vector<64x512xf32>
    tpu.vector_store %arg11[%c0_5, %c0_6], %5 {strides = array<i32>} : memref<64x512xf32, #tpu.memory_space<vmem>>, vector<64x512xf32>,
    %cst_7 = arith.constant 0.000000e+00 : f32
    %7 = vector.broadcast %cst_7 : f32 to vector<8x128xf32>
    %cst_8 = arith.constant 0.000000e+00 : f32
    %8 = vector.broadcast %cst_8 : f32 to vector<8x128xf32>
    %c0_9 = arith.constant 0 : index
    %c0_10 = arith.constant 0 : index
    %9 = vector.load %arg11[%c0_9, %c0_10] : memref<64x512xf32, #tpu.memory_space<vmem>>, vector<8x512xf32>
    %10 = arith.truncf %7 : vector<8x128xf32> to vector<8x128xbf16>
    %c0_11 = arith.constant 0 : index
    %c0_12 = arith.constant 0 : index
    %11 = vector.load %arg2[%c0_11, %c0_12] : memref<128x512xbf16, #tpu.memory_space<vmem>>, vector<128x512xbf16>
    %cst_13 = arith.constant dense<0.000000e+00> : vector<8x512xf32>
    %12 = tpu.matmul %10, %11, %cst_13 {dimension_numbers = #tpu.dot_dimension_numbers<[1], [0], [0], [1], [0, 0, 1, 1], [], []>} : vector<8x128xbf16>, vector<128x512xbf16>, vector<8x512xf32> -> vector<8x512xf32>
    %13 = arith.addf %9, %12 : vector<8x512xf32>
    %14 = vector.extract_strided_slice %13 {offsets = [0, 0], sizes = [8, 128], strides = [1, 1]} : vector<8x512xf32> to vector<8x128xf32>
    %15 = arith.negf %14 : vector<8x128xf32>
    %16 = math.exp %15 : vector<8x128xf32>
    %cst_14 = arith.constant 1.000000e+00 : f32
    %17 = vector.broadcast %cst_14 : f32 to vector<8x128xf32>
    %18 = arith.addf %17, %16 : vector<8x128xf32>
    %19 = arith.divf %17, %18 : vector<8x128xf32>
    %20 = vector.extract_strided_slice %13 {offsets = [0, 128], sizes = [8, 128], strides = [1, 1]} : vector<8x512xf32> to vector<8x128xf32>
    %21 = arith.negf %20 : vector<8x128xf32>
    %22 = math.exp %21 : vector<8x128xf32>
    %cst_15 = arith.constant 1.000000e+00 : f32
    %23 = vector.broadcast %cst_15 : f32 to vector<8x128xf32>
    %24 = arith.addf %23, %22 : vector<8x128xf32>
    %25 = arith.divf %23, %24 : vector<8x128xf32>
    %26 = vector.extract_strided_slice %13 {offsets = [0, 256], sizes = [8, 128], strides = [1, 1]} : vector<8x512xf32> to vector<8x128xf32>
    %27 = math.tanh %26 : vector<8x128xf32>
    %28 = vector.extract_strided_slice %13 {offsets = [0, 384], sizes = [8, 128], strides = [1, 1]} : vector<8x512xf32> to vector<8x128xf32>
    %29 = arith.negf %28 : vector<8x128xf32>
    %30 = math.exp %29 : vector<8x128xf32>
    %cst_16 = arith.constant 1.000000e+00 : f32
    %31 = vector.broadcast %cst_16 : f32 to vector<8x128xf32>
    %32 = arith.addf %31, %30 : vector<8x128xf32>
    %33 = arith.divf %31, %32 : vector<8x128xf32>
    %34 = arith.mulf %25, %8 : vector<8x128xf32>
    %35 = arith.mulf %19, %27 : vector<8x128xf32>
    %36 = arith.addf %34, %35 : vector<8x128xf32>
    %37 = math.tanh %36 : vector<8x128xf32>
    %38 = arith.mulf %33, %37 : vector<8x128xf32>
    %39 = arith.truncf %38 : vector<8x128xf32> to vector<8x128xbf16>
    %c0_17 = arith.constant 0 : index
    %c0_18 = arith.constant 0 : index
    %40 = vector.load %arg10[%c0_17, %c0_18] : memref<64x128xbf16, #tpu.memory_space<vmem>>, vector<8x128xbf16>
    tpu.vector_store %arg10[%c0_17, %c0_18], %39 {strides = array<i32>} : memref<64x128xbf16, #tpu.memory_space<vmem>>, vector<8x128xbf16>,
    %c8 = arith.constant 8 : index
    %c0_19 = arith.constant 0 : index
    %41 = vector.load %arg11[%c8, %c0_19] : memref<64x512xf32, #tpu.memory_space<vmem>>, vector<8x512xf32>
    %42 = arith.truncf %38 : vector<8x128xf32> to vector<8x128xbf16>
    %c0_20 = arith.constant 0 : index
    %c0_21 = arith.constant 0 : index
    %43 = vector.load %arg2[%c0_20, %c0_21] : memref<128x512xbf16, #tpu.memory_space<vmem>>, vector<128x512xbf16>
    %cst_22 = arith.constant dense<0.000000e+00> : vector<8x512xf32>
    %44 = tpu.matmul %42, %43, %cst_22 {dimension_numbers = #tpu.dot_dimension_numbers<[1], [0], [0], [1], [0, 0, 1, 1], [], []>} : vector<8x128xbf16>, vector<128x512xbf16>, vector<8x512xf32> -> vector<8x512xf32>
    %45 = arith.addf %41, %44 : vector<8x512xf32>
    %46 = vector.extract_strided_slice %45 {offsets = [0, 0], sizes = [8, 128], strides = [1, 1]} : vector<8x512xf32> to vector<8x128xf32>
    %47 = arith.negf %46 : vector<8x128xf32>
    %48 = math.exp %47 : vector<8x128xf32>
    %cst_23 = arith.constant 1.000000e+00 : f32
    %49 = vector.broadcast %cst_23 : f32 to vector<8x128xf32>
    %50 = arith.addf %49, %48 : vector<8x128xf32>
    %51 = arith.divf %49, %50 : vector<8x128xf32>
    %52 = vector.extract_strided_slice %45 {offsets = [0, 128], sizes = [8, 128], strides = [1, 1]} : vector<8x512xf32> to vector<8x128xf32>
    %53 = arith.negf %52 : vector<8x128xf32>
    %54 = math.exp %53 : vector<8x128xf32>
    %cst_24 = arith.constant 1.000000e+00 : f32
    %55 = vector.broadcast %cst_24 : f32 to vector<8x128xf32>
    %56 = arith.addf %55, %54 : vector<8x128xf32>
    %57 = arith.divf %55, %56 : vector<8x128xf32>
    %58 = vector.extract_strided_slice %45 {offsets = [0, 256], sizes = [8, 128], strides = [1, 1]} : vector<8x512xf32> to vector<8x128xf32>
    %59 = math.tanh %58 : vector<8x128xf32>
    %60 = vector.extract_strided_slice %45 {offsets = [0, 384], sizes = [8, 128], strides = [1, 1]} : vector<8x512xf32> to vector<8x128xf32>
    %61 = arith.negf %60 : vector<8x128xf32>
    %62 = math.exp %61 : vector<8x128xf32>
    %cst_25 = arith.constant 1.000000e+00 : f32
    %63 = vector.broadcast %cst_25 : f32 to vector<8x128xf32>
    %64 = arith.addf %63, %62 : vector<8x128xf32>
    %65 = arith.divf %63, %64 : vector<8x128xf32>
    %66 = arith.mulf %57, %36 : vector<8x128xf32>
    %67 = arith.mulf %51, %59 : vector<8x128xf32>
    %68 = arith.addf %66, %67 : vector<8x128xf32>
    %69 = math.tanh %68 : vector<8x128xf32>
    %70 = arith.mulf %65, %69 : vector<8x128xf32>
    %71 = arith.truncf %70 : vector<8x128xf32> to vector<8x128xbf16>
    %c8_26 = arith.constant 8 : index
    %c0_27 = arith.constant 0 : index
    %72 = vector.load %arg10[%c8_26, %c0_27] : memref<64x128xbf16, #tpu.memory_space<vmem>>, vector<8x128xbf16>
    tpu.vector_store %arg10[%c8_26, %c0_27], %71 {strides = array<i32>} : memref<64x128xbf16, #tpu.memory_space<vmem>>, vector<8x128xbf16>,
    %c16 = arith.constant 16 : index
    %c0_28 = arith.constant 0 : index
    %73 = vector.load %arg11[%c16, %c0_28] : memref<64x512xf32, #tpu.memory_space<vmem>>, vector<8x512xf32>
    %74 = arith.truncf %70 : vector<8x128xf32> to vector<8x128xbf16>
    %c0_29 = arith.constant 0 : index
    %c0_30 = arith.constant 0 : index
    %75 = vector.load %arg2[%c0_29, %c0_30] : memref<128x512xbf16, #tpu.memory_space<vmem>>, vector<128x512xbf16>
    %cst_31 = arith.constant dense<0.000000e+00> : vector<8x512xf32>
    %76 = tpu.matmul %74, %75, %cst_31 {dimension_numbers = #tpu.dot_dimension_numbers<[1], [0], [0], [1], [0, 0, 1, 1], [], []>} : vector<8x128xbf16>, vector<128x512xbf16>, vector<8x512xf32> -> vector<8x512xf32>
    %77 = arith.addf %73, %76 : vector<8x512xf32>
    %78 = vector.extract_strided_slice %77 {offsets = [0, 0], sizes = [8, 128], strides = [1, 1]} : vector<8x512xf32> to vector<8x128xf32>
    %79 = arith.negf %78 : vector<8x128xf32>
    %80 = math.exp %79 : vector<8x128xf32>
    %cst_32 = arith.constant 1.000000e+00 : f32
    %81 = vector.broadcast %cst_32 : f32 to vector<8x128xf32>
    %82 = arith.addf %81, %80 : vector<8x128xf32>
    %83 = arith.divf %81, %82 : vector<8x128xf32>
    %84 = vector.extract_strided_slice %77 {offsets = [0, 128], sizes = [8, 128], strides = [1, 1]} : vector<8x512xf32> to vector<8x128xf32>
    %85 = arith.negf %84 : vector<8x128xf32>
    %86 = math.exp %85 : vector<8x128xf32>
    %cst_33 = arith.constant 1.000000e+00 : f32
    %87 = vector.broadcast %cst_33 : f32 to vector<8x128xf32>
    %88 = arith.addf %87, %86 : vector<8x128xf32>
    %89 = arith.divf %87, %88 : vector<8x128xf32>
    %90 = vector.extract_strided_slice %77 {offsets = [0, 256], sizes = [8, 128], strides = [1, 1]} : vector<8x512xf32> to vector<8x128xf32>
    %91 = math.tanh %90 : vector<8x128xf32>
    %92 = vector.extract_strided_slice %77 {offsets = [0, 384], sizes = [8, 128], strides = [1, 1]} : vector<8x512xf32> to vector<8x128xf32>
    %93 = arith.negf %92 : vector<8x128xf32>
    %94 = math.exp %93 : vector<8x128xf32>
    %cst_34 = arith.constant 1.000000e+00 : f32
    %95 = vector.broadcast %cst_34 : f32 to vector<8x128xf32>
    %96 = arith.addf %95, %94 : vector<8x128xf32>
    %97 = arith.divf %95, %96 : vector<8x128xf32>
    %98 = arith.mulf %89, %68 : vector<8x128xf32>
    %99 = arith.mulf %83, %91 : vector<8x128xf32>
    %100 = arith.addf %98, %99 : vector<8x128xf32>
    %101 = math.tanh %100 : vector<8x128xf32>
    %102 = arith.mulf %97, %101 : vector<8x128xf32>
    %103 = arith.truncf %102 : vector<8x128xf32> to vector<8x128xbf16>
    %c16_35 = arith.constant 16 : index
    %c0_36 = arith.constant 0 : index
    %104 = vector.load %arg10[%c16_35, %c0_36] : memref<64x128xbf16, #tpu.memory_space<vmem>>, vector<8x128xbf16>
    tpu.vector_store %arg10[%c16_35, %c0_36], %103 {strides = array<i32>} : memref<64x128xbf16, #tpu.memory_space<vmem>>, vector<8x128xbf16>,
    %c24 = arith.constant 24 : index
    %c0_37 = arith.constant 0 : index
    %105 = vector.load %arg11[%c24, %c0_37] : memref<64x512xf32, #tpu.memory_space<vmem>>, vector<8x512xf32>
    %106 = arith.truncf %102 : vector<8x128xf32> to vector<8x128xbf16>
    %c0_38 = arith.constant 0 : index
    %c0_39 = arith.constant 0 : index
    %107 = vector.load %arg2[%c0_38, %c0_39] : memref<128x512xbf16, #tpu.memory_space<vmem>>, vector<128x512xbf16>
    %cst_40 = arith.constant dense<0.000000e+00> : vector<8x512xf32>
    %108 = tpu.matmul %106, %107, %cst_40 {dimension_numbers = #tpu.dot_dimension_numbers<[1], [0], [0], [1], [0, 0, 1, 1], [], []>} : vector<8x128xbf16>, vector<128x512xbf16>, vector<8x512xf32> -> vector<8x512xf32>
    %109 = arith.addf %105, %108 : vector<8x512xf32>
    %110 = vector.extract_strided_slice %109 {offsets = [0, 0], sizes = [8, 128], strides = [1, 1]} : vector<8x512xf32> to vector<8x128xf32>
    %111 = arith.negf %110 : vector<8x128xf32>
    %112 = math.exp %111 : vector<8x128xf32>
    %cst_41 = arith.constant 1.000000e+00 : f32
    %113 = vector.broadcast %cst_41 : f32 to vector<8x128xf32>
    %114 = arith.addf %113, %112 : vector<8x128xf32>
    %115 = arith.divf %113, %114 : vector<8x128xf32>
    %116 = vector.extract_strided_slice %109 {offsets = [0, 128], sizes = [8, 128], strides = [1, 1]} : vector<8x512xf32> to vector<8x128xf32>
    %117 = arith.negf %116 : vector<8x128xf32>
    %118 = math.exp %117 : vector<8x128xf32>
    %cst_42 = arith.constant 1.000000e+00 : f32
    %119 = vector.broadcast %cst_42 : f32 to vector<8x128xf32>
    %120 = arith.addf %119, %118 : vector<8x128xf32>
    %121 = arith.divf %119, %120 : vector<8x128xf32>
    %122 = vector.extract_strided_slice %109 {offsets = [0, 256], sizes = [8, 128], strides = [1, 1]} : vector<8x512xf32> to vector<8x128xf32>
    %123 = math.tanh %122 : vector<8x128xf32>
    %124 = vector.extract_strided_slice %109 {offsets = [0, 384], sizes = [8, 128], strides = [1, 1]} : vector<8x512xf32> to vector<8x128xf32>
    %125 = arith.negf %124 : vector<8x128xf32>
    %126 = math.exp %125 : vector<8x128xf32>
    %cst_43 = arith.constant 1.000000e+00 : f32
    %127 = vector.broadcast %cst_43 : f32 to vector<8x128xf32>
    %128 = arith.addf %127, %126 : vector<8x128xf32>
    %129 = arith.divf %127, %128 : vector<8x128xf32>
    %130 = arith.mulf %121, %100 : vector<8x128xf32>
    %131 = arith.mulf %115, %123 : vector<8x128xf32>
    %132 = arith.addf %130, %131 : vector<8x128xf32>
    %133 = math.tanh %132 : vector<8x128xf32>
    %134 = arith.mulf %129, %133 : vector<8x128xf32>
    %135 = arith.truncf %134 : vector<8x128xf32> to vector<8x128xbf16>
    %c24_44 = arith.constant 24 : index
    %c0_45 = arith.constant 0 : index
    %136 = vector.load %arg10[%c24_44, %c0_45] : memref<64x128xbf16, #tpu.memory_space<vmem>>, vector<8x128xbf16>
    tpu.vector_store %arg10[%c24_44, %c0_45], %135 {strides = array<i32>} : memref<64x128xbf16, #tpu.memory_space<vmem>>, vector<8x128xbf16>,
    %c32 = arith.constant 32 : index
    %c0_46 = arith.constant 0 : index
    %137 = vector.load %arg11[%c32, %c0_46] : memref<64x512xf32, #tpu.memory_space<vmem>>, vector<8x512xf32>
    %138 = arith.truncf %134 : vector<8x128xf32> to vector<8x128xbf16>
    %c0_47 = arith.constant 0 : index
    %c0_48 = arith.constant 0 : index
    %139 = vector.load %arg2[%c0_47, %c0_48] : memref<128x512xbf16, #tpu.memory_space<vmem>>, vector<128x512xbf16>
    %cst_49 = arith.constant dense<0.000000e+00> : vector<8x512xf32>
    %140 = tpu.matmul %138, %139, %cst_49 {dimension_numbers = #tpu.dot_dimension_numbers<[1], [0], [0], [1], [0, 0, 1, 1], [], []>} : vector<8x128xbf16>, vector<128x512xbf16>, vector<8x512xf32> -> vector<8x512xf32>
    %141 = arith.addf %137, %140 : vector<8x512xf32>
    %142 = vector.extract_strided_slice %141 {offsets = [0, 0], sizes = [8, 128], strides = [1, 1]} : vector<8x512xf32> to vector<8x128xf32>
    %143 = arith.negf %142 : vector<8x128xf32>
    %144 = math.exp %143 : vector<8x128xf32>
    %cst_50 = arith.constant 1.000000e+00 : f32
    %145 = vector.broadcast %cst_50 : f32 to vector<8x128xf32>
    %146 = arith.addf %145, %144 : vector<8x128xf32>
    %147 = arith.divf %145, %146 : vector<8x128xf32>
    %148 = vector.extract_strided_slice %141 {offsets = [0, 128], sizes = [8, 128], strides = [1, 1]} : vector<8x512xf32> to vector<8x128xf32>
    %149 = arith.negf %148 : vector<8x128xf32>
    %150 = math.exp %149 : vector<8x128xf32>
    %cst_51 = arith.constant 1.000000e+00 : f32
    %151 = vector.broadcast %cst_51 : f32 to vector<8x128xf32>
    %152 = arith.addf %151, %150 : vector<8x128xf32>
    %153 = arith.divf %151, %152 : vector<8x128xf32>
    %154 = vector.extract_strided_slice %141 {offsets = [0, 256], sizes = [8, 128], strides = [1, 1]} : vector<8x512xf32> to vector<8x128xf32>
    %155 = math.tanh %154 : vector<8x128xf32>
    %156 = vector.extract_strided_slice %141 {offsets = [0, 384], sizes = [8, 128], strides = [1, 1]} : vector<8x512xf32> to vector<8x128xf32>
    %157 = arith.negf %156 : vector<8x128xf32>
    %158 = math.exp %157 : vector<8x128xf32>
    %cst_52 = arith.constant 1.000000e+00 : f32
    %159 = vector.broadcast %cst_52 : f32 to vector<8x128xf32>
    %160 = arith.addf %159, %158 : vector<8x128xf32>
    %161 = arith.divf %159, %160 : vector<8x128xf32>
    %162 = arith.mulf %153, %132 : vector<8x128xf32>
    %163 = arith.mulf %147, %155 : vector<8x128xf32>
    %164 = arith.addf %162, %163 : vector<8x128xf32>
    %165 = math.tanh %164 : vector<8x128xf32>
    %166 = arith.mulf %161, %165 : vector<8x128xf32>
    %167 = arith.truncf %166 : vector<8x128xf32> to vector<8x128xbf16>
    %c32_53 = arith.constant 32 : index
    %c0_54 = arith.constant 0 : index
    %168 = vector.load %arg10[%c32_53, %c0_54] : memref<64x128xbf16, #tpu.memory_space<vmem>>, vector<8x128xbf16>
    tpu.vector_store %arg10[%c32_53, %c0_54], %167 {strides = array<i32>} : memref<64x128xbf16, #tpu.memory_space<vmem>>, vector<8x128xbf16>,
    %c40 = arith.constant 40 : index
    %c0_55 = arith.constant 0 : index
    %169 = vector.load %arg11[%c40, %c0_55] : memref<64x512xf32, #tpu.memory_space<vmem>>, vector<8x512xf32>
    %170 = arith.truncf %166 : vector<8x128xf32> to vector<8x128xbf16>
    %c0_56 = arith.constant 0 : index
    %c0_57 = arith.constant 0 : index
    %171 = vector.load %arg2[%c0_56, %c0_57] : memref<128x512xbf16, #tpu.memory_space<vmem>>, vector<128x512xbf16>
    %cst_58 = arith.constant dense<0.000000e+00> : vector<8x512xf32>
    %172 = tpu.matmul %170, %171, %cst_58 {dimension_numbers = #tpu.dot_dimension_numbers<[1], [0], [0], [1], [0, 0, 1, 1], [], []>} : vector<8x128xbf16>, vector<128x512xbf16>, vector<8x512xf32> -> vector<8x512xf32>
    %173 = arith.addf %169, %172 : vector<8x512xf32>
    %174 = vector.extract_strided_slice %173 {offsets = [0, 0], sizes = [8, 128], strides = [1, 1]} : vector<8x512xf32> to vector<8x128xf32>
    %175 = arith.negf %174 : vector<8x128xf32>
    %176 = math.exp %175 : vector<8x128xf32>
    %cst_59 = arith.constant 1.000000e+00 : f32
    %177 = vector.broadcast %cst_59 : f32 to vector<8x128xf32>
    %178 = arith.addf %177, %176 : vector<8x128xf32>
    %179 = arith.divf %177, %178 : vector<8x128xf32>
    %180 = vector.extract_strided_slice %173 {offsets = [0, 128], sizes = [8, 128], strides = [1, 1]} : vector<8x512xf32> to vector<8x128xf32>
    %181 = arith.negf %180 : vector<8x128xf32>
    %182 = math.exp %181 : vector<8x128xf32>
    %cst_60 = arith.constant 1.000000e+00 : f32
    %183 = vector.broadcast %cst_60 : f32 to vector<8x128xf32>
    %184 = arith.addf %183, %182 : vector<8x128xf32>
    %185 = arith.divf %183, %184 : vector<8x128xf32>
    %186 = vector.extract_strided_slice %173 {offsets = [0, 256], sizes = [8, 128], strides = [1, 1]} : vector<8x512xf32> to vector<8x128xf32>
    %187 = math.tanh %186 : vector<8x128xf32>
    %188 = vector.extract_strided_slice %173 {offsets = [0, 384], sizes = [8, 128], strides = [1, 1]} : vector<8x512xf32> to vector<8x128xf32>
    %189 = arith.negf %188 : vector<8x128xf32>
    %190 = math.exp %189 : vector<8x128xf32>
    %cst_61 = arith.constant 1.000000e+00 : f32
    %191 = vector.broadcast %cst_61 : f32 to vector<8x128xf32>
    %192 = arith.addf %191, %190 : vector<8x128xf32>
    %193 = arith.divf %191, %192 : vector<8x128xf32>
    %194 = arith.mulf %185, %164 : vector<8x128xf32>
    %195 = arith.mulf %179, %187 : vector<8x128xf32>
    %196 = arith.addf %194, %195 : vector<8x128xf32>
    %197 = math.tanh %196 : vector<8x128xf32>
    %198 = arith.mulf %193, %197 : vector<8x128xf32>
    %199 = arith.truncf %198 : vector<8x128xf32> to vector<8x128xbf16>
    %c40_62 = arith.constant 40 : index
    %c0_63 = arith.constant 0 : index
    %200 = vector.load %arg10[%c40_62, %c0_63] : memref<64x128xbf16, #tpu.memory_space<vmem>>, vector<8x128xbf16>
    tpu.vector_store %arg10[%c40_62, %c0_63], %199 {strides = array<i32>} : memref<64x128xbf16, #tpu.memory_space<vmem>>, vector<8x128xbf16>,
    %c48 = arith.constant 48 : index
    %c0_64 = arith.constant 0 : index
    %201 = vector.load %arg11[%c48, %c0_64] : memref<64x512xf32, #tpu.memory_space<vmem>>, vector<8x512xf32>
    %202 = arith.truncf %198 : vector<8x128xf32> to vector<8x128xbf16>
    %c0_65 = arith.constant 0 : index
    %c0_66 = arith.constant 0 : index
    %203 = vector.load %arg2[%c0_65, %c0_66] : memref<128x512xbf16, #tpu.memory_space<vmem>>, vector<128x512xbf16>
    %cst_67 = arith.constant dense<0.000000e+00> : vector<8x512xf32>
    %204 = tpu.matmul %202, %203, %cst_67 {dimension_numbers = #tpu.dot_dimension_numbers<[1], [0], [0], [1], [0, 0, 1, 1], [], []>} : vector<8x128xbf16>, vector<128x512xbf16>, vector<8x512xf32> -> vector<8x512xf32>
    %205 = arith.addf %201, %204 : vector<8x512xf32>
    %206 = vector.extract_strided_slice %205 {offsets = [0, 0], sizes = [8, 128], strides = [1, 1]} : vector<8x512xf32> to vector<8x128xf32>
    %207 = arith.negf %206 : vector<8x128xf32>
    %208 = math.exp %207 : vector<8x128xf32>
    %cst_68 = arith.constant 1.000000e+00 : f32
    %209 = vector.broadcast %cst_68 : f32 to vector<8x128xf32>
    %210 = arith.addf %209, %208 : vector<8x128xf32>
    %211 = arith.divf %209, %210 : vector<8x128xf32>
    %212 = vector.extract_strided_slice %205 {offsets = [0, 128], sizes = [8, 128], strides = [1, 1]} : vector<8x512xf32> to vector<8x128xf32>
    %213 = arith.negf %212 : vector<8x128xf32>
    %214 = math.exp %213 : vector<8x128xf32>
    %cst_69 = arith.constant 1.000000e+00 : f32
    %215 = vector.broadcast %cst_69 : f32 to vector<8x128xf32>
    %216 = arith.addf %215, %214 : vector<8x128xf32>
    %217 = arith.divf %215, %216 : vector<8x128xf32>
    %218 = vector.extract_strided_slice %205 {offsets = [0, 256], sizes = [8, 128], strides = [1, 1]} : vector<8x512xf32> to vector<8x128xf32>
    %219 = math.tanh %218 : vector<8x128xf32>
    %220 = vector.extract_strided_slice %205 {offsets = [0, 384], sizes = [8, 128], strides = [1, 1]} : vector<8x512xf32> to vector<8x128xf32>
    %221 = arith.negf %220 : vector<8x128xf32>
    %222 = math.exp %221 : vector<8x128xf32>
    %cst_70 = arith.constant 1.000000e+00 : f32
    %223 = vector.broadcast %cst_70 : f32 to vector<8x128xf32>
    %224 = arith.addf %223, %222 : vector<8x128xf32>
    %225 = arith.divf %223, %224 : vector<8x128xf32>
    %226 = arith.mulf %217, %196 : vector<8x128xf32>
    %227 = arith.mulf %211, %219 : vector<8x128xf32>
    %228 = arith.addf %226, %227 : vector<8x128xf32>
    %229 = math.tanh %228 : vector<8x128xf32>
    %230 = arith.mulf %225, %229 : vector<8x128xf32>
    %231 = arith.truncf %230 : vector<8x128xf32> to vector<8x128xbf16>
    %c48_71 = arith.constant 48 : index
    %c0_72 = arith.constant 0 : index
    %232 = vector.load %arg10[%c48_71, %c0_72] : memref<64x128xbf16, #tpu.memory_space<vmem>>, vector<8x128xbf16>
    tpu.vector_store %arg10[%c48_71, %c0_72], %231 {strides = array<i32>} : memref<64x128xbf16, #tpu.memory_space<vmem>>, vector<8x128xbf16>,
    %c56 = arith.constant 56 : index
    %c0_73 = arith.constant 0 : index
    %233 = vector.load %arg11[%c56, %c0_73] : memref<64x512xf32, #tpu.memory_space<vmem>>, vector<8x512xf32>
    %234 = arith.truncf %230 : vector<8x128xf32> to vector<8x128xbf16>
    %c0_74 = arith.constant 0 : index
    %c0_75 = arith.constant 0 : index
    %235 = vector.load %arg2[%c0_74, %c0_75] : memref<128x512xbf16, #tpu.memory_space<vmem>>, vector<128x512xbf16>
    %cst_76 = arith.constant dense<0.000000e+00> : vector<8x512xf32>
    %236 = tpu.matmul %234, %235, %cst_76 {dimension_numbers = #tpu.dot_dimension_numbers<[1], [0], [0], [1], [0, 0, 1, 1], [], []>} : vector<8x128xbf16>, vector<128x512xbf16>, vector<8x512xf32> -> vector<8x512xf32>
    %237 = arith.addf %233, %236 : vector<8x512xf32>
    %238 = vector.extract_strided_slice %237 {offsets = [0, 0], sizes = [8, 128], strides = [1, 1]} : vector<8x512xf32> to vector<8x128xf32>
    %239 = arith.negf %238 : vector<8x128xf32>
    %240 = math.exp %239 : vector<8x128xf32>
    %cst_77 = arith.constant 1.000000e+00 : f32
    %241 = vector.broadcast %cst_77 : f32 to vector<8x128xf32>
    %242 = arith.addf %241, %240 : vector<8x128xf32>
    %243 = arith.divf %241, %242 : vector<8x128xf32>
    %244 = vector.extract_strided_slice %237 {offsets = [0, 128], sizes = [8, 128], strides = [1, 1]} : vector<8x512xf32> to vector<8x128xf32>
    %245 = arith.negf %244 : vector<8x128xf32>
    %246 = math.exp %245 : vector<8x128xf32>
    %cst_78 = arith.constant 1.000000e+00 : f32
    %247 = vector.broadcast %cst_78 : f32 to vector<8x128xf32>
    %248 = arith.addf %247, %246 : vector<8x128xf32>
    %249 = arith.divf %247, %248 : vector<8x128xf32>
    %250 = vector.extract_strided_slice %237 {offsets = [0, 256], sizes = [8, 128], strides = [1, 1]} : vector<8x512xf32> to vector<8x128xf32>
    %251 = math.tanh %250 : vector<8x128xf32>
    %252 = vector.extract_strided_slice %237 {offsets = [0, 384], sizes = [8, 128], strides = [1, 1]} : vector<8x512xf32> to vector<8x128xf32>
    %253 = arith.negf %252 : vector<8x128xf32>
    %254 = math.exp %253 : vector<8x128xf32>
    %cst_79 = arith.constant 1.000000e+00 : f32
    %255 = vector.broadcast %cst_79 : f32 to vector<8x128xf32>
    %256 = arith.addf %255, %254 : vector<8x128xf32>
    %257 = arith.divf %255, %256 : vector<8x128xf32>
    %258 = arith.mulf %249, %228 : vector<8x128xf32>
    %259 = arith.mulf %243, %251 : vector<8x128xf32>
    %260 = arith.addf %258, %259 : vector<8x128xf32>
    %261 = math.tanh %260 : vector<8x128xf32>
    %262 = arith.mulf %257, %261 : vector<8x128xf32>
    %263 = arith.truncf %262 : vector<8x128xf32> to vector<8x128xbf16>
    %c56_80 = arith.constant 56 : index
    %c0_81 = arith.constant 0 : index
    %264 = vector.load %arg10[%c56_80, %c0_81] : memref<64x128xbf16, #tpu.memory_space<vmem>>, vector<8x128xbf16>
    tpu.vector_store %arg10[%c56_80, %c0_81], %263 {strides = array<i32>} : memref<64x128xbf16, #tpu.memory_space<vmem>>, vector<8x128xbf16>,
    %c0_82 = arith.constant 0 : index
    %c0_83 = arith.constant 0 : index
    %265 = vector.load %arg10[%c0_82, %c0_83] : memref<64x128xbf16, #tpu.memory_space<vmem>>, vector<64x128xbf16>
    %c0_84 = arith.constant 0 : index
    %c0_85 = arith.constant 0 : index
    %266 = vector.load %arg4[%c0_84, %c0_85] : memref<128x512xbf16, #tpu.memory_space<vmem>>, vector<128x512xbf16>
    %cst_86 = arith.constant dense<0.000000e+00> : vector<64x512xf32>
    %267 = tpu.matmul %265, %266, %cst_86 {dimension_numbers = #tpu.dot_dimension_numbers<[1], [0], [0], [1], [0, 0, 1, 1], [], []>} : vector<64x128xbf16>, vector<128x512xbf16>, vector<64x512xf32> -> vector<64x512xf32>
    %c0_87 = arith.constant 0 : index
    %c0_88 = arith.constant 0 : index
    %268 = vector.load %arg6[%c0_87, %c0_88] : memref<1x512xf32, #tpu.memory_space<vmem>>, vector<1x512xf32>
    %269 = vector.broadcast %268 : vector<1x512xf32> to vector<64x512xf32>
    %270 = arith.addf %267, %269 : vector<64x512xf32>
    %c0_89 = arith.constant 0 : index
    %c0_90 = arith.constant 0 : index
    %271 = vector.load %arg11[%c0_89, %c0_90] : memref<64x512xf32, #tpu.memory_space<vmem>>, vector<64x512xf32>
    tpu.vector_store %arg11[%c0_89, %c0_90], %270 {strides = array<i32>} : memref<64x512xf32, #tpu.memory_space<vmem>>, vector<64x512xf32>,
    %cst_91 = arith.constant 0.000000e+00 : f32
    %272 = vector.broadcast %cst_91 : f32 to vector<8x128xf32>
    %cst_92 = arith.constant 0.000000e+00 : f32
    %273 = vector.broadcast %cst_92 : f32 to vector<8x128xf32>
    %c0_93 = arith.constant 0 : index
    %c0_94 = arith.constant 0 : index
    %274 = vector.load %arg11[%c0_93, %c0_94] : memref<64x512xf32, #tpu.memory_space<vmem>>, vector<8x512xf32>
    %275 = arith.truncf %272 : vector<8x128xf32> to vector<8x128xbf16>
    %c0_95 = arith.constant 0 : index
    %c0_96 = arith.constant 0 : index
    %276 = vector.load %arg5[%c0_95, %c0_96] : memref<128x512xbf16, #tpu.memory_space<vmem>>, vector<128x512xbf16>
    %cst_97 = arith.constant dense<0.000000e+00> : vector<8x512xf32>
    %277 = tpu.matmul %275, %276, %cst_97 {dimension_numbers = #tpu.dot_dimension_numbers<[1], [0], [0], [1], [0, 0, 1, 1], [], []>} : vector<8x128xbf16>, vector<128x512xbf16>, vector<8x512xf32> -> vector<8x512xf32>
    %278 = arith.addf %274, %277 : vector<8x512xf32>
    %279 = vector.extract_strided_slice %278 {offsets = [0, 0], sizes = [8, 128], strides = [1, 1]} : vector<8x512xf32> to vector<8x128xf32>
    %280 = arith.negf %279 : vector<8x128xf32>
    %281 = math.exp %280 : vector<8x128xf32>
    %cst_98 = arith.constant 1.000000e+00 : f32
    %282 = vector.broadcast %cst_98 : f32 to vector<8x128xf32>
    %283 = arith.addf %282, %281 : vector<8x128xf32>
    %284 = arith.divf %282, %283 : vector<8x128xf32>
    %285 = vector.extract_strided_slice %278 {offsets = [0, 128], sizes = [8, 128], strides = [1, 1]} : vector<8x512xf32> to vector<8x128xf32>
    %286 = arith.negf %285 : vector<8x128xf32>
    %287 = math.exp %286 : vector<8x128xf32>
    %cst_99 = arith.constant 1.000000e+00 : f32
    %288 = vector.broadcast %cst_99 : f32 to vector<8x128xf32>
    %289 = arith.addf %288, %287 : vector<8x128xf32>
    %290 = arith.divf %288, %289 : vector<8x128xf32>
    %291 = vector.extract_strided_slice %278 {offsets = [0, 256], sizes = [8, 128], strides = [1, 1]} : vector<8x512xf32> to vector<8x128xf32>
    %292 = math.tanh %291 : vector<8x128xf32>
    %293 = vector.extract_strided_slice %278 {offsets = [0, 384], sizes = [8, 128], strides = [1, 1]} : vector<8x512xf32> to vector<8x128xf32>
    %294 = arith.negf %293 : vector<8x128xf32>
    %295 = math.exp %294 : vector<8x128xf32>
    %cst_100 = arith.constant 1.000000e+00 : f32
    %296 = vector.broadcast %cst_100 : f32 to vector<8x128xf32>
    %297 = arith.addf %296, %295 : vector<8x128xf32>
    %298 = arith.divf %296, %297 : vector<8x128xf32>
    %299 = arith.mulf %290, %273 : vector<8x128xf32>
    %300 = arith.mulf %284, %292 : vector<8x128xf32>
    %301 = arith.addf %299, %300 : vector<8x128xf32>
    %302 = math.tanh %301 : vector<8x128xf32>
    %303 = arith.mulf %298, %302 : vector<8x128xf32>
    %c8_101 = arith.constant 8 : index
    %c0_102 = arith.constant 0 : index
    %304 = vector.load %arg11[%c8_101, %c0_102] : memref<64x512xf32, #tpu.memory_space<vmem>>, vector<8x512xf32>
    %305 = arith.truncf %303 : vector<8x128xf32> to vector<8x128xbf16>
    %c0_103 = arith.constant 0 : index
    %c0_104 = arith.constant 0 : index
    %306 = vector.load %arg5[%c0_103, %c0_104] : memref<128x512xbf16, #tpu.memory_space<vmem>>, vector<128x512xbf16>
    %cst_105 = arith.constant dense<0.000000e+00> : vector<8x512xf32>
    %307 = tpu.matmul %305, %306, %cst_105 {dimension_numbers = #tpu.dot_dimension_numbers<[1], [0], [0], [1], [0, 0, 1, 1], [], []>} : vector<8x128xbf16>, vector<128x512xbf16>, vector<8x512xf32> -> vector<8x512xf32>
    %308 = arith.addf %304, %307 : vector<8x512xf32>
    %309 = vector.extract_strided_slice %308 {offsets = [0, 0], sizes = [8, 128], strides = [1, 1]} : vector<8x512xf32> to vector<8x128xf32>
    %310 = arith.negf %309 : vector<8x128xf32>
    %311 = math.exp %310 : vector<8x128xf32>
    %cst_106 = arith.constant 1.000000e+00 : f32
    %312 = vector.broadcast %cst_106 : f32 to vector<8x128xf32>
    %313 = arith.addf %312, %311 : vector<8x128xf32>
    %314 = arith.divf %312, %313 : vector<8x128xf32>
    %315 = vector.extract_strided_slice %308 {offsets = [0, 128], sizes = [8, 128], strides = [1, 1]} : vector<8x512xf32> to vector<8x128xf32>
    %316 = arith.negf %315 : vector<8x128xf32>
    %317 = math.exp %316 : vector<8x128xf32>
    %cst_107 = arith.constant 1.000000e+00 : f32
    %318 = vector.broadcast %cst_107 : f32 to vector<8x128xf32>
    %319 = arith.addf %318, %317 : vector<8x128xf32>
    %320 = arith.divf %318, %319 : vector<8x128xf32>
    %321 = vector.extract_strided_slice %308 {offsets = [0, 256], sizes = [8, 128], strides = [1, 1]} : vector<8x512xf32> to vector<8x128xf32>
    %322 = math.tanh %321 : vector<8x128xf32>
    %323 = vector.extract_strided_slice %308 {offsets = [0, 384], sizes = [8, 128], strides = [1, 1]} : vector<8x512xf32> to vector<8x128xf32>
    %324 = arith.negf %323 : vector<8x128xf32>
    %325 = math.exp %324 : vector<8x128xf32>
    %cst_108 = arith.constant 1.000000e+00 : f32
    %326 = vector.broadcast %cst_108 : f32 to vector<8x128xf32>
    %327 = arith.addf %326, %325 : vector<8x128xf32>
    %328 = arith.divf %326, %327 : vector<8x128xf32>
    %329 = arith.mulf %320, %301 : vector<8x128xf32>
    %330 = arith.mulf %314, %322 : vector<8x128xf32>
    %331 = arith.addf %329, %330 : vector<8x128xf32>
    %332 = math.tanh %331 : vector<8x128xf32>
    %333 = arith.mulf %328, %332 : vector<8x128xf32>
    %c16_109 = arith.constant 16 : index
    %c0_110 = arith.constant 0 : index
    %334 = vector.load %arg11[%c16_109, %c0_110] : memref<64x512xf32, #tpu.memory_space<vmem>>, vector<8x512xf32>
    %335 = arith.truncf %333 : vector<8x128xf32> to vector<8x128xbf16>
    %c0_111 = arith.constant 0 : index
    %c0_112 = arith.constant 0 : index
    %336 = vector.load %arg5[%c0_111, %c0_112] : memref<128x512xbf16, #tpu.memory_space<vmem>>, vector<128x512xbf16>
    %cst_113 = arith.constant dense<0.000000e+00> : vector<8x512xf32>
    %337 = tpu.matmul %335, %336, %cst_113 {dimension_numbers = #tpu.dot_dimension_numbers<[1], [0], [0], [1], [0, 0, 1, 1], [], []>} : vector<8x128xbf16>, vector<128x512xbf16>, vector<8x512xf32> -> vector<8x512xf32>
    %338 = arith.addf %334, %337 : vector<8x512xf32>
    %339 = vector.extract_strided_slice %338 {offsets = [0, 0], sizes = [8, 128], strides = [1, 1]} : vector<8x512xf32> to vector<8x128xf32>
    %340 = arith.negf %339 : vector<8x128xf32>
    %341 = math.exp %340 : vector<8x128xf32>
    %cst_114 = arith.constant 1.000000e+00 : f32
    %342 = vector.broadcast %cst_114 : f32 to vector<8x128xf32>
    %343 = arith.addf %342, %341 : vector<8x128xf32>
    %344 = arith.divf %342, %343 : vector<8x128xf32>
    %345 = vector.extract_strided_slice %338 {offsets = [0, 128], sizes = [8, 128], strides = [1, 1]} : vector<8x512xf32> to vector<8x128xf32>
    %346 = arith.negf %345 : vector<8x128xf32>
    %347 = math.exp %346 : vector<8x128xf32>
    %cst_115 = arith.constant 1.000000e+00 : f32
    %348 = vector.broadcast %cst_115 : f32 to vector<8x128xf32>
    %349 = arith.addf %348, %347 : vector<8x128xf32>
    %350 = arith.divf %348, %349 : vector<8x128xf32>
    %351 = vector.extract_strided_slice %338 {offsets = [0, 256], sizes = [8, 128], strides = [1, 1]} : vector<8x512xf32> to vector<8x128xf32>
    %352 = math.tanh %351 : vector<8x128xf32>
    %353 = vector.extract_strided_slice %338 {offsets = [0, 384], sizes = [8, 128], strides = [1, 1]} : vector<8x512xf32> to vector<8x128xf32>
    %354 = arith.negf %353 : vector<8x128xf32>
    %355 = math.exp %354 : vector<8x128xf32>
    %cst_116 = arith.constant 1.000000e+00 : f32
    %356 = vector.broadcast %cst_116 : f32 to vector<8x128xf32>
    %357 = arith.addf %356, %355 : vector<8x128xf32>
    %358 = arith.divf %356, %357 : vector<8x128xf32>
    %359 = arith.mulf %350, %331 : vector<8x128xf32>
    %360 = arith.mulf %344, %352 : vector<8x128xf32>
    %361 = arith.addf %359, %360 : vector<8x128xf32>
    %362 = math.tanh %361 : vector<8x128xf32>
    %363 = arith.mulf %358, %362 : vector<8x128xf32>
    %c24_117 = arith.constant 24 : index
    %c0_118 = arith.constant 0 : index
    %364 = vector.load %arg11[%c24_117, %c0_118] : memref<64x512xf32, #tpu.memory_space<vmem>>, vector<8x512xf32>
    %365 = arith.truncf %363 : vector<8x128xf32> to vector<8x128xbf16>
    %c0_119 = arith.constant 0 : index
    %c0_120 = arith.constant 0 : index
    %366 = vector.load %arg5[%c0_119, %c0_120] : memref<128x512xbf16, #tpu.memory_space<vmem>>, vector<128x512xbf16>
    %cst_121 = arith.constant dense<0.000000e+00> : vector<8x512xf32>
    %367 = tpu.matmul %365, %366, %cst_121 {dimension_numbers = #tpu.dot_dimension_numbers<[1], [0], [0], [1], [0, 0, 1, 1], [], []>} : vector<8x128xbf16>, vector<128x512xbf16>, vector<8x512xf32> -> vector<8x512xf32>
    %368 = arith.addf %364, %367 : vector<8x512xf32>
    %369 = vector.extract_strided_slice %368 {offsets = [0, 0], sizes = [8, 128], strides = [1, 1]} : vector<8x512xf32> to vector<8x128xf32>
    %370 = arith.negf %369 : vector<8x128xf32>
    %371 = math.exp %370 : vector<8x128xf32>
    %cst_122 = arith.constant 1.000000e+00 : f32
    %372 = vector.broadcast %cst_122 : f32 to vector<8x128xf32>
    %373 = arith.addf %372, %371 : vector<8x128xf32>
    %374 = arith.divf %372, %373 : vector<8x128xf32>
    %375 = vector.extract_strided_slice %368 {offsets = [0, 128], sizes = [8, 128], strides = [1, 1]} : vector<8x512xf32> to vector<8x128xf32>
    %376 = arith.negf %375 : vector<8x128xf32>
    %377 = math.exp %376 : vector<8x128xf32>
    %cst_123 = arith.constant 1.000000e+00 : f32
    %378 = vector.broadcast %cst_123 : f32 to vector<8x128xf32>
    %379 = arith.addf %378, %377 : vector<8x128xf32>
    %380 = arith.divf %378, %379 : vector<8x128xf32>
    %381 = vector.extract_strided_slice %368 {offsets = [0, 256], sizes = [8, 128], strides = [1, 1]} : vector<8x512xf32> to vector<8x128xf32>
    %382 = math.tanh %381 : vector<8x128xf32>
    %383 = vector.extract_strided_slice %368 {offsets = [0, 384], sizes = [8, 128], strides = [1, 1]} : vector<8x512xf32> to vector<8x128xf32>
    %384 = arith.negf %383 : vector<8x128xf32>
    %385 = math.exp %384 : vector<8x128xf32>
    %cst_124 = arith.constant 1.000000e+00 : f32
    %386 = vector.broadcast %cst_124 : f32 to vector<8x128xf32>
    %387 = arith.addf %386, %385 : vector<8x128xf32>
    %388 = arith.divf %386, %387 : vector<8x128xf32>
    %389 = arith.mulf %380, %361 : vector<8x128xf32>
    %390 = arith.mulf %374, %382 : vector<8x128xf32>
    %391 = arith.addf %389, %390 : vector<8x128xf32>
    %392 = math.tanh %391 : vector<8x128xf32>
    %393 = arith.mulf %388, %392 : vector<8x128xf32>
    %c32_125 = arith.constant 32 : index
    %c0_126 = arith.constant 0 : index
    %394 = vector.load %arg11[%c32_125, %c0_126] : memref<64x512xf32, #tpu.memory_space<vmem>>, vector<8x512xf32>
    %395 = arith.truncf %393 : vector<8x128xf32> to vector<8x128xbf16>
    %c0_127 = arith.constant 0 : index
    %c0_128 = arith.constant 0 : index
    %396 = vector.load %arg5[%c0_127, %c0_128] : memref<128x512xbf16, #tpu.memory_space<vmem>>, vector<128x512xbf16>
    %cst_129 = arith.constant dense<0.000000e+00> : vector<8x512xf32>
    %397 = tpu.matmul %395, %396, %cst_129 {dimension_numbers = #tpu.dot_dimension_numbers<[1], [0], [0], [1], [0, 0, 1, 1], [], []>} : vector<8x128xbf16>, vector<128x512xbf16>, vector<8x512xf32> -> vector<8x512xf32>
    %398 = arith.addf %394, %397 : vector<8x512xf32>
    %399 = vector.extract_strided_slice %398 {offsets = [0, 0], sizes = [8, 128], strides = [1, 1]} : vector<8x512xf32> to vector<8x128xf32>
    %400 = arith.negf %399 : vector<8x128xf32>
    %401 = math.exp %400 : vector<8x128xf32>
    %cst_130 = arith.constant 1.000000e+00 : f32
    %402 = vector.broadcast %cst_130 : f32 to vector<8x128xf32>
    %403 = arith.addf %402, %401 : vector<8x128xf32>
    %404 = arith.divf %402, %403 : vector<8x128xf32>
    %405 = vector.extract_strided_slice %398 {offsets = [0, 128], sizes = [8, 128], strides = [1, 1]} : vector<8x512xf32> to vector<8x128xf32>
    %406 = arith.negf %405 : vector<8x128xf32>
    %407 = math.exp %406 : vector<8x128xf32>
    %cst_131 = arith.constant 1.000000e+00 : f32
    %408 = vector.broadcast %cst_131 : f32 to vector<8x128xf32>
    %409 = arith.addf %408, %407 : vector<8x128xf32>
    %410 = arith.divf %408, %409 : vector<8x128xf32>
    %411 = vector.extract_strided_slice %398 {offsets = [0, 256], sizes = [8, 128], strides = [1, 1]} : vector<8x512xf32> to vector<8x128xf32>
    %412 = math.tanh %411 : vector<8x128xf32>
    %413 = vector.extract_strided_slice %398 {offsets = [0, 384], sizes = [8, 128], strides = [1, 1]} : vector<8x512xf32> to vector<8x128xf32>
    %414 = arith.negf %413 : vector<8x128xf32>
    %415 = math.exp %414 : vector<8x128xf32>
    %cst_132 = arith.constant 1.000000e+00 : f32
    %416 = vector.broadcast %cst_132 : f32 to vector<8x128xf32>
    %417 = arith.addf %416, %415 : vector<8x128xf32>
    %418 = arith.divf %416, %417 : vector<8x128xf32>
    %419 = arith.mulf %410, %391 : vector<8x128xf32>
    %420 = arith.mulf %404, %412 : vector<8x128xf32>
    %421 = arith.addf %419, %420 : vector<8x128xf32>
    %422 = math.tanh %421 : vector<8x128xf32>
    %423 = arith.mulf %418, %422 : vector<8x128xf32>
    %c40_133 = arith.constant 40 : index
    %c0_134 = arith.constant 0 : index
    %424 = vector.load %arg11[%c40_133, %c0_134] : memref<64x512xf32, #tpu.memory_space<vmem>>, vector<8x512xf32>
    %425 = arith.truncf %423 : vector<8x128xf32> to vector<8x128xbf16>
    %c0_135 = arith.constant 0 : index
    %c0_136 = arith.constant 0 : index
    %426 = vector.load %arg5[%c0_135, %c0_136] : memref<128x512xbf16, #tpu.memory_space<vmem>>, vector<128x512xbf16>
    %cst_137 = arith.constant dense<0.000000e+00> : vector<8x512xf32>
    %427 = tpu.matmul %425, %426, %cst_137 {dimension_numbers = #tpu.dot_dimension_numbers<[1], [0], [0], [1], [0, 0, 1, 1], [], []>} : vector<8x128xbf16>, vector<128x512xbf16>, vector<8x512xf32> -> vector<8x512xf32>
    %428 = arith.addf %424, %427 : vector<8x512xf32>
    %429 = vector.extract_strided_slice %428 {offsets = [0, 0], sizes = [8, 128], strides = [1, 1]} : vector<8x512xf32> to vector<8x128xf32>
    %430 = arith.negf %429 : vector<8x128xf32>
    %431 = math.exp %430 : vector<8x128xf32>
    %cst_138 = arith.constant 1.000000e+00 : f32
    %432 = vector.broadcast %cst_138 : f32 to vector<8x128xf32>
    %433 = arith.addf %432, %431 : vector<8x128xf32>
    %434 = arith.divf %432, %433 : vector<8x128xf32>
    %435 = vector.extract_strided_slice %428 {offsets = [0, 128], sizes = [8, 128], strides = [1, 1]} : vector<8x512xf32> to vector<8x128xf32>
    %436 = arith.negf %435 : vector<8x128xf32>
    %437 = math.exp %436 : vector<8x128xf32>
    %cst_139 = arith.constant 1.000000e+00 : f32
    %438 = vector.broadcast %cst_139 : f32 to vector<8x128xf32>
    %439 = arith.addf %438, %437 : vector<8x128xf32>
    %440 = arith.divf %438, %439 : vector<8x128xf32>
    %441 = vector.extract_strided_slice %428 {offsets = [0, 256], sizes = [8, 128], strides = [1, 1]} : vector<8x512xf32> to vector<8x128xf32>
    %442 = math.tanh %441 : vector<8x128xf32>
    %443 = vector.extract_strided_slice %428 {offsets = [0, 384], sizes = [8, 128], strides = [1, 1]} : vector<8x512xf32> to vector<8x128xf32>
    %444 = arith.negf %443 : vector<8x128xf32>
    %445 = math.exp %444 : vector<8x128xf32>
    %cst_140 = arith.constant 1.000000e+00 : f32
    %446 = vector.broadcast %cst_140 : f32 to vector<8x128xf32>
    %447 = arith.addf %446, %445 : vector<8x128xf32>
    %448 = arith.divf %446, %447 : vector<8x128xf32>
    %449 = arith.mulf %440, %421 : vector<8x128xf32>
    %450 = arith.mulf %434, %442 : vector<8x128xf32>
    %451 = arith.addf %449, %450 : vector<8x128xf32>
    %452 = math.tanh %451 : vector<8x128xf32>
    %453 = arith.mulf %448, %452 : vector<8x128xf32>
    %c48_141 = arith.constant 48 : index
    %c0_142 = arith.constant 0 : index
    %454 = vector.load %arg11[%c48_141, %c0_142] : memref<64x512xf32, #tpu.memory_space<vmem>>, vector<8x512xf32>
    %455 = arith.truncf %453 : vector<8x128xf32> to vector<8x128xbf16>
    %c0_143 = arith.constant 0 : index
    %c0_144 = arith.constant 0 : index
    %456 = vector.load %arg5[%c0_143, %c0_144] : memref<128x512xbf16, #tpu.memory_space<vmem>>, vector<128x512xbf16>
    %cst_145 = arith.constant dense<0.000000e+00> : vector<8x512xf32>
    %457 = tpu.matmul %455, %456, %cst_145 {dimension_numbers = #tpu.dot_dimension_numbers<[1], [0], [0], [1], [0, 0, 1, 1], [], []>} : vector<8x128xbf16>, vector<128x512xbf16>, vector<8x512xf32> -> vector<8x512xf32>
    %458 = arith.addf %454, %457 : vector<8x512xf32>
    %459 = vector.extract_strided_slice %458 {offsets = [0, 0], sizes = [8, 128], strides = [1, 1]} : vector<8x512xf32> to vector<8x128xf32>
    %460 = arith.negf %459 : vector<8x128xf32>
    %461 = math.exp %460 : vector<8x128xf32>
    %cst_146 = arith.constant 1.000000e+00 : f32
    %462 = vector.broadcast %cst_146 : f32 to vector<8x128xf32>
    %463 = arith.addf %462, %461 : vector<8x128xf32>
    %464 = arith.divf %462, %463 : vector<8x128xf32>
    %465 = vector.extract_strided_slice %458 {offsets = [0, 128], sizes = [8, 128], strides = [1, 1]} : vector<8x512xf32> to vector<8x128xf32>
    %466 = arith.negf %465 : vector<8x128xf32>
    %467 = math.exp %466 : vector<8x128xf32>
    %cst_147 = arith.constant 1.000000e+00 : f32
    %468 = vector.broadcast %cst_147 : f32 to vector<8x128xf32>
    %469 = arith.addf %468, %467 : vector<8x128xf32>
    %470 = arith.divf %468, %469 : vector<8x128xf32>
    %471 = vector.extract_strided_slice %458 {offsets = [0, 256], sizes = [8, 128], strides = [1, 1]} : vector<8x512xf32> to vector<8x128xf32>
    %472 = math.tanh %471 : vector<8x128xf32>
    %473 = vector.extract_strided_slice %458 {offsets = [0, 384], sizes = [8, 128], strides = [1, 1]} : vector<8x512xf32> to vector<8x128xf32>
    %474 = arith.negf %473 : vector<8x128xf32>
    %475 = math.exp %474 : vector<8x128xf32>
    %cst_148 = arith.constant 1.000000e+00 : f32
    %476 = vector.broadcast %cst_148 : f32 to vector<8x128xf32>
    %477 = arith.addf %476, %475 : vector<8x128xf32>
    %478 = arith.divf %476, %477 : vector<8x128xf32>
    %479 = arith.mulf %470, %451 : vector<8x128xf32>
    %480 = arith.mulf %464, %472 : vector<8x128xf32>
    %481 = arith.addf %479, %480 : vector<8x128xf32>
    %482 = math.tanh %481 : vector<8x128xf32>
    %483 = arith.mulf %478, %482 : vector<8x128xf32>
    %c56_149 = arith.constant 56 : index
    %c0_150 = arith.constant 0 : index
    %484 = vector.load %arg11[%c56_149, %c0_150] : memref<64x512xf32, #tpu.memory_space<vmem>>, vector<8x512xf32>
    %485 = arith.truncf %483 : vector<8x128xf32> to vector<8x128xbf16>
    %c0_151 = arith.constant 0 : index
    %c0_152 = arith.constant 0 : index
    %486 = vector.load %arg5[%c0_151, %c0_152] : memref<128x512xbf16, #tpu.memory_space<vmem>>, vector<128x512xbf16>
    %cst_153 = arith.constant dense<0.000000e+00> : vector<8x512xf32>
    %487 = tpu.matmul %485, %486, %cst_153 {dimension_numbers = #tpu.dot_dimension_numbers<[1], [0], [0], [1], [0, 0, 1, 1], [], []>} : vector<8x128xbf16>, vector<128x512xbf16>, vector<8x512xf32> -> vector<8x512xf32>
    %488 = arith.addf %484, %487 : vector<8x512xf32>
    %489 = vector.extract_strided_slice %488 {offsets = [0, 0], sizes = [8, 128], strides = [1, 1]} : vector<8x512xf32> to vector<8x128xf32>
    %490 = arith.negf %489 : vector<8x128xf32>
    %491 = math.exp %490 : vector<8x128xf32>
    %cst_154 = arith.constant 1.000000e+00 : f32
    %492 = vector.broadcast %cst_154 : f32 to vector<8x128xf32>
    %493 = arith.addf %492, %491 : vector<8x128xf32>
    %494 = arith.divf %492, %493 : vector<8x128xf32>
    %495 = vector.extract_strided_slice %488 {offsets = [0, 128], sizes = [8, 128], strides = [1, 1]} : vector<8x512xf32> to vector<8x128xf32>
    %496 = arith.negf %495 : vector<8x128xf32>
    %497 = math.exp %496 : vector<8x128xf32>
    %cst_155 = arith.constant 1.000000e+00 : f32
    %498 = vector.broadcast %cst_155 : f32 to vector<8x128xf32>
    %499 = arith.addf %498, %497 : vector<8x128xf32>
    %500 = arith.divf %498, %499 : vector<8x128xf32>
    %501 = vector.extract_strided_slice %488 {offsets = [0, 256], sizes = [8, 128], strides = [1, 1]} : vector<8x512xf32> to vector<8x128xf32>
    %502 = math.tanh %501 : vector<8x128xf32>
    %503 = vector.extract_strided_slice %488 {offsets = [0, 384], sizes = [8, 128], strides = [1, 1]} : vector<8x512xf32> to vector<8x128xf32>
    %504 = arith.negf %503 : vector<8x128xf32>
    %505 = math.exp %504 : vector<8x128xf32>
    %cst_156 = arith.constant 1.000000e+00 : f32
    %506 = vector.broadcast %cst_156 : f32 to vector<8x128xf32>
    %507 = arith.addf %506, %505 : vector<8x128xf32>
    %508 = arith.divf %506, %507 : vector<8x128xf32>
    %509 = arith.mulf %500, %481 : vector<8x128xf32>
    %510 = arith.mulf %494, %502 : vector<8x128xf32>
    %511 = arith.addf %509, %510 : vector<8x128xf32>
    %512 = math.tanh %511 : vector<8x128xf32>
    %513 = arith.mulf %508, %512 : vector<8x128xf32>
    %c0_157 = arith.constant 0 : index
    %c0_158 = arith.constant 0 : index
    %514 = vector.load %arg7[%c0_157, %c0_158] : memref<1x128xf32, #tpu.memory_space<vmem>>, vector<1x128xf32>
    %515 = vector.broadcast %514 : vector<1x128xf32> to vector<8x128xf32>
    %516 = arith.mulf %513, %515 : vector<8x128xf32>
    %cst_159 = arith.constant dense<0.000000e+00> : vector<8xf32>
    %517 = vector.multi_reduction <add>, %516, %cst_159 [1] : vector<8x128xf32> to vector<8xf32>
    %518 = vector.shape_cast %517 : vector<8xf32> to vector<8x1xf32>
    %c0_160 = arith.constant 0 : index
    %c0_161 = arith.constant 0 : index
    %519 = vector.load %arg8[%c0_160, %c0_161] : memref<1x1xf32, #tpu.memory_space<vmem>>, vector<1x1xf32>
    %520 = vector.broadcast %519 : vector<1x1xf32> to vector<8x1xf32>
    %521 = arith.addf %518, %520 : vector<8x1xf32>
    %522 = arith.negf %521 : vector<8x1xf32>
    %523 = math.exp %522 : vector<8x1xf32>
    %cst_162 = arith.constant 1.000000e+00 : f32
    %524 = vector.broadcast %cst_162 : f32 to vector<8x1xf32>
    %525 = arith.addf %524, %523 : vector<8x1xf32>
    %526 = arith.divf %524, %525 : vector<8x1xf32>
    %c0_163 = arith.constant 0 : index
    %c0_164 = arith.constant 0 : index
    %527 = vector.load %arg9[%c0_163, %c0_164] : memref<8x1xf32, #tpu.memory_space<vmem>>, vector<8x1xf32>
    tpu.vector_store %arg9[%c0_163, %c0_164], %526 {strides = array<i32>} : memref<8x1xf32, #tpu.memory_space<vmem>>, vector<8x1xf32>,
    return
  }
}

</mosaic_0001>

<llo_original>
// kernel: rnn_model_forward.1
$region0: #{rnn_model_forward.1}
  #allocation0 [shape = 'u32[]', space=smem, size = 0x4, offset = 0x4, fixed_abs, tag = 'smem constant byte address 0x4 - core index']
  #allocation1 [shape = 'u32[144,128]{1,0:T(1,128)}', space=vmem, size = 0x12000, scoped, tag = 'internal scratch']
  #allocation2 [shape = 'bf16[64,128]{1,0:T(8,128)(2,1)}', space=vmem, size = 0x4000, scoped, tag = 'scratch operand']
  #allocation3 [shape = 'f32[64,512]{1,0:T(8,128)}', space=vmem, size = 0x20000, scoped, tag = 'scratch operand']
  #allocation4 [shape = 'f32[1,1]{1,0:T(1,128)S(1)}', space=vmem, size = 0x200, scoped, tag = 'scoped memory for rnn_model_forward.1']
  %s0 = inlined_call_operand.vmem [shape: bf16[64,32], index: 0, kind: input, shape index: {}]
  %s1 = inlined_call_operand.vmem [shape: bf16[32,512], index: 1, kind: input, shape index: {}]
  %s2 = inlined_call_operand.hbm [shape: bf16[128,512], index: 2, kind: input, shape index: {}]
  %s3 = inlined_call_operand.vmem [shape: f32[1,512], index: 3, kind: input, shape index: {}]
  %s4 = inlined_call_operand.hbm [shape: bf16[128,512], index: 4, kind: input, shape index: {}]
  %s5 = inlined_call_operand.hbm [shape: bf16[128,512], index: 5, kind: input, shape index: {}]
  %s6 = inlined_call_operand.vmem [shape: f32[1,512], index: 6, kind: input, shape index: {}]
  %s7 = inlined_call_operand.vmem [shape: f32[1,128], index: 7, kind: input, shape index: {}]
  %s8 = inlined_call_operand.<no memory space> [shape: f32[1,1], index: 8, kind: input, shape index: {}]
  %s9 = inlined_call_operand.vmem [shape: f32[8,1], index: 9, kind: output, shape index: {}]
  %s10 = sld [smem:[#allocation0]]
  $region58: #{rnn_model_forward.1} parent=0
    _
  %s12 = ssub.s32 1, %s10
  %s13 = scalar_select 0, %s12, %s10
  %v14 = vstv %s8
  %15 = vst [vmem:[#allocation4] sm:$0x1] %v14
  $region1: #{rnn_model_forward.1} parent=0
    #allocation5 [shape = 'u8[131072]{0}', space=vmem, size = 0x20000, scoped, tag = 'input window, operand 2, single buffered']
    #allocation6 [shape = 's32[1]{0}', space=sflag, size = 0x4, scoped, tag = 'scoped memory for rnn_model_forward.1']
    #allocation7 [shape = 'u8[131072]{0}', space=vmem, size = 0x20000, scoped, tag = 'input window, operand 4, single buffered']
    #allocation8 [shape = 's32[1]{0}', space=sflag, size = 0x4, scoped, tag = 'scoped memory for rnn_model_forward.1']
    #allocation9 [shape = 'u8[131072]{0}', space=vmem, size = 0x20000, scoped, tag = 'input window, operand 5, single buffered']
    %16 = vsyncpa [#allocation6], 0
    %17 = vsyncpa [#allocation8], 0
    // Predicated region
    $region2: #{rnn_model_forward.1} parent=1 // pred_check
      _
    $region3: #{rnn_model_forward.1} parent=1 // pred_check_branch
      %19 = sbr.rel (0) target = $region5
    $region4: #{rnn_model_forward.1} parent=1 // pred_region
      _
    $region5: #{rnn_model_forward.1} parent=1 // pred_fallthru
      _
    // Predicated region
    $region6: #{rnn_model_forward.1} parent=1 // pred_check
      _
    $region7: #{rnn_model_forward.1} parent=1 // pred_check_branch
      %21 = sbr.rel (0) target = $region9
    $region8: #{rnn_model_forward.1} parent=1 // pred_region
      _
    $region9: #{rnn_model_forward.1} parent=1 // pred_fallthru
      _
    // Predicated region
    $region10: #{rnn_model_forward.1} parent=1 // pred_check
      _
    $region11: #{rnn_model_forward.1} parent=1 // pred_check_branch
      %23 = sbr.rel (0) target = $region13
    $region12: #{rnn_model_forward.1} parent=1 // pred_region
      %s25 = ssub.s32 4096, 4096
      %26 = vsyncadd [#allocation6], %s25
      %s27 = sshll.u32 [#allocation5], 4
      %s28 = int_to_ptr.vmem [resolvable:$true] %s27
      %33 = dma.hbm_to_vmem [thread:$0]  %s2, 4096, %s28, [#allocation6], 256, 256, 16
    $region13: #{rnn_model_forward.1} parent=1 // pred_fallthru
      _
    // Predicated region
    $region14: #{rnn_model_forward.1} parent=1 // pred_check
      _
    $region15: #{rnn_model_forward.1} parent=1 // pred_check_branch
      %35 = sbr.rel (0) target = $region17
    $region16: #{rnn_model_forward.1} parent=1 // pred_region
      _
    $region17: #{rnn_model_forward.1} parent=1 // pred_fallthru
      _
    // Predicated region
    $region18: #{rnn_model_forward.1} parent=1 // pred_check
      _
    $region19: #{rnn_model_forward.1} parent=1 // pred_check_branch
      %37 = sbr.rel (0) target = $region21
    $region20: #{rnn_model_forward.1} parent=1 // pred_region
      %s39 = ssub.s32 4096, 4096
      %40 = vsyncadd [#allocation8], %s39
      %s41 = sshll.u32 [#allocation7], 4
      %s42 = int_to_ptr.vmem [resolvable:$true] %s41
      %47 = dma.hbm_to_vmem [thread:$0]  %s4, 4096, %s42, [#allocation8], 256, 256, 16
    $region21: #{rnn_model_forward.1} parent=1 // pred_fallthru
      _
    // Predicated region
    $region22: #{rnn_model_forward.1} parent=1 // pred_check
      _
    $region23: #{rnn_model_forward.1} parent=1 // pred_check_branch
      %49 = sbr.rel (0) target = $region25
    $region24: #{rnn_model_forward.1} parent=1 // pred_region
      %s51 = ssub.s32 4096, 4096
      %52 = vsyncadd [#allocation8], %s51
      %s53 = sshll.u32 [#allocation9], 4
      %s54 = int_to_ptr.vmem [resolvable:$true] %s53
      %59 = dma.hbm_to_vmem [thread:$0]  %s5, 4096, %s54, [#allocation8], 256, 256, 16
    $region25: #{rnn_model_forward.1} parent=1 // pred_fallthru
      _
    // Predicated region
    $region26: #{rnn_model_forward.1} parent=1 // pred_check
      _
    $region27: #{rnn_model_forward.1} parent=1 // pred_check_branch
      %61 = sbr.rel (0) target = $region29
    $region28: #{rnn_model_forward.1} parent=1 // pred_region
      _
    $region29: #{rnn_model_forward.1} parent=1 // pred_fallthru
      _
    // Predicated region
    $region30: #{rnn_model_forward.1} parent=1 // pred_check
      _
    $region31: #{rnn_model_forward.1} parent=1 // pred_check_branch
      %63 = sbr.rel (0) target = $region33
    $region32: #{rnn_model_forward.1} parent=1 // pred_region
      _
    $region33: #{rnn_model_forward.1} parent=1 // pred_fallthru
      _
    // Predicated region
    $region34: #{rnn_model_forward.1} parent=1 // pred_check
      _
    $region35: #{rnn_model_forward.1} parent=1 // pred_check_branch
      %65 = sbr.rel (0) target = $region37
    $region36: #{rnn_model_forward.1} parent=1 // pred_region
      _
    $region37: #{rnn_model_forward.1} parent=1 // pred_fallthru
      _
    // Predicated region
    $region38: #{rnn_model_forward.1} parent=1 // pred_check
      _
    $region39: #{rnn_model_forward.1} parent=1 // pred_check_branch
      %67 = sbr.rel (0) target = $region41
    $region40: #{rnn_model_forward.1} parent=1 // pred_region
      %68 = dma.done [#allocation6], 4096
    $region41: #{rnn_model_forward.1} parent=1 // pred_fallthru
      _
    // Predicated region
    $region42: #{rnn_model_forward.1} parent=1 // pred_check
      _
    $region43: #{rnn_model_forward.1} parent=1 // pred_check_branch
      %70 = sbr.rel (0) target = $region45
    $region44: #{rnn_model_forward.1} parent=1 // pred_region
      %71 = dma.done [#allocation8], 4096
    $region45: #{rnn_model_forward.1} parent=1 // pred_fallthru
      _
    // Predicated region
    $region46: #{rnn_model_forward.1} parent=1 // pred_check
      _
    $region47: #{rnn_model_forward.1} parent=1 // pred_check_branch
      %73 = sbr.rel (0) target = $region49
    $region48: #{rnn_model_forward.1} parent=1 // pred_region
      %74 = dma.done [#allocation8], 4096
    $region49: #{rnn_model_forward.1} parent=1 // pred_fallthru
      _
    %v76 = vld [vmem:[%s0] sm:$0xf]
    %v77 = vld [vmem:[%s0 + $0x4] sm:$0xf]
    %v78 = vld [vmem:[%s0 + $0x8] sm:$0xf]
    %v79 = vld [vmem:[%s0 + $0xc] sm:$0xf]
    %v80 = vld [vmem:[%s0 + $0x10] sm:$0xf]
    %v81 = vld [vmem:[%s0 + $0x14] sm:$0xf]
    %v82 = vld [vmem:[%s0 + $0x18] sm:$0xf]
    %v83 = vld [vmem:[%s0 + $0x1c] sm:$0xf]
    %v84 = vld [vmem:[%s1] sm:$0xff]
    %v85 = vld [vmem:[%s1 + $0x8] sm:$0xff]
    %v86 = vld [vmem:[%s1 + $0x10] sm:$0xff]
    %v87 = vld [vmem:[%s1 + $0x18] sm:$0xff]
    %v88 = vld [vmem:[%s1 + $0x20] sm:$0xff]
    %v89 = vld [vmem:[%s1 + $0x28] sm:$0xff]
    %v90 = vld [vmem:[%s1 + $0x30] sm:$0xff]
    %v91 = vld [vmem:[%s1 + $0x38] sm:$0xff]
    %v92 = vld [vmem:[%s3] sm:$0xf]
    %v94 = vlaneseq
    %v95 = vshrl.u32 %v94, 7
    %v96 = vsub.s32 0, %v95
    %v97 = vrot.slane %v92, %v96
    %v98 = vlaneseq
    %v99 = vshrl.u32 %v98, 7
    %v100 = vsub.s32 1, %v99
    %v101 = vrot.slane %v92, %v100
    %v102 = vlaneseq
    %v103 = vshrl.u32 %v102, 7
    %v104 = vsub.s32 2, %v103
    %v105 = vrot.slane %v92, %v104
    %v106 = vlaneseq
    %v107 = vshrl.u32 %v106, 7
    %v108 = vsub.s32 3, %v107
    %v109 = vrot.slane %v92, %v108
    %v122 = vunpack.c.l.b16 %v76
    %v123 = vunpack.c.l.b16 %v77
    %v124 = vunpack.c.l.b16 %v78
    %v125 = vunpack.c.l.b16 %v79
    %v126 = vunpack.c.l.b16 %v80
    %v127 = vunpack.c.l.b16 %v81
    %v128 = vunpack.c.l.b16 %v82
    %v129 = vunpack.c.l.b16 %v83
    %v130 = vpack.c.b16 %v123, %v122
    %v131 = vpack.c.b16 %v125, %v124
    %v132 = vpack.c.b16 %v127, %v126
    %v133 = vpack.c.b16 %v129, %v128
    %v142 = vunpack.c.l.b16 %v84
    %v143 = vunpack.c.h.b16 %v84
    %v144 = vunpack.c.l.b16 %v85
    %v145 = vunpack.c.h.b16 %v85
    %v146 = vunpack.c.l.b16 %v86
    %v147 = vunpack.c.h.b16 %v86
    %v148 = vunpack.c.l.b16 %v87
    %v149 = vunpack.c.h.b16 %v87
    %v150 = vunpack.c.l.b16 %v88
    %v151 = vunpack.c.h.b16 %v88
    %v152 = vunpack.c.l.b16 %v89
    %v153 = vunpack.c.h.b16 %v89
    %v154 = vunpack.c.l.b16 %v90
    %v155 = vunpack.c.h.b16 %v90
    %v156 = vunpack.c.l.b16 %v91
    %v157 = vunpack.c.h.b16 %v91
    %v158 = vpack.c.b16 %v146, %v142
    %v159 = vpack.c.b16 %v147, %v143
    %v160 = vpack.c.b16 %v148, %v144
    %v161 = vpack.c.b16 %v149, %v145
    %v162 = vpack.c.b16 %v154, %v150
    %v163 = vpack.c.b16 %v155, %v151
    %v164 = vpack.c.b16 %v156, %v152
    %v165 = vpack.c.b16 %v157, %v153
    %vm174 = vcmask 261120
    %v176 = vsel %vm174, %v130, 0
    %v179 = vsel %vm174, %v131, 0
    %v182 = vsel %vm174, %v132, 0
    %v185 = vsel %vm174, %v133, 0
    %187 = vmatprep.subr.bf16.mxu0 0
    %188 = vmatpush1.bf16.msra.mxu0 0
    %189 = vmatprep.subr.bf16.mxu0 0
    %190 = vmatpush1.bf16.msra.mxu0 0
    %191 = vmatprep.subr.bf16.mxu0 0
    %192 = vmatpush1.bf16.msra.mxu0 0
    %193 = vmatprep.subr.bf16.mxu0 0
    %194 = vmatpush1.bf16.msra.mxu0 0
    %195 = vmatprep.subr.bf16.mxu0 0
    %196 = vmatpush1.bf16.msra.mxu0 0
    %197 = vmatprep.subr.bf16.mxu0 0
    %198 = vmatpush1.bf16.msra.mxu0 0
    %199 = vmatprep.subr.bf16.mxu0 %v163
    %200 = vmatpush1.bf16.msra.mxu0 %v162
    %201 = vmatprep.subr.bf16.mxu0 %v159
    %202 = vmatpush1.bf16.msra.mxu0 %v158
    %203 = vmatprep.subr.bf16.mxu0 0
    %204 = vmatpush2.bf16.msra.mxu0 0
    %205 = vmatprep.subr.bf16.mxu0 0
    %206 = vmatpush2.bf16.msra.mxu0 0
    %207 = vmatprep.subr.bf16.mxu0 0
    %208 = vmatpush2.bf16.msra.mxu0 0
    %209 = vmatprep.subr.bf16.mxu0 0
    %210 = vmatpush2.bf16.msra.mxu0 0
    %211 = vmatprep.subr.bf16.mxu0 0
    %212 = vmatpush2.bf16.msra.mxu0 0
    %213 = vmatprep.subr.bf16.mxu0 0
    %214 = vmatpush2.bf16.msra.mxu0 0
    %215 = vmatprep.subr.bf16.mxu0 0
    %216 = vmatpush2.bf16.msra.mxu0 0
    %217 = vmatprep.subr.bf16.mxu0 0
    %218 = vmatpush2.bf16.msra.mxu0 0
    %219 = vmatprep.mubr.bf16.mxu0 0
    %220 = vmatmul.mubr.bf16.gmra.mxu0 %v176
    %v221 = vpop.f32.mrf.mxu0
    %v222 = vadd.f32 %v97, %v221
    %v223 = vpop.f32.mrf.mxu0
    %v224 = vadd.f32 %v101, %v223
    %v225 = vpop.f32.mrf.mxu0
    %v226 = vadd.f32 %v97, %v225
    %v227 = vpop.f32.mrf.mxu0
    %v228 = vadd.f32 %v101, %v227
    %229 = vmatprep.mubr.bf16.mxu0 0
    %230 = vmatmul.mubr.bf16.gmra.mxu0 %v179
    %v231 = vpop.f32.mrf.mxu0
    %v232 = vadd.f32 %v97, %v231
    %v233 = vpop.f32.mrf.mxu0
    %v234 = vadd.f32 %v101, %v233
    %v235 = vpop.f32.mrf.mxu0
    %v236 = vadd.f32 %v97, %v235
    %v237 = vpop.f32.mrf.mxu0
    %v238 = vadd.f32 %v101, %v237
    %239 = vmatprep.mubr.bf16.mxu0 0
    %240 = vmatmul.mubr.bf16.gmra.mxu0 %v182
    %v241 = vpop.f32.mrf.mxu0
    %v242 = vadd.f32 %v97, %v241
    %v243 = vpop.f32.mrf.mxu0
    %v244 = vadd.f32 %v101, %v243
    %v245 = vpop.f32.mrf.mxu0
    %v246 = vadd.f32 %v97, %v245
    %v247 = vpop.f32.mrf.mxu0
    %v248 = vadd.f32 %v101, %v247
    %249 = vmatprep.mubr.bf16.mxu0 0
    %250 = vmatmul.mubr.bf16.gmra.mxu0 %v185
    %v251 = vpop.f32.mrf.mxu0
    %v252 = vadd.f32 %v97, %v251
    %v253 = vpop.f32.mrf.mxu0
    %v254 = vadd.f32 %v101, %v253
    %v255 = vpop.f32.mrf.mxu0
    %v256 = vadd.f32 %v97, %v255
    %v257 = vpop.f32.mrf.mxu0
    %v258 = vadd.f32 %v101, %v257
    %259 = vdwg.mxu0
    %260 = vmatprep.subr.bf16.mxu0 0
    %261 = vmatpush1.bf16.msra.mxu0 0
    %262 = vmatprep.subr.bf16.mxu0 0
    %263 = vmatpush1.bf16.msra.mxu0 0
    %264 = vmatprep.subr.bf16.mxu0 0
    %265 = vmatpush1.bf16.msra.mxu0 0
    %266 = vmatprep.subr.bf16.mxu0 0
    %267 = vmatpush1.bf16.msra.mxu0 0
    %268 = vmatprep.subr.bf16.mxu0 0
    %269 = vmatpush1.bf16.msra.mxu0 0
    %270 = vmatprep.subr.bf16.mxu0 0
    %271 = vmatpush1.bf16.msra.mxu0 0
    %272 = vmatprep.subr.bf16.mxu0 %v165
    %273 = vmatpush1.bf16.msra.mxu0 %v164
    %274 = vmatprep.subr.bf16.mxu0 %v161
    %275 = vmatpush1.bf16.msra.mxu0 %v160
    %276 = vmatprep.subr.bf16.mxu0 0
    %277 = vmatpush2.bf16.msra.mxu0 0
    %278 = vmatprep.subr.bf16.mxu0 0
    %279 = vmatpush2.bf16.msra.mxu0 0
    %280 = vmatprep.subr.bf16.mxu0 0
    %281 = vmatpush2.bf16.msra.mxu0 0
    %282 = vmatprep.subr.bf16.mxu0 0
    %283 = vmatpush2.bf16.msra.mxu0 0
    %284 = vmatprep.subr.bf16.mxu0 0
    %285 = vmatpush2.bf16.msra.mxu0 0
    %286 = vmatprep.subr.bf16.mxu0 0
    %287 = vmatpush2.bf16.msra.mxu0 0
    %288 = vmatprep.subr.bf16.mxu0 0
    %289 = vmatpush2.bf16.msra.mxu0 0
    %290 = vmatprep.subr.bf16.mxu0 0
    %291 = vmatpush2.bf16.msra.mxu0 0
    %292 = vmatprep.mubr.bf16.mxu0 0
    %293 = vmatmul.mubr.bf16.gmra.mxu0 %v176
    %v294 = vpop.f32.mrf.mxu0
    %v295 = vadd.f32 %v105, %v294
    %v296 = vpop.f32.mrf.mxu0
    %v297 = vadd.f32 %v109, %v296
    %v298 = vpop.f32.mrf.mxu0
    %v299 = vadd.f32 %v105, %v298
    %v300 = vpop.f32.mrf.mxu0
    %v301 = vadd.f32 %v109, %v300
    %302 = vmatprep.mubr.bf16.mxu0 0
    %303 = vmatmul.mubr.bf16.gmra.mxu0 %v179
    %v304 = vpop.f32.mrf.mxu0
    %v305 = vadd.f32 %v105, %v304
    %v306 = vpop.f32.mrf.mxu0
    %v307 = vadd.f32 %v109, %v306
    %v308 = vpop.f32.mrf.mxu0
    %v309 = vadd.f32 %v105, %v308
    %v310 = vpop.f32.mrf.mxu0
    %v311 = vadd.f32 %v109, %v310
    %312 = vmatprep.mubr.bf16.mxu0 0
    %313 = vmatmul.mubr.bf16.gmra.mxu0 %v182
    %v314 = vpop.f32.mrf.mxu0
    %v315 = vadd.f32 %v105, %v314
    %v316 = vpop.f32.mrf.mxu0
    %v317 = vadd.f32 %v109, %v316
    %v318 = vpop.f32.mrf.mxu0
    %v319 = vadd.f32 %v105, %v318
    %v320 = vpop.f32.mrf.mxu0
    %v321 = vadd.f32 %v109, %v320
    %322 = vmatprep.mubr.bf16.mxu0 0
    %323 = vmatmul.mubr.bf16.gmra.mxu0 %v185
    %v324 = vpop.f32.mrf.mxu0
    %v325 = vadd.f32 %v105, %v324
    %v326 = vpop.f32.mrf.mxu0
    %v327 = vadd.f32 %v109, %v326
    %v328 = vpop.f32.mrf.mxu0
    %v329 = vadd.f32 %v105, %v328
    %v330 = vpop.f32.mrf.mxu0
    %v331 = vadd.f32 %v109, %v330
    %332 = vdwg.mxu0
    %333 = vst [vmem:[#allocation3] sm:$0xff] %v222
    %334 = vst [vmem:[#allocation3 + $0x8] sm:$0xff] %v224
    %335 = vst [vmem:[#allocation3 + $0x10] sm:$0xff] %v295
    %336 = vst [vmem:[#allocation3 + $0x18] sm:$0xff] %v297
    %337 = vst [vmem:[#allocation3 + $0x20] sm:$0xff] %v226
    %338 = vst [vmem:[#allocation3 + $0x28] sm:$0xff] %v228
    %339 = vst [vmem:[#allocation3 + $0x30] sm:$0xff] %v299
    %340 = vst [vmem:[#allocation3 + $0x38] sm:$0xff] %v301
    %341 = vst [vmem:[#allocation3 + $0x40] sm:$0xff] %v232
    %342 = vst [vmem:[#allocation3 + $0x48] sm:$0xff] %v234
    %343 = vst [vmem:[#allocation3 + $0x50] sm:$0xff] %v305
    %344 = vst [vmem:[#allocation3 + $0x58] sm:$0xff] %v307
    %345 = vst [vmem:[#allocation3 + $0x60] sm:$0xff] %v236
    %346 = vst [vmem:[#allocation3 + $0x68] sm:$0xff] %v238
    %347 = vst [vmem:[#allocation3 + $0x70] sm:$0xff] %v309
    %348 = vst [vmem:[#allocation3 + $0x78] sm:$0xff] %v311
    %349 = vst [vmem:[#allocation3 + $0x80] sm:$0xff] %v242
    %350 = vst [vmem:[#allocation3 + $0x88] sm:$0xff] %v244
    %351 = vst [vmem:[#allocation3 + $0x90] sm:$0xff] %v315
    %352 = vst [vmem:[#allocation3 + $0x98] sm:$0xff] %v317
    %353 = vst [vmem:[#allocation3 + $0xa0] sm:$0xff] %v246
    %354 = vst [vmem:[#allocation3 + $0xa8] sm:$0xff] %v248
    %355 = vst [vmem:[#allocation3 + $0xb0] sm:$0xff] %v319
    %356 = vst [vmem:[#allocation3 + $0xb8] sm:$0xff] %v321
    %357 = vst [vmem:[#allocation3 + $0xc0] sm:$0xff] %v252
    %358 = vst [vmem:[#allocation3 + $0xc8] sm:$0xff] %v254
    %359 = vst [vmem:[#allocation3 + $0xd0] sm:$0xff] %v325
    %360 = vst [vmem:[#allocation3 + $0xd8] sm:$0xff] %v327
    %361 = vst [vmem:[#allocation3 + $0xe0] sm:$0xff] %v256
    %362 = vst [vmem:[#allocation3 + $0xe8] sm:$0xff] %v258
    %363 = vst [vmem:[#allocation3 + $0xf0] sm:$0xff] %v329
    %364 = vst [vmem:[#allocation3 + $0xf8] sm:$0xff] %v331
    %v365 = vld [vmem:[#allocation3] sm:$0xff]
    %v366 = vld [vmem:[#allocation3 + $0x8] sm:$0xff]
    %v367 = vld [vmem:[#allocation3 + $0x10] sm:$0xff]
    %v368 = vld [vmem:[#allocation3 + $0x18] sm:$0xff]
    %v369 = vld [vmem:[#allocation5] sm:$0xff]
    %v370 = vld [vmem:[#allocation5 + $0x8] sm:$0xff]
    %v371 = vld [vmem:[#allocation5 + $0x10] sm:$0xff]
    %v372 = vld [vmem:[#allocation5 + $0x18] sm:$0xff]
    %v373 = vld [vmem:[#allocation5 + $0x20] sm:$0xff]
    %v374 = vld [vmem:[#allocation5 + $0x28] sm:$0xff]
    %v375 = vld [vmem:[#allocation5 + $0x30] sm:$0xff]
    %v376 = vld [vmem:[#allocation5 + $0x38] sm:$0xff]
    %v377 = vld [vmem:[#allocation5 + $0x40] sm:$0xff]
    %v378 = vld [vmem:[#allocation5 + $0x48] sm:$0xff]
    %v379 = vld [vmem:[#allocation5 + $0x50] sm:$0xff]
    %v380 = vld [vmem:[#allocation5 + $0x58] sm:$0xff]
    %v381 = vld [vmem:[#allocation5 + $0x60] sm:$0xff]
    %v382 = vld [vmem:[#allocation5 + $0x68] sm:$0xff]
    %v383 = vld [vmem:[#allocation5 + $0x70] sm:$0xff]
    %v384 = vld [vmem:[#allocation5 + $0x78] sm:$0xff]
    %v385 = vld [vmem:[#allocation5 + $0x80] sm:$0xff]
    %v386 = vld [vmem:[#allocation5 + $0x88] sm:$0xff]
    %v387 = vld [vmem:[#allocation5 + $0x90] sm:$0xff]
    %v388 = vld [vmem:[#allocation5 + $0x98] sm:$0xff]
    %v389 = vld [vmem:[#allocation5 + $0xa0] sm:$0xff]
    %v390 = vld [vmem:[#allocation5 + $0xa8] sm:$0xff]
    %v391 = vld [vmem:[#allocation5 + $0xb0] sm:$0xff]
    %v392 = vld [vmem:[#allocation5 + $0xb8] sm:$0xff]
    %v393 = vld [vmem:[#allocation5 + $0xc0] sm:$0xff]
    %v394 = vld [vmem:[#allocation5 + $0xc8] sm:$0xff]
    %v395 = vld [vmem:[#allocation5 + $0xd0] sm:$0xff]
    %v396 = vld [vmem:[#allocation5 + $0xd8] sm:$0xff]
    %v397 = vld [vmem:[#allocation5 + $0xe0] sm:$0xff]
    %v398 = vld [vmem:[#allocation5 + $0xe8] sm:$0xff]
    %v399 = vld [vmem:[#allocation5 + $0xf0] sm:$0xff]
    %v400 = vld [vmem:[#allocation5 + $0xf8] sm:$0xff]
    %v433 = vunpack.c.l.b16 %v369
    %v434 = vunpack.c.h.b16 %v369
    %v435 = vunpack.c.l.b16 %v370
    %v436 = vunpack.c.h.b16 %v370
    %v437 = vunpack.c.l.b16 %v371
    %v438 = vunpack.c.h.b16 %v371
    %v439 = vunpack.c.l.b16 %v372
    %v440 = vunpack.c.h.b16 %v372
    %v441 = vunpack.c.l.b16 %v373
    %v442 = vunpack.c.h.b16 %v373
    %v443 = vunpack.c.l.b16 %v374
    %v444 = vunpack.c.h.b16 %v374
    %v445 = vunpack.c.l.b16 %v375
    %v446 = vunpack.c.h.b16 %v375
    %v447 = vunpack.c.l.b16 %v376
    %v448 = vunpack.c.h.b16 %v376
    %v449 = vunpack.c.l.b16 %v377
    %v450 = vunpack.c.h.b16 %v377
    %v451 = vunpack.c.l.b16 %v378
    %v452 = vunpack.c.h.b16 %v378
    %v453 = vunpack.c.l.b16 %v379
    %v454 = vunpack.c.h.b16 %v379
    %v455 = vunpack.c.l.b16 %v380
    %v456 = vunpack.c.h.b16 %v380
    %v457 = vunpack.c.l.b16 %v381
    %v458 = vunpack.c.h.b16 %v381
    %v459 = vunpack.c.l.b16 %v382
    %v460 = vunpack.c.h.b16 %v382
    %v461 = vunpack.c.l.b16 %v383
    %v462 = vunpack.c.h.b16 %v383
    %v463 = vunpack.c.l.b16 %v384
    %v464 = vunpack.c.h.b16 %v384
    %v465 = vunpack.c.l.b16 %v385
    %v466 = vunpack.c.h.b16 %v385
    %v467 = vunpack.c.l.b16 %v386
    %v468 = vunpack.c.h.b16 %v386
    %v469 = vunpack.c.l.b16 %v387
    %v470 = vunpack.c.h.b16 %v387
    %v471 = vunpack.c.l.b16 %v388
    %v472 = vunpack.c.h.b16 %v388
    %v473 = vunpack.c.l.b16 %v389
    %v474 = vunpack.c.h.b16 %v389
    %v475 = vunpack.c.l.b16 %v390
    %v476 = vunpack.c.h.b16 %v390
    %v477 = vunpack.c.l.b16 %v391
    %v478 = vunpack.c.h.b16 %v391
    %v479 = vunpack.c.l.b16 %v392
    %v480 = vunpack.c.h.b16 %v392
    %v481 = vunpack.c.l.b16 %v393
    %v482 = vunpack.c.h.b16 %v393
    %v483 = vunpack.c.l.b16 %v394
    %v484 = vunpack.c.h.b16 %v394
    %v485 = vunpack.c.l.b16 %v395
    %v486 = vunpack.c.h.b16 %v395
    %v487 = vunpack.c.l.b16 %v396
    %v488 = vunpack.c.h.b16 %v396
    %v489 = vunpack.c.l.b16 %v397
    %v490 = vunpack.c.h.b16 %v397
    %v491 = vunpack.c.l.b16 %v398
    %v492 = vunpack.c.h.b16 %v398
    %v493 = vunpack.c.l.b16 %v399
    %v494 = vunpack.c.h.b16 %v399
    %v495 = vunpack.c.l.b16 %v400
    %v496 = vunpack.c.h.b16 %v400
    %v497 = vpack.c.b16 %v437, %v433
    %v498 = vpack.c.b16 %v438, %v434
    %v499 = vpack.c.b16 %v439, %v435
    %v500 = vpack.c.b16 %v440, %v436
    %v501 = vpack.c.b16 %v445, %v441
    %v502 = vpack.c.b16 %v446, %v442
    %v503 = vpack.c.b16 %v447, %v443
    %v504 = vpack.c.b16 %v448, %v444
    %v505 = vpack.c.b16 %v453, %v449
    %v506 = vpack.c.b16 %v454, %v450
    %v507 = vpack.c.b16 %v455, %v451
    %v508 = vpack.c.b16 %v456, %v452
    %v509 = vpack.c.b16 %v461, %v457
    %v510 = vpack.c.b16 %v462, %v458
    %v511 = vpack.c.b16 %v463, %v459
    %v512 = vpack.c.b16 %v464, %v460
    %v513 = vpack.c.b16 %v469, %v465
    %v514 = vpack.c.b16 %v470, %v466
    %v515 = vpack.c.b16 %v471, %v467
    %v516 = vpack.c.b16 %v472, %v468
    %v517 = vpack.c.b16 %v477, %v473
    %v518 = vpack.c.b16 %v478, %v474
    %v519 = vpack.c.b16 %v479, %v475
    %v520 = vpack.c.b16 %v480, %v476
    %v521 = vpack.c.b16 %v485, %v481
    %v522 = vpack.c.b16 %v486, %v482
    %v523 = vpack.c.b16 %v487, %v483
    %v524 = vpack.c.b16 %v488, %v484
    %v525 = vpack.c.b16 %v493, %v489
    %v526 = vpack.c.b16 %v494, %v490
    %v527 = vpack.c.b16 %v495, %v491
    %v528 = vpack.c.b16 %v496, %v492
    %561 = vmatprep.subr.bf16.mxu0 %v526
    %562 = vmatpush1.bf16.msra.mxu0 %v525
    %563 = vmatprep.subr.bf16.mxu0 %v522
    %564 = vmatpush1.bf16.msra.mxu0 %v521
    %565 = vmatprep.subr.bf16.mxu0 %v518
    %566 = vmatpush1.bf16.msra.mxu0 %v517
    %567 = vmatprep.subr.bf16.mxu0 %v514
    %568 = vmatpush1.bf16.msra.mxu0 %v513
    %569 = vmatprep.subr.bf16.mxu0 %v510
    %570 = vmatpush1.bf16.msra.mxu0 %v509
    %571 = vmatprep.subr.bf16.mxu0 %v506
    %572 = vmatpush1.bf16.msra.mxu0 %v505
    %573 = vmatprep.subr.bf16.mxu0 %v502
    %574 = vmatpush1.bf16.msra.mxu0 %v501
    %575 = vmatprep.subr.bf16.mxu0 %v498
    %576 = vmatpush1.bf16.msra.mxu0 %v497
    %577 = vmatprep.subr.bf16.mxu0 0
    %578 = vmatpush2.bf16.msra.mxu0 0
    %579 = vmatprep.subr.bf16.mxu0 0
    %580 = vmatpush2.bf16.msra.mxu0 0
    %581 = vmatprep.subr.bf16.mxu0 0
    %582 = vmatpush2.bf16.msra.mxu0 0
    %583 = vmatprep.subr.bf16.mxu0 0
    %584 = vmatpush2.bf16.msra.mxu0 0
    %585 = vmatprep.subr.bf16.mxu0 0
    %586 = vmatpush2.bf16.msra.mxu0 0
    %587 = vmatprep.subr.bf16.mxu0 0
    %588 = vmatpush2.bf16.msra.mxu0 0
    %589 = vmatprep.subr.bf16.mxu0 0
    %590 = vmatpush2.bf16.msra.mxu0 0
    %591 = vmatprep.subr.bf16.mxu0 0
    %592 = vmatpush2.bf16.msra.mxu0 0
    %593 = vmatprep.mubr.bf16.mxu0 0
    %594 = vmatmul.mubr.bf16.gmra.mxu0 0
    %v595 = vpop.f32.mrf.mxu0
    %v596 = vadd.f32 0.0, %v595
    %v597 = vpop.f32.mrf.mxu0
    %v598 = vadd.f32 0.0, %v597
    %v599 = vpop.f32.mrf.mxu0
    %v600 = vpop.f32.mrf.mxu0
    %601 = vdwg.mxu0
    %602 = vmatprep.subr.bf16.mxu0 %v528
    %603 = vmatpush1.bf16.msra.mxu0 %v527
    %604 = vmatprep.subr.bf16.mxu0 %v524
    %605 = vmatpush1.bf16.msra.mxu0 %v523
    %606 = vmatprep.subr.bf16.mxu0 %v520
    %607 = vmatpush1.bf16.msra.mxu0 %v519
    %608 = vmatprep.subr.bf16.mxu0 %v516
    %609 = vmatpush1.bf16.msra.mxu0 %v515
    %610 = vmatprep.subr.bf16.mxu0 %v512
    %611 = vmatpush1.bf16.msra.mxu0 %v511
    %612 = vmatprep.subr.bf16.mxu0 %v508
    %613 = vmatpush1.bf16.msra.mxu0 %v507
    %614 = vmatprep.subr.bf16.mxu0 %v504
    %615 = vmatpush1.bf16.msra.mxu0 %v503
    %616 = vmatprep.subr.bf16.mxu0 %v500
    %617 = vmatpush1.bf16.msra.mxu0 %v499
    %618 = vmatprep.subr.bf16.mxu0 0
    %619 = vmatpush2.bf16.msra.mxu0 0
    %620 = vmatprep.subr.bf16.mxu0 0
    %621 = vmatpush2.bf16.msra.mxu0 0
    %622 = vmatprep.subr.bf16.mxu0 0
    %623 = vmatpush2.bf16.msra.mxu0 0
    %624 = vmatprep.subr.bf16.mxu0 0
    %625 = vmatpush2.bf16.msra.mxu0 0
    %626 = vmatprep.subr.bf16.mxu0 0
    %627 = vmatpush2.bf16.msra.mxu0 0
    %628 = vmatprep.subr.bf16.mxu0 0
    %629 = vmatpush2.bf16.msra.mxu0 0
    %630 = vmatprep.subr.bf16.mxu0 0
    %631 = vmatpush2.bf16.msra.mxu0 0
    %632 = vmatprep.subr.bf16.mxu0 0
    %633 = vmatpush2.bf16.msra.mxu0 0
    %634 = vmatprep.mubr.bf16.mxu0 0
    %635 = vmatmul.mubr.bf16.gmra.mxu0 0
    %v636 = vpop.f32.mrf.mxu0
    %v637 = vadd.f32 0.0, %v636
    %v638 = vpop.f32.mrf.mxu0
    %v639 = vadd.f32 0.0, %v638
    %v640 = vpop.f32.mrf.mxu0
    %v641 = vpop.f32.mrf.mxu0
    %642 = vdwg.mxu0
    %v643 = vadd.f32 %v365, %v596
    %v644 = vadd.f32 %v366, %v598
    %v645 = vadd.f32 %v367, %v637
    %v646 = vadd.f32 %v368, %v639
    %v647 = vxor.u32 %v643, 2147483648
    %v648 = vmul.f32 %v647, 1.442695
    %v649 = vpow.pop %v648
    %v650 = vadd.f32 %v649, 1.0
    %v651 = vrcp.pop %v650
    %v652 = vmul.f32 1.0, %v651
    %v653 = vxor.u32 %v644, 2147483648
    %v654 = vmul.f32 %v653, 1.442695
    %v655 = vpow.pop %v654
    %v656 = vadd.f32 %v655, 1.0
    %v657 = vrcp.pop %v656
    %v658 = vmul.f32 1.0, %v657
    %v659 = vtanh.pop %v645
    %v660 = vxor.u32 %v646, 2147483648
    %v661 = vmul.f32 %v660, 1.442695
    %v662 = vpow.pop %v661
    %v663 = vadd.f32 %v662, 1.0
    %v664 = vrcp.pop %v663
    %v665 = vmul.f32 1.0, %v664
    %v666 = vmul.f32 %v658, 0.0
    %v667 = vmul.f32 %v652, %v659
    %v668 = vadd.f32 %v666, %v667
    %v669 = vtanh.pop %v668
    %v670 = vmul.f32 %v665, %v669
    %v671 = vpack.c.bf16 %v670, %v670
    %672 = vst [vmem:[#allocation2] sm:$0xf] %v671
    %v673 = vld [vmem:[#allocation3 + $0x20] sm:$0xff]
    %v674 = vld [vmem:[#allocation3 + $0x28] sm:$0xff]
    %v675 = vld [vmem:[#allocation3 + $0x30] sm:$0xff]
    %v676 = vld [vmem:[#allocation3 + $0x38] sm:$0xff]
    %v677 = vld [vmem:[#allocation5] sm:$0xff]
    %v678 = vld [vmem:[#allocation5 + $0x8] sm:$0xff]
    %v679 = vld [vmem:[#allocation5 + $0x10] sm:$0xff]
    %v680 = vld [vmem:[#allocation5 + $0x18] sm:$0xff]
    %v681 = vld [vmem:[#allocation5 + $0x20] sm:$0xff]
    %v682 = vld [vmem:[#allocation5 + $0x28] sm:$0xff]
    %v683 = vld [vmem:[#allocation5 + $0x30] sm:$0xff]
    %v684 = vld [vmem:[#allocation5 + $0x38] sm:$0xff]
    %v685 = vld [vmem:[#allocation5 + $0x40] sm:$0xff]
    %v686 = vld [vmem:[#allocation5 + $0x48] sm:$0xff]
    %v687 = vld [vmem:[#allocation5 + $0x50] sm:$0xff]
    %v688 = vld [vmem:[#allocation5 + $0x58] sm:$0xff]
    %v689 = vld [vmem:[#allocation5 + $0x60] sm:$0xff]
    %v690 = vld [vmem:[#allocation5 + $0x68] sm:$0xff]
    %v691 = vld [vmem:[#allocation5 + $0x70] sm:$0xff]
    %v692 = vld [vmem:[#allocation5 + $0x78] sm:$0xff]
    %v693 = vld [vmem:[#allocation5 + $0x80] sm:$0xff]
    %v694 = vld [vmem:[#allocation5 + $0x88] sm:$0xff]
    %v695 = vld [vmem:[#allocation5 + $0x90] sm:$0xff]
    %v696 = vld [vmem:[#allocation5 + $0x98] sm:$0xff]
    %v697 = vld [vmem:[#allocation5 + $0xa0] sm:$0xff]
    %v698 = vld [vmem:[#allocation5 + $0xa8] sm:$0xff]
    %v699 = vld [vmem:[#allocation5 + $0xb0] sm:$0xff]
    %v700 = vld [vmem:[#allocation5 + $0xb8] sm:$0xff]
    %v701 = vld [vmem:[#allocation5 + $0xc0] sm:$0xff]
    %v702 = vld [vmem:[#allocation5 + $0xc8] sm:$0xff]
    %v703 = vld [vmem:[#allocation5 + $0xd0] sm:$0xff]
    %v704 = vld [vmem:[#allocation5 + $0xd8] sm:$0xff]
    %v705 = vld [vmem:[#allocation5 + $0xe0] sm:$0xff]
    %v706 = vld [vmem:[#allocation5 + $0xe8] sm:$0xff]
    %v707 = vld [vmem:[#allocation5 + $0xf0] sm:$0xff]
    %v708 = vld [vmem:[#allocation5 + $0xf8] sm:$0xff]
    %v741 = vunpack.c.l.b16 %v677
    %v742 = vunpack.c.h.b16 %v677
    %v743 = vunpack.c.l.b16 %v678
    %v744 = vunpack.c.h.b16 %v678
    %v745 = vunpack.c.l.b16 %v679
    %v746 = vunpack.c.h.b16 %v679
    %v747 = vunpack.c.l.b16 %v680
    %v748 = vunpack.c.h.b16 %v680
    %v749 = vunpack.c.l.b16 %v681
    %v750 = vunpack.c.h.b16 %v681
    %v751 = vunpack.c.l.b16 %v682
    %v752 = vunpack.c.h.b16 %v682
    %v753 = vunpack.c.l.b16 %v683
    %v754 = vunpack.c.h.b16 %v683
    %v755 = vunpack.c.l.b16 %v684
    %v756 = vunpack.c.h.b16 %v684
    %v757 = vunpack.c.l.b16 %v685
    %v758 = vunpack.c.h.b16 %v685
    %v759 = vunpack.c.l.b16 %v686
    %v760 = vunpack.c.h.b16 %v686
    %v761 = vunpack.c.l.b16 %v687
    %v762 = vunpack.c.h.b16 %v687
    %v763 = vunpack.c.l.b16 %v688
    %v764 = vunpack.c.h.b16 %v688
    %v765 = vunpack.c.l.b16 %v689
    %v766 = vunpack.c.h.b16 %v689
    %v767 = vunpack.c.l.b16 %v690
    %v768 = vunpack.c.h.b16 %v690
    %v769 = vunpack.c.l.b16 %v691
    %v770 = vunpack.c.h.b16 %v691
    %v771 = vunpack.c.l.b16 %v692
    %v772 = vunpack.c.h.b16 %v692
    %v773 = vunpack.c.l.b16 %v693
    %v774 = vunpack.c.h.b16 %v693
    %v775 = vunpack.c.l.b16 %v694
    %v776 = vunpack.c.h.b16 %v694
    %v777 = vunpack.c.l.b16 %v695
    %v778 = vunpack.c.h.b16 %v695
    %v779 = vunpack.c.l.b16 %v696
    %v780 = vunpack.c.h.b16 %v696
    %v781 = vunpack.c.l.b16 %v697
    %v782 = vunpack.c.h.b16 %v697
    %v783 = vunpack.c.l.b16 %v698
    %v784 = vunpack.c.h.b16 %v698
    %v785 = vunpack.c.l.b16 %v699
    %v786 = vunpack.c.h.b16 %v699
    %v787 = vunpack.c.l.b16 %v700
    %v788 = vunpack.c.h.b16 %v700
    %v789 = vunpack.c.l.b16 %v701
    %v790 = vunpack.c.h.b16 %v701
    %v791 = vunpack.c.l.b16 %v702
    %v792 = vunpack.c.h.b16 %v702
    %v793 = vunpack.c.l.b16 %v703
    %v794 = vunpack.c.h.b16 %v703
    %v795 = vunpack.c.l.b16 %v704
    %v796 = vunpack.c.h.b16 %v704
    %v797 = vunpack.c.l.b16 %v705
    %v798 = vunpack.c.h.b16 %v705
    %v799 = vunpack.c.l.b16 %v706
    %v800 = vunpack.c.h.b16 %v706
    %v801 = vunpack.c.l.b16 %v707
    %v802 = vunpack.c.h.b16 %v707
    %v803 = vunpack.c.l.b16 %v708
    %v804 = vunpack.c.h.b16 %v708
    %v805 = vpack.c.b16 %v745, %v741
    %v806 = vpack.c.b16 %v746, %v742
    %v807 = vpack.c.b16 %v747, %v743
    %v808 = vpack.c.b16 %v748, %v744
    %v809 = vpack.c.b16 %v753, %v749
    %v810 = vpack.c.b16 %v754, %v750
    %v811 = vpack.c.b16 %v755, %v751
    %v812 = vpack.c.b16 %v756, %v752
    %v813 = vpack.c.b16 %v761, %v757
    %v814 = vpack.c.b16 %v762, %v758
    %v815 = vpack.c.b16 %v763, %v759
    %v816 = vpack.c.b16 %v764, %v760
    %v817 = vpack.c.b16 %v769, %v765
    %v818 = vpack.c.b16 %v770, %v766
    %v819 = vpack.c.b16 %v771, %v767
    %v820 = vpack.c.b16 %v772, %v768
    %v821 = vpack.c.b16 %v777, %v773
    %v822 = vpack.c.b16 %v778, %v774
    %v823 = vpack.c.b16 %v779, %v775
    %v824 = vpack.c.b16 %v780, %v776
    %v825 = vpack.c.b16 %v785, %v781
    %v826 = vpack.c.b16 %v786, %v782
    %v827 = vpack.c.b16 %v787, %v783
    %v828 = vpack.c.b16 %v788, %v784
    %v829 = vpack.c.b16 %v793, %v789
    %v830 = vpack.c.b16 %v794, %v790
    %v831 = vpack.c.b16 %v795, %v791
    %v832 = vpack.c.b16 %v796, %v792
    %v833 = vpack.c.b16 %v801, %v797
    %v834 = vpack.c.b16 %v802, %v798
    %v835 = vpack.c.b16 %v803, %v799
    %v836 = vpack.c.b16 %v804, %v800
    %869 = vmatprep.subr.bf16.mxu0 %v834
    %870 = vmatpush1.bf16.msra.mxu0 %v833
    %871 = vmatprep.subr.bf16.mxu0 %v830
    %872 = vmatpush1.bf16.msra.mxu0 %v829
    %873 = vmatprep.subr.bf16.mxu0 %v826
    %874 = vmatpush1.bf16.msra.mxu0 %v825
    %875 = vmatprep.subr.bf16.mxu0 %v822
    %876 = vmatpush1.bf16.msra.mxu0 %v821
    %877 = vmatprep.subr.bf16.mxu0 %v818
    %878 = vmatpush1.bf16.msra.mxu0 %v817
    %879 = vmatprep.subr.bf16.mxu0 %v814
    %880 = vmatpush1.bf16.msra.mxu0 %v813
    %881 = vmatprep.subr.bf16.mxu0 %v810
    %882 = vmatpush1.bf16.msra.mxu0 %v809
    %883 = vmatprep.subr.bf16.mxu0 %v806
    %884 = vmatpush1.bf16.msra.mxu0 %v805
    %885 = vmatprep.subr.bf16.mxu0 0
    %886 = vmatpush2.bf16.msra.mxu0 0
    %887 = vmatprep.subr.bf16.mxu0 0
    %888 = vmatpush2.bf16.msra.mxu0 0
    %889 = vmatprep.subr.bf16.mxu0 0
    %890 = vmatpush2.bf16.msra.mxu0 0
    %891 = vmatprep.subr.bf16.mxu0 0
    %892 = vmatpush2.bf16.msra.mxu0 0
    %893 = vmatprep.subr.bf16.mxu0 0
    %894 = vmatpush2.bf16.msra.mxu0 0
    %895 = vmatprep.subr.bf16.mxu0 0
    %896 = vmatpush2.bf16.msra.mxu0 0
    %897 = vmatprep.subr.bf16.mxu0 0
    %898 = vmatpush2.bf16.msra.mxu0 0
    %899 = vmatprep.subr.bf16.mxu0 0
    %900 = vmatpush2.bf16.msra.mxu0 0
    %901 = vmatprep.mubr.bf16.mxu0 0
    %902 = vmatmul.mubr.bf16.gmra.mxu0 %v671
    %v903 = vpop.f32.mrf.mxu0
    %v904 = vadd.f32 0.0, %v903
    %v905 = vpop.f32.mrf.mxu0
    %v906 = vadd.f32 0.0, %v905
    %v907 = vpop.f32.mrf.mxu0
    %v908 = vpop.f32.mrf.mxu0
    %909 = vdwg.mxu0
    %910 = vmatprep.subr.bf16.mxu0 %v836
    %911 = vmatpush1.bf16.msra.mxu0 %v835
    %912 = vmatprep.subr.bf16.mxu0 %v832
    %913 = vmatpush1.bf16.msra.mxu0 %v831
    %914 = vmatprep.subr.bf16.mxu0 %v828
    %915 = vmatpush1.bf16.msra.mxu0 %v827
    %916 = vmatprep.subr.bf16.mxu0 %v824
    %917 = vmatpush1.bf16.msra.mxu0 %v823
    %918 = vmatprep.subr.bf16.mxu0 %v820
    %919 = vmatpush1.bf16.msra.mxu0 %v819
    %920 = vmatprep.subr.bf16.mxu0 %v816
    %921 = vmatpush1.bf16.msra.mxu0 %v815
    %922 = vmatprep.subr.bf16.mxu0 %v812
    %923 = vmatpush1.bf16.msra.mxu0 %v811
    %924 = vmatprep.subr.bf16.mxu0 %v808
    %925 = vmatpush1.bf16.msra.mxu0 %v807
    %926 = vmatprep.subr.bf16.mxu0 0
    %927 = vmatpush2.bf16.msra.mxu0 0
    %928 = vmatprep.subr.bf16.mxu0 0
    %929 = vmatpush2.bf16.msra.mxu0 0
    %930 = vmatprep.subr.bf16.mxu0 0
    %931 = vmatpush2.bf16.msra.mxu0 0
    %932 = vmatprep.subr.bf16.mxu0 0
    %933 = vmatpush2.bf16.msra.mxu0 0
    %934 = vmatprep.subr.bf16.mxu0 0
    %935 = vmatpush2.bf16.msra.mxu0 0
    %936 = vmatprep.subr.bf16.mxu0 0
    %937 = vmatpush2.bf16.msra.mxu0 0
    %938 = vmatprep.subr.bf16.mxu0 0
    %939 = vmatpush2.bf16.msra.mxu0 0
    %940 = vmatprep.subr.bf16.mxu0 0
    %941 = vmatpush2.bf16.msra.mxu0 0
    %942 = vmatprep.mubr.bf16.mxu0 0
    %943 = vmatmul.mubr.bf16.gmra.mxu0 %v671
    %v944 = vpop.f32.mrf.mxu0
    %v945 = vadd.f32 0.0, %v944
    %v946 = vpop.f32.mrf.mxu0
    %v947 = vadd.f32 0.0, %v946
    %v948 = vpop.f32.mrf.mxu0
    %v949 = vpop.f32.mrf.mxu0
    %950 = vdwg.mxu0
    %v951 = vadd.f32 %v673, %v904
    %v952 = vadd.f32 %v674, %v906
    %v953 = vadd.f32 %v675, %v945
    %v954 = vadd.f32 %v676, %v947
    %v955 = vxor.u32 %v951, 2147483648
    %v956 = vmul.f32 %v955, 1.442695
    %v957 = vpow.pop %v956
    %v958 = vadd.f32 %v957, 1.0
    %v959 = vrcp.pop %v958
    %v960 = vmul.f32 1.0, %v959
    %v961 = vxor.u32 %v952, 2147483648
    %v962 = vmul.f32 %v961, 1.442695
    %v963 = vpow.pop %v962
    %v964 = vadd.f32 %v963, 1.0
    %v965 = vrcp.pop %v964
    %v966 = vmul.f32 1.0, %v965
    %v967 = vtanh.pop %v953
    %v968 = vxor.u32 %v954, 2147483648
    %v969 = vmul.f32 %v968, 1.442695
    %v970 = vpow.pop %v969
    %v971 = vadd.f32 %v970, 1.0
    %v972 = vrcp.pop %v971
    %v973 = vmul.f32 1.0, %v972
    %v974 = vmul.f32 %v966, %v668
    %v975 = vmul.f32 %v960, %v967
    %v976 = vadd.f32 %v974, %v975
    %v977 = vtanh.pop %v976
    %v978 = vmul.f32 %v973, %v977
    %v979 = vpack.c.bf16 %v978, %v978
    %980 = vst [vmem:[#allocation2 + $0x4] sm:$0xf] %v979
    %v981 = vld [vmem:[#allocation3 + $0x40] sm:$0xff]
    %v982 = vld [vmem:[#allocation3 + $0x48] sm:$0xff]
    %v983 = vld [vmem:[#allocation3 + $0x50] sm:$0xff]
    %v984 = vld [vmem:[#allocation3 + $0x58] sm:$0xff]
    %v985 = vld [vmem:[#allocation5] sm:$0xff]
    %v986 = vld [vmem:[#allocation5 + $0x8] sm:$0xff]
    %v987 = vld [vmem:[#allocation5 + $0x10] sm:$0xff]
    %v988 = vld [vmem:[#allocation5 + $0x18] sm:$0xff]
    %v989 = vld [vmem:[#allocation5 + $0x20] sm:$0xff]
    %v990 = vld [vmem:[#allocation5 + $0x28] sm:$0xff]
    %v991 = vld [vmem:[#allocation5 + $0x30] sm:$0xff]
    %v992 = vld [vmem:[#allocation5 + $0x38] sm:$0xff]
    %v993 = vld [vmem:[#allocation5 + $0x40] sm:$0xff]
    %v994 = vld [vmem:[#allocation5 + $0x48] sm:$0xff]
    %v995 = vld [vmem:[#allocation5 + $0x50] sm:$0xff]
    %v996 = vld [vmem:[#allocation5 + $0x58] sm:$0xff]
    %v997 = vld [vmem:[#allocation5 + $0x60] sm:$0xff]
    %v998 = vld [vmem:[#allocation5 + $0x68] sm:$0xff]
    %v999 = vld [vmem:[#allocation5 + $0x70] sm:$0xff]
    %v1000 = vld [vmem:[#allocation5 + $0x78] sm:$0xff]
    %v1001 = vld [vmem:[#allocation5 + $0x80] sm:$0xff]
    %v1002 = vld [vmem:[#allocation5 + $0x88] sm:$0xff]
    %v1003 = vld [vmem:[#allocation5 + $0x90] sm:$0xff]
    %v1004 = vld [vmem:[#allocation5 + $0x98] sm:$0xff]
    %v1005 = vld [vmem:[#allocation5 + $0xa0] sm:$0xff]
    %v1006 = vld [vmem:[#allocation5 + $0xa8] sm:$0xff]
    %v1007 = vld [vmem:[#allocation5 + $0xb0] sm:$0xff]
    %v1008 = vld [vmem:[#allocation5 + $0xb8] sm:$0xff]
    %v1009 = vld [vmem:[#allocation5 + $0xc0] sm:$0xff]
    %v1010 = vld [vmem:[#allocation5 + $0xc8] sm:$0xff]
    %v1011 = vld [vmem:[#allocation5 + $0xd0] sm:$0xff]
    %v1012 = vld [vmem:[#allocation5 + $0xd8] sm:$0xff]
    %v1013 = vld [vmem:[#allocation5 + $0xe0] sm:$0xff]
    %v1014 = vld [vmem:[#allocation5 + $0xe8] sm:$0xff]
    %v1015 = vld [vmem:[#allocation5 + $0xf0] sm:$0xff]
    %v1016 = vld [vmem:[#allocation5 + $0xf8] sm:$0xff]
    %v1049 = vunpack.c.l.b16 %v985
    %v1050 = vunpack.c.h.b16 %v985
    %v1051 = vunpack.c.l.b16 %v986
    %v1052 = vunpack.c.h.b16 %v986
    %v1053 = vunpack.c.l.b16 %v987
    %v1054 = vunpack.c.h.b16 %v987
    %v1055 = vunpack.c.l.b16 %v988
    %v1056 = vunpack.c.h.b16 %v988
    %v1057 = vunpack.c.l.b16 %v989
    %v1058 = vunpack.c.h.b16 %v989
    %v1059 = vunpack.c.l.b16 %v990
    %v1060 = vunpack.c.h.b16 %v990
    %v1061 = vunpack.c.l.b16 %v991
    %v1062 = vunpack.c.h.b16 %v991
    %v1063 = vunpack.c.l.b16 %v992
    %v1064 = vunpack.c.h.b16 %v992
    %v1065 = vunpack.c.l.b16 %v993
    %v1066 = vunpack.c.h.b16 %v993
    %v1067 = vunpack.c.l.b16 %v994
    %v1068 = vunpack.c.h.b16 %v994
    %v1069 = vunpack.c.l.b16 %v995
    %v1070 = vunpack.c.h.b16 %v995
    %v1071 = vunpack.c.l.b16 %v996
    %v1072 = vunpack.c.h.b16 %v996
    %v1073 = vunpack.c.l.b16 %v997
    %v1074 = vunpack.c.h.b16 %v997
    %v1075 = vunpack.c.l.b16 %v998
    %v1076 = vunpack.c.h.b16 %v998
    %v1077 = vunpack.c.l.b16 %v999
    %v1078 = vunpack.c.h.b16 %v999
    %v1079 = vunpack.c.l.b16 %v1000
    %v1080 = vunpack.c.h.b16 %v1000
    %v1081 = vunpack.c.l.b16 %v1001
    %v1082 = vunpack.c.h.b16 %v1001
    %v1083 = vunpack.c.l.b16 %v1002
    %v1084 = vunpack.c.h.b16 %v1002
    %v1085 = vunpack.c.l.b16 %v1003
    %v1086 = vunpack.c.h.b16 %v1003
    %v1087 = vunpack.c.l.b16 %v1004
    %v1088 = vunpack.c.h.b16 %v1004
    %v1089 = vunpack.c.l.b16 %v1005
    %v1090 = vunpack.c.h.b16 %v1005
    %v1091 = vunpack.c.l.b16 %v1006
    %v1092 = vunpack.c.h.b16 %v1006
    %v1093 = vunpack.c.l.b16 %v1007
    %v1094 = vunpack.c.h.b16 %v1007
    %v1095 = vunpack.c.l.b16 %v1008
    %v1096 = vunpack.c.h.b16 %v1008
    %v1097 = vunpack.c.l.b16 %v1009
    %v1098 = vunpack.c.h.b16 %v1009
    %v1099 = vunpack.c.l.b16 %v1010
    %v1100 = vunpack.c.h.b16 %v1010
    %v1101 = vunpack.c.l.b16 %v1011
    %v1102 = vunpack.c.h.b16 %v1011
    %v1103 = vunpack.c.l.b16 %v1012
    %v1104 = vunpack.c.h.b16 %v1012
    %v1105 = vunpack.c.l.b16 %v1013
    %v1106 = vunpack.c.h.b16 %v1013
    %v1107 = vunpack.c.l.b16 %v1014
    %v1108 = vunpack.c.h.b16 %v1014
    %v1109 = vunpack.c.l.b16 %v1015
    %v1110 = vunpack.c.h.b16 %v1015
    %v1111 = vunpack.c.l.b16 %v1016
    %v1112 = vunpack.c.h.b16 %v1016
    %v1113 = vpack.c.b16 %v1053, %v1049
    %v1114 = vpack.c.b16 %v1054, %v1050
    %v1115 = vpack.c.b16 %v1055, %v1051
    %v1116 = vpack.c.b16 %v1056, %v1052
    %v1117 = vpack.c.b16 %v1061, %v1057
    %v1118 = vpack.c.b16 %v1062, %v1058
    %v1119 = vpack.c.b16 %v1063, %v1059
    %v1120 = vpack.c.b16 %v1064, %v1060
    %v1121 = vpack.c.b16 %v1069, %v1065
    %v1122 = vpack.c.b16 %v1070, %v1066
    %v1123 = vpack.c.b16 %v1071, %v1067
    %v1124 = vpack.c.b16 %v1072, %v1068
    %v1125 = vpack.c.b16 %v1077, %v1073
    %v1126 = vpack.c.b16 %v1078, %v1074
    %v1127 = vpack.c.b16 %v1079, %v1075
    %v1128 = vpack.c.b16 %v1080, %v1076
    %v1129 = vpack.c.b16 %v1085, %v1081
    %v1130 = vpack.c.b16 %v1086, %v1082
    %v1131 = vpack.c.b16 %v1087, %v1083
    %v1132 = vpack.c.b16 %v1088, %v1084
    %v1133 = vpack.c.b16 %v1093, %v1089
    %v1134 = vpack.c.b16 %v1094, %v1090
    %v1135 = vpack.c.b16 %v1095, %v1091
    %v1136 = vpack.c.b16 %v1096, %v1092
    %v1137 = vpack.c.b16 %v1101, %v1097
    %v1138 = vpack.c.b16 %v1102, %v1098
    %v1139 = vpack.c.b16 %v1103, %v1099
    %v1140 = vpack.c.b16 %v1104, %v1100
    %v1141 = vpack.c.b16 %v1109, %v1105
    %v1142 = vpack.c.b16 %v1110, %v1106
    %v1143 = vpack.c.b16 %v1111, %v1107
    %v1144 = vpack.c.b16 %v1112, %v1108
    %1177 = vmatprep.subr.bf16.mxu0 %v1142
    %1178 = vmatpush1.bf16.msra.mxu0 %v1141
    %1179 = vmatprep.subr.bf16.mxu0 %v1138
    %1180 = vmatpush1.bf16.msra.mxu0 %v1137
    %1181 = vmatprep.subr.bf16.mxu0 %v1134
    %1182 = vmatpush1.bf16.msra.mxu0 %v1133
    %1183 = vmatprep.subr.bf16.mxu0 %v1130
    %1184 = vmatpush1.bf16.msra.mxu0 %v1129
    %1185 = vmatprep.subr.bf16.mxu0 %v1126
    %1186 = vmatpush1.bf16.msra.mxu0 %v1125
    %1187 = vmatprep.subr.bf16.mxu0 %v1122
    %1188 = vmatpush1.bf16.msra.mxu0 %v1121
    %1189 = vmatprep.subr.bf16.mxu0 %v1118
    %1190 = vmatpush1.bf16.msra.mxu0 %v1117
    %1191 = vmatprep.subr.bf16.mxu0 %v1114
    %1192 = vmatpush1.bf16.msra.mxu0 %v1113
    %1193 = vmatprep.subr.bf16.mxu0 0
    %1194 = vmatpush2.bf16.msra.mxu0 0
    %1195 = vmatprep.subr.bf16.mxu0 0
    %1196 = vmatpush2.bf16.msra.mxu0 0
    %1197 = vmatprep.subr.bf16.mxu0 0
    %1198 = vmatpush2.bf16.msra.mxu0 0
    %1199 = vmatprep.subr.bf16.mxu0 0
    %1200 = vmatpush2.bf16.msra.mxu0 0
    %1201 = vmatprep.subr.bf16.mxu0 0
    %1202 = vmatpush2.bf16.msra.mxu0 0
    %1203 = vmatprep.subr.bf16.mxu0 0
    %1204 = vmatpush2.bf16.msra.mxu0 0
    %1205 = vmatprep.subr.bf16.mxu0 0
    %1206 = vmatpush2.bf16.msra.mxu0 0
    %1207 = vmatprep.subr.bf16.mxu0 0
    %1208 = vmatpush2.bf16.msra.mxu0 0
    %1209 = vmatprep.mubr.bf16.mxu0 0
    %1210 = vmatmul.mubr.bf16.gmra.mxu0 %v979
    %v1211 = vpop.f32.mrf.mxu0
    %v1212 = vadd.f32 0.0, %v1211
    %v1213 = vpop.f32.mrf.mxu0
    %v1214 = vadd.f32 0.0, %v1213
    %v1215 = vpop.f32.mrf.mxu0
    %v1216 = vpop.f32.mrf.mxu0
    %1217 = vdwg.mxu0
    %1218 = vmatprep.subr.bf16.mxu0 %v1144
    %1219 = vmatpush1.bf16.msra.mxu0 %v1143
    %1220 = vmatprep.subr.bf16.mxu0 %v1140
    %1221 = vmatpush1.bf16.msra.mxu0 %v1139
    %1222 = vmatprep.subr.bf16.mxu0 %v1136
    %1223 = vmatpush1.bf16.msra.mxu0 %v1135
    %1224 = vmatprep.subr.bf16.mxu0 %v1132
    %1225 = vmatpush1.bf16.msra.mxu0 %v1131
    %1226 = vmatprep.subr.bf16.mxu0 %v1128
    %1227 = vmatpush1.bf16.msra.mxu0 %v1127
    %1228 = vmatprep.subr.bf16.mxu0 %v1124
    %1229 = vmatpush1.bf16.msra.mxu0 %v1123
    %1230 = vmatprep.subr.bf16.mxu0 %v1120
    %1231 = vmatpush1.bf16.msra.mxu0 %v1119
    %1232 = vmatprep.subr.bf16.mxu0 %v1116
    %1233 = vmatpush1.bf16.msra.mxu0 %v1115
    %1234 = vmatprep.subr.bf16.mxu0 0
    %1235 = vmatpush2.bf16.msra.mxu0 0
    %1236 = vmatprep.subr.bf16.mxu0 0
    %1237 = vmatpush2.bf16.msra.mxu0 0
    %1238 = vmatprep.subr.bf16.mxu0 0
    %1239 = vmatpush2.bf16.msra.mxu0 0
    %1240 = vmatprep.subr.bf16.mxu0 0
    %1241 = vmatpush2.bf16.msra.mxu0 0
    %1242 = vmatprep.subr.bf16.mxu0 0
    %1243 = vmatpush2.bf16.msra.mxu0 0
    %1244 = vmatprep.subr.bf16.mxu0 0
    %1245 = vmatpush2.bf16.msra.mxu0 0
    %1246 = vmatprep.subr.bf16.mxu0 0
    %1247 = vmatpush2.bf16.msra.mxu0 0
    %1248 = vmatprep.subr.bf16.mxu0 0
    %1249 = vmatpush2.bf16.msra.mxu0 0
    %1250 = vmatprep.mubr.bf16.mxu0 0
    %1251 = vmatmul.mubr.bf16.gmra.mxu0 %v979
    %v1252 = vpop.f32.mrf.mxu0
    %v1253 = vadd.f32 0.0, %v1252
    %v1254 = vpop.f32.mrf.mxu0
    %v1255 = vadd.f32 0.0, %v1254
    %v1256 = vpop.f32.mrf.mxu0
    %v1257 = vpop.f32.mrf.mxu0
    %1258 = vdwg.mxu0
    %v1259 = vadd.f32 %v981, %v1212
    %v1260 = vadd.f32 %v982, %v1214
    %v1261 = vadd.f32 %v983, %v1253
    %v1262 = vadd.f32 %v984, %v1255
    %v1263 = vxor.u32 %v1259, 2147483648
    %v1264 = vmul.f32 %v1263, 1.442695
    %v1265 = vpow.pop %v1264
    %v1266 = vadd.f32 %v1265, 1.0
    %v1267 = vrcp.pop %v1266
    %v1268 = vmul.f32 1.0, %v1267
    %v1269 = vxor.u32 %v1260, 2147483648
    %v1270 = vmul.f32 %v1269, 1.442695
    %v1271 = vpow.pop %v1270
    %v1272 = vadd.f32 %v1271, 1.0
    %v1273 = vrcp.pop %v1272
    %v1274 = vmul.f32 1.0, %v1273
    %v1275 = vtanh.pop %v1261
    %v1276 = vxor.u32 %v1262, 2147483648
    %v1277 = vmul.f32 %v1276, 1.442695
    %v1278 = vpow.pop %v1277
    %v1279 = vadd.f32 %v1278, 1.0
    %v1280 = vrcp.pop %v1279
    %v1281 = vmul.f32 1.0, %v1280
    %v1282 = vmul.f32 %v1274, %v976
    %v1283 = vmul.f32 %v1268, %v1275
    %v1284 = vadd.f32 %v1282, %v1283
    %v1285 = vtanh.pop %v1284
    %v1286 = vmul.f32 %v1281, %v1285
    %v1287 = vpack.c.bf16 %v1286, %v1286
    %1288 = vst [vmem:[#allocation2 + $0x8] sm:$0xf] %v1287
    %v1289 = vld [vmem:[#allocation3 + $0x60] sm:$0xff]
    %v1290 = vld [vmem:[#allocation3 + $0x68] sm:$0xff]
    %v1291 = vld [vmem:[#allocation3 + $0x70] sm:$0xff]
    %v1292 = vld [vmem:[#allocation3 + $0x78] sm:$0xff]
    %v1293 = vld [vmem:[#allocation5] sm:$0xff]
    %v1294 = vld [vmem:[#allocation5 + $0x8] sm:$0xff]
    %v1295 = vld [vmem:[#allocation5 + $0x10] sm:$0xff]
    %v1296 = vld [vmem:[#allocation5 + $0x18] sm:$0xff]
    %v1297 = vld [vmem:[#allocation5 + $0x20] sm:$0xff]
    %v1298 = vld [vmem:[#allocation5 + $0x28] sm:$0xff]
    %v1299 = vld [vmem:[#allocation5 + $0x30] sm:$0xff]
    %v1300 = vld [vmem:[#allocation5 + $0x38] sm:$0xff]
    %v1301 = vld [vmem:[#allocation5 + $0x40] sm:$0xff]
    %v1302 = vld [vmem:[#allocation5 + $0x48] sm:$0xff]
    %v1303 = vld [vmem:[#allocation5 + $0x50] sm:$0xff]
    %v1304 = vld [vmem:[#allocation5 + $0x58] sm:$0xff]
    %v1305 = vld [vmem:[#allocation5 + $0x60] sm:$0xff]
    %v1306 = vld [vmem:[#allocation5 + $0x68] sm:$0xff]
    %v1307 = vld [vmem:[#allocation5 + $0x70] sm:$0xff]
    %v1308 = vld [vmem:[#allocation5 + $0x78] sm:$0xff]
    %v1309 = vld [vmem:[#allocation5 + $0x80] sm:$0xff]
    %v1310 = vld [vmem:[#allocation5 + $0x88] sm:$0xff]
    %v1311 = vld [vmem:[#allocation5 + $0x90] sm:$0xff]
    %v1312 = vld [vmem:[#allocation5 + $0x98] sm:$0xff]
    %v1313 = vld [vmem:[#allocation5 + $0xa0] sm:$0xff]
    %v1314 = vld [vmem:[#allocation5 + $0xa8] sm:$0xff]
    %v1315 = vld [vmem:[#allocation5 + $0xb0] sm:$0xff]
    %v1316 = vld [vmem:[#allocation5 + $0xb8] sm:$0xff]
    %v1317 = vld [vmem:[#allocation5 + $0xc0] sm:$0xff]
    %v1318 = vld [vmem:[#allocation5 + $0xc8] sm:$0xff]
    %v1319 = vld [vmem:[#allocation5 + $0xd0] sm:$0xff]
    %v1320 = vld [vmem:[#allocation5 + $0xd8] sm:$0xff]
    %v1321 = vld [vmem:[#allocation5 + $0xe0] sm:$0xff]
    %v1322 = vld [vmem:[#allocation5 + $0xe8] sm:$0xff]
    %v1323 = vld [vmem:[#allocation5 + $0xf0] sm:$0xff]
    %v1324 = vld [vmem:[#allocation5 + $0xf8] sm:$0xff]
    %v1357 = vunpack.c.l.b16 %v1293
    %v1358 = vunpack.c.h.b16 %v1293
    %v1359 = vunpack.c.l.b16 %v1294
    %v1360 = vunpack.c.h.b16 %v1294
    %v1361 = vunpack.c.l.b16 %v1295
    %v1362 = vunpack.c.h.b16 %v1295
    %v1363 = vunpack.c.l.b16 %v1296
    %v1364 = vunpack.c.h.b16 %v1296
    %v1365 = vunpack.c.l.b16 %v1297
    %v1366 = vunpack.c.h.b16 %v1297
    %v1367 = vunpack.c.l.b16 %v1298
    %v1368 = vunpack.c.h.b16 %v1298
    %v1369 = vunpack.c.l.b16 %v1299
    %v1370 = vunpack.c.h.b16 %v1299
    %v1371 = vunpack.c.l.b16 %v1300
    %v1372 = vunpack.c.h.b16 %v1300
    %v1373 = vunpack.c.l.b16 %v1301
    %v1374 = vunpack.c.h.b16 %v1301
    %v1375 = vunpack.c.l.b16 %v1302
    %v1376 = vunpack.c.h.b16 %v1302
    %v1377 = vunpack.c.l.b16 %v1303
    %v1378 = vunpack.c.h.b16 %v1303
    %v1379 = vunpack.c.l.b16 %v1304
    %v1380 = vunpack.c.h.b16 %v1304
    %v1381 = vunpack.c.l.b16 %v1305
    %v1382 = vunpack.c.h.b16 %v1305
    %v1383 = vunpack.c.l.b16 %v1306
    %v1384 = vunpack.c.h.b16 %v1306
    %v1385 = vunpack.c.l.b16 %v1307
    %v1386 = vunpack.c.h.b16 %v1307
    %v1387 = vunpack.c.l.b16 %v1308
    %v1388 = vunpack.c.h.b16 %v1308
    %v1389 = vunpack.c.l.b16 %v1309
    %v1390 = vunpack.c.h.b16 %v1309
    %v1391 = vunpack.c.l.b16 %v1310
    %v1392 = vunpack.c.h.b16 %v1310
    %v1393 = vunpack.c.l.b16 %v1311
    %v1394 = vunpack.c.h.b16 %v1311
    %v1395 = vunpack.c.l.b16 %v1312
    %v1396 = vunpack.c.h.b16 %v1312
    %v1397 = vunpack.c.l.b16 %v1313
    %v1398 = vunpack.c.h.b16 %v1313
    %v1399 = vunpack.c.l.b16 %v1314
    %v1400 = vunpack.c.h.b16 %v1314
    %v1401 = vunpack.c.l.b16 %v1315
    %v1402 = vunpack.c.h.b16 %v1315
    %v1403 = vunpack.c.l.b16 %v1316
    %v1404 = vunpack.c.h.b16 %v1316
    %v1405 = vunpack.c.l.b16 %v1317
    %v1406 = vunpack.c.h.b16 %v1317
    %v1407 = vunpack.c.l.b16 %v1318
    %v1408 = vunpack.c.h.b16 %v1318
    %v1409 = vunpack.c.l.b16 %v1319
    %v1410 = vunpack.c.h.b16 %v1319
    %v1411 = vunpack.c.l.b16 %v1320
    %v1412 = vunpack.c.h.b16 %v1320
    %v1413 = vunpack.c.l.b16 %v1321
    %v1414 = vunpack.c.h.b16 %v1321
    %v1415 = vunpack.c.l.b16 %v1322
    %v1416 = vunpack.c.h.b16 %v1322
    %v1417 = vunpack.c.l.b16 %v1323
    %v1418 = vunpack.c.h.b16 %v1323
    %v1419 = vunpack.c.l.b16 %v1324
    %v1420 = vunpack.c.h.b16 %v1324
    %v1421 = vpack.c.b16 %v1361, %v1357
    %v1422 = vpack.c.b16 %v1362, %v1358
    %v1423 = vpack.c.b16 %v1363, %v1359
    %v1424 = vpack.c.b16 %v1364, %v1360
    %v1425 = vpack.c.b16 %v1369, %v1365
    %v1426 = vpack.c.b16 %v1370, %v1366
    %v1427 = vpack.c.b16 %v1371, %v1367
    %v1428 = vpack.c.b16 %v1372, %v1368
    %v1429 = vpack.c.b16 %v1377, %v1373
    %v1430 = vpack.c.b16 %v1378, %v1374
    %v1431 = vpack.c.b16 %v1379, %v1375
    %v1432 = vpack.c.b16 %v1380, %v1376
    %v1433 = vpack.c.b16 %v1385, %v1381
    %v1434 = vpack.c.b16 %v1386, %v1382
    %v1435 = vpack.c.b16 %v1387, %v1383
    %v1436 = vpack.c.b16 %v1388, %v1384
    %v1437 = vpack.c.b16 %v1393, %v1389
    %v1438 = vpack.c.b16 %v1394, %v1390
    %v1439 = vpack.c.b16 %v1395, %v1391
    %v1440 = vpack.c.b16 %v1396, %v1392
    %v1441 = vpack.c.b16 %v1401, %v1397
    %v1442 = vpack.c.b16 %v1402, %v1398
    %v1443 = vpack.c.b16 %v1403, %v1399
    %v1444 = vpack.c.b16 %v1404, %v1400
    %v1445 = vpack.c.b16 %v1409, %v1405
    %v1446 = vpack.c.b16 %v1410, %v1406
    %v1447 = vpack.c.b16 %v1411, %v1407
    %v1448 = vpack.c.b16 %v1412, %v1408
    %v1449 = vpack.c.b16 %v1417, %v1413
    %v1450 = vpack.c.b16 %v1418, %v1414
    %v1451 = vpack.c.b16 %v1419, %v1415
    %v1452 = vpack.c.b16 %v1420, %v1416
    %1485 = vmatprep.subr.bf16.mxu0 %v1450
    %1486 = vmatpush1.bf16.msra.mxu0 %v1449
    %1487 = vmatprep.subr.bf16.mxu0 %v1446
    %1488 = vmatpush1.bf16.msra.mxu0 %v1445
    %1489 = vmatprep.subr.bf16.mxu0 %v1442
    %1490 = vmatpush1.bf16.msra.mxu0 %v1441
    %1491 = vmatprep.subr.bf16.mxu0 %v1438
    %1492 = vmatpush1.bf16.msra.mxu0 %v1437
    %1493 = vmatprep.subr.bf16.mxu0 %v1434
    %1494 = vmatpush1.bf16.msra.mxu0 %v1433
    %1495 = vmatprep.subr.bf16.mxu0 %v1430
    %1496 = vmatpush1.bf16.msra.mxu0 %v1429
    %1497 = vmatprep.subr.bf16.mxu0 %v1426
    %1498 = vmatpush1.bf16.msra.mxu0 %v1425
    %1499 = vmatprep.subr.bf16.mxu0 %v1422
    %1500 = vmatpush1.bf16.msra.mxu0 %v1421
    %1501 = vmatprep.subr.bf16.mxu0 0
    %1502 = vmatpush2.bf16.msra.mxu0 0
    %1503 = vmatprep.subr.bf16.mxu0 0
    %1504 = vmatpush2.bf16.msra.mxu0 0
    %1505 = vmatprep.subr.bf16.mxu0 0
    %1506 = vmatpush2.bf16.msra.mxu0 0
    %1507 = vmatprep.subr.bf16.mxu0 0
    %1508 = vmatpush2.bf16.msra.mxu0 0
    %1509 = vmatprep.subr.bf16.mxu0 0
    %1510 = vmatpush2.bf16.msra.mxu0 0
    %1511 = vmatprep.subr.bf16.mxu0 0
    %1512 = vmatpush2.bf16.msra.mxu0 0
    %1513 = vmatprep.subr.bf16.mxu0 0
    %1514 = vmatpush2.bf16.msra.mxu0 0
    %1515 = vmatprep.subr.bf16.mxu0 0
    %1516 = vmatpush2.bf16.msra.mxu0 0
    %1517 = vmatprep.mubr.bf16.mxu0 0
    %1518 = vmatmul.mubr.bf16.gmra.mxu0 %v1287
    %v1519 = vpop.f32.mrf.mxu0
    %v1520 = vadd.f32 0.0, %v1519
    %v1521 = vpop.f32.mrf.mxu0
    %v1522 = vadd.f32 0.0, %v1521
    %v1523 = vpop.f32.mrf.mxu0
    %v1524 = vpop.f32.mrf.mxu0
    %1525 = vdwg.mxu0
    %1526 = vmatprep.subr.bf16.mxu0 %v1452
    %1527 = vmatpush1.bf16.msra.mxu0 %v1451
    %1528 = vmatprep.subr.bf16.mxu0 %v1448
    %1529 = vmatpush1.bf16.msra.mxu0 %v1447
    %1530 = vmatprep.subr.bf16.mxu0 %v1444
    %1531 = vmatpush1.bf16.msra.mxu0 %v1443
    %1532 = vmatprep.subr.bf16.mxu0 %v1440
    %1533 = vmatpush1.bf16.msra.mxu0 %v1439
    %1534 = vmatprep.subr.bf16.mxu0 %v1436
    %1535 = vmatpush1.bf16.msra.mxu0 %v1435
    %1536 = vmatprep.subr.bf16.mxu0 %v1432
    %1537 = vmatpush1.bf16.msra.mxu0 %v1431
    %1538 = vmatprep.subr.bf16.mxu0 %v1428
    %1539 = vmatpush1.bf16.msra.mxu0 %v1427
    %1540 = vmatprep.subr.bf16.mxu0 %v1424
    %1541 = vmatpush1.bf16.msra.mxu0 %v1423
    %1542 = vmatprep.subr.bf16.mxu0 0
    %1543 = vmatpush2.bf16.msra.mxu0 0
    %1544 = vmatprep.subr.bf16.mxu0 0
    %1545 = vmatpush2.bf16.msra.mxu0 0
    %1546 = vmatprep.subr.bf16.mxu0 0
    %1547 = vmatpush2.bf16.msra.mxu0 0
    %1548 = vmatprep.subr.bf16.mxu0 0
    %1549 = vmatpush2.bf16.msra.mxu0 0
    %1550 = vmatprep.subr.bf16.mxu0 0
    %1551 = vmatpush2.bf16.msra.mxu0 0
    %1552 = vmatprep.subr.bf16.mxu0 0
    %1553 = vmatpush2.bf16.msra.mxu0 0
    %1554 = vmatprep.subr.bf16.mxu0 0
    %1555 = vmatpush2.bf16.msra.mxu0 0
    %1556 = vmatprep.subr.bf16.mxu0 0
    %1557 = vmatpush2.bf16.msra.mxu0 0
    %1558 = vmatprep.mubr.bf16.mxu0 0
    %1559 = vmatmul.mubr.bf16.gmra.mxu0 %v1287
    %v1560 = vpop.f32.mrf.mxu0
    %v1561 = vadd.f32 0.0, %v1560
    %v1562 = vpop.f32.mrf.mxu0
    %v1563 = vadd.f32 0.0, %v1562
    %v1564 = vpop.f32.mrf.mxu0
    %v1565 = vpop.f32.mrf.mxu0
    %1566 = vdwg.mxu0
    %v1567 = vadd.f32 %v1289, %v1520
    %v1568 = vadd.f32 %v1290, %v1522
    %v1569 = vadd.f32 %v1291, %v1561
    %v1570 = vadd.f32 %v1292, %v1563
    %v1571 = vxor.u32 %v1567, 2147483648
    %v1572 = vmul.f32 %v1571, 1.442695
    %v1573 = vpow.pop %v1572
    %v1574 = vadd.f32 %v1573, 1.0
    %v1575 = vrcp.pop %v1574
    %v1576 = vmul.f32 1.0, %v1575
    %v1577 = vxor.u32 %v1568, 2147483648
    %v1578 = vmul.f32 %v1577, 1.442695
    %v1579 = vpow.pop %v1578
    %v1580 = vadd.f32 %v1579, 1.0
    %v1581 = vrcp.pop %v1580
    %v1582 = vmul.f32 1.0, %v1581
    %v1583 = vtanh.pop %v1569
    %v1584 = vxor.u32 %v1570, 2147483648
    %v1585 = vmul.f32 %v1584, 1.442695
    %v1586 = vpow.pop %v1585
    %v1587 = vadd.f32 %v1586, 1.0
    %v1588 = vrcp.pop %v1587
    %v1589 = vmul.f32 1.0, %v1588
    %v1590 = vmul.f32 %v1582, %v1284
    %v1591 = vmul.f32 %v1576, %v1583
    %v1592 = vadd.f32 %v1590, %v1591
    %v1593 = vtanh.pop %v1592
    %v1594 = vmul.f32 %v1589, %v1593
    %v1595 = vpack.c.bf16 %v1594, %v1594
    %1596 = vst [vmem:[#allocation2 + $0xc] sm:$0xf] %v1595
    %v1597 = vld [vmem:[#allocation3 + $0x80] sm:$0xff]
    %v1598 = vld [vmem:[#allocation3 + $0x88] sm:$0xff]
    %v1599 = vld [vmem:[#allocation3 + $0x90] sm:$0xff]
    %v1600 = vld [vmem:[#allocation3 + $0x98] sm:$0xff]
    %v1601 = vld [vmem:[#allocation5] sm:$0xff]
    %v1602 = vld [vmem:[#allocation5 + $0x8] sm:$0xff]
    %v1603 = vld [vmem:[#allocation5 + $0x10] sm:$0xff]
    %v1604 = vld [vmem:[#allocation5 + $0x18] sm:$0xff]
    %v1605 = vld [vmem:[#allocation5 + $0x20] sm:$0xff]
    %v1606 = vld [vmem:[#allocation5 + $0x28] sm:$0xff]
    %v1607 = vld [vmem:[#allocation5 + $0x30] sm:$0xff]
    %v1608 = vld [vmem:[#allocation5 + $0x38] sm:$0xff]
    %v1609 = vld [vmem:[#allocation5 + $0x40] sm:$0xff]
    %v1610 = vld [vmem:[#allocation5 + $0x48] sm:$0xff]
    %v1611 = vld [vmem:[#allocation5 + $0x50] sm:$0xff]
    %v1612 = vld [vmem:[#allocation5 + $0x58] sm:$0xff]
    %v1613 = vld [vmem:[#allocation5 + $0x60] sm:$0xff]
    %v1614 = vld [vmem:[#allocation5 + $0x68] sm:$0xff]
    %v1615 = vld [vmem:[#allocation5 + $0x70] sm:$0xff]
    %v1616 = vld [vmem:[#allocation5 + $0x78] sm:$0xff]
    %v1617 = vld [vmem:[#allocation5 + $0x80] sm:$0xff]
    %v1618 = vld [vmem:[#allocation5 + $0x88] sm:$0xff]
    %v1619 = vld [vmem:[#allocation5 + $0x90] sm:$0xff]
    %v1620 = vld [vmem:[#allocation5 + $0x98] sm:$0xff]
    %v1621 = vld [vmem:[#allocation5 + $0xa0] sm:$0xff]
    %v1622 = vld [vmem:[#allocation5 + $0xa8] sm:$0xff]
    %v1623 = vld [vmem:[#allocation5 + $0xb0] sm:$0xff]
    %v1624 = vld [vmem:[#allocation5 + $0xb8] sm:$0xff]
    %v1625 = vld [vmem:[#allocation5 + $0xc0] sm:$0xff]
    %v1626 = vld [vmem:[#allocation5 + $0xc8] sm:$0xff]
    %v1627 = vld [vmem:[#allocation5 + $0xd0] sm:$0xff]
    %v1628 = vld [vmem:[#allocation5 + $0xd8] sm:$0xff]
    %v1629 = vld [vmem:[#allocation5 + $0xe0] sm:$0xff]
    %v1630 = vld [vmem:[#allocation5 + $0xe8] sm:$0xff]
    %v1631 = vld [vmem:[#allocation5 + $0xf0] sm:$0xff]
    %v1632 = vld [vmem:[#allocation5 + $0xf8] sm:$0xff]
    %v1665 = vunpack.c.l.b16 %v1601
    %v1666 = vunpack.c.h.b16 %v1601
    %v1667 = vunpack.c.l.b16 %v1602
    %v1668 = vunpack.c.h.b16 %v1602
    %v1669 = vunpack.c.l.b16 %v1603
    %v1670 = vunpack.c.h.b16 %v1603
    %v1671 = vunpack.c.l.b16 %v1604
    %v1672 = vunpack.c.h.b16 %v1604
    %v1673 = vunpack.c.l.b16 %v1605
    %v1674 = vunpack.c.h.b16 %v1605
    %v1675 = vunpack.c.l.b16 %v1606
    %v1676 = vunpack.c.h.b16 %v1606
    %v1677 = vunpack.c.l.b16 %v1607
    %v1678 = vunpack.c.h.b16 %v1607
    %v1679 = vunpack.c.l.b16 %v1608
    %v1680 = vunpack.c.h.b16 %v1608
    %v1681 = vunpack.c.l.b16 %v1609
    %v1682 = vunpack.c.h.b16 %v1609
    %v1683 = vunpack.c.l.b16 %v1610
    %v1684 = vunpack.c.h.b16 %v1610
    %v1685 = vunpack.c.l.b16 %v1611
    %v1686 = vunpack.c.h.b16 %v1611
    %v1687 = vunpack.c.l.b16 %v1612
    %v1688 = vunpack.c.h.b16 %v1612
    %v1689 = vunpack.c.l.b16 %v1613
    %v1690 = vunpack.c.h.b16 %v1613
    %v1691 = vunpack.c.l.b16 %v1614
    %v1692 = vunpack.c.h.b16 %v1614
    %v1693 = vunpack.c.l.b16 %v1615
    %v1694 = vunpack.c.h.b16 %v1615
    %v1695 = vunpack.c.l.b16 %v1616
    %v1696 = vunpack.c.h.b16 %v1616
    %v1697 = vunpack.c.l.b16 %v1617
    %v1698 = vunpack.c.h.b16 %v1617
    %v1699 = vunpack.c.l.b16 %v1618
    %v1700 = vunpack.c.h.b16 %v1618
    %v1701 = vunpack.c.l.b16 %v1619
    %v1702 = vunpack.c.h.b16 %v1619
    %v1703 = vunpack.c.l.b16 %v1620
    %v1704 = vunpack.c.h.b16 %v1620
    %v1705 = vunpack.c.l.b16 %v1621
    %v1706 = vunpack.c.h.b16 %v1621
    %v1707 = vunpack.c.l.b16 %v1622
    %v1708 = vunpack.c.h.b16 %v1622
    %v1709 = vunpack.c.l.b16 %v1623
    %v1710 = vunpack.c.h.b16 %v1623
    %v1711 = vunpack.c.l.b16 %v1624
    %v1712 = vunpack.c.h.b16 %v1624
    %v1713 = vunpack.c.l.b16 %v1625
    %v1714 = vunpack.c.h.b16 %v1625
    %v1715 = vunpack.c.l.b16 %v1626
    %v1716 = vunpack.c.h.b16 %v1626
    %v1717 = vunpack.c.l.b16 %v1627
    %v1718 = vunpack.c.h.b16 %v1627
    %v1719 = vunpack.c.l.b16 %v1628
    %v1720 = vunpack.c.h.b16 %v1628
    %v1721 = vunpack.c.l.b16 %v1629
    %v1722 = vunpack.c.h.b16 %v1629
    %v1723 = vunpack.c.l.b16 %v1630
    %v1724 = vunpack.c.h.b16 %v1630
    %v1725 = vunpack.c.l.b16 %v1631
    %v1726 = vunpack.c.h.b16 %v1631
    %v1727 = vunpack.c.l.b16 %v1632
    %v1728 = vunpack.c.h.b16 %v1632
    %v1729 = vpack.c.b16 %v1669, %v1665
    %v1730 = vpack.c.b16 %v1670, %v1666
    %v1731 = vpack.c.b16 %v1671, %v1667
    %v1732 = vpack.c.b16 %v1672, %v1668
    %v1733 = vpack.c.b16 %v1677, %v1673
    %v1734 = vpack.c.b16 %v1678, %v1674
    %v1735 = vpack.c.b16 %v1679, %v1675
    %v1736 = vpack.c.b16 %v1680, %v1676
    %v1737 = vpack.c.b16 %v1685, %v1681
    %v1738 = vpack.c.b16 %v1686, %v1682
    %v1739 = vpack.c.b16 %v1687, %v1683
    %v1740 = vpack.c.b16 %v1688, %v1684
    %v1741 = vpack.c.b16 %v1693, %v1689
    %v1742 = vpack.c.b16 %v1694, %v1690
    %v1743 = vpack.c.b16 %v1695, %v1691
    %v1744 = vpack.c.b16 %v1696, %v1692
    %v1745 = vpack.c.b16 %v1701, %v1697
    %v1746 = vpack.c.b16 %v1702, %v1698
    %v1747 = vpack.c.b16 %v1703, %v1699
    %v1748 = vpack.c.b16 %v1704, %v1700
    %v1749 = vpack.c.b16 %v1709, %v1705
    %v1750 = vpack.c.b16 %v1710, %v1706
    %v1751 = vpack.c.b16 %v1711, %v1707
    %v1752 = vpack.c.b16 %v1712, %v1708
    %v1753 = vpack.c.b16 %v1717, %v1713
    %v1754 = vpack.c.b16 %v1718, %v1714
    %v1755 = vpack.c.b16 %v1719, %v1715
    %v1756 = vpack.c.b16 %v1720, %v1716
    %v1757 = vpack.c.b16 %v1725, %v1721
    %v1758 = vpack.c.b16 %v1726, %v1722
    %v1759 = vpack.c.b16 %v1727, %v1723
    %v1760 = vpack.c.b16 %v1728, %v1724
    %1793 = vmatprep.subr.bf16.mxu0 %v1758
    %1794 = vmatpush1.bf16.msra.mxu0 %v1757
    %1795 = vmatprep.subr.bf16.mxu0 %v1754
    %1796 = vmatpush1.bf16.msra.mxu0 %v1753
    %1797 = vmatprep.subr.bf16.mxu0 %v1750
    %1798 = vmatpush1.bf16.msra.mxu0 %v1749
    %1799 = vmatprep.subr.bf16.mxu0 %v1746
    %1800 = vmatpush1.bf16.msra.mxu0 %v1745
    %1801 = vmatprep.subr.bf16.mxu0 %v1742
    %1802 = vmatpush1.bf16.msra.mxu0 %v1741
    %1803 = vmatprep.subr.bf16.mxu0 %v1738
    %1804 = vmatpush1.bf16.msra.mxu0 %v1737
    %1805 = vmatprep.subr.bf16.mxu0 %v1734
    %1806 = vmatpush1.bf16.msra.mxu0 %v1733
    %1807 = vmatprep.subr.bf16.mxu0 %v1730
    %1808 = vmatpush1.bf16.msra.mxu0 %v1729
    %1809 = vmatprep.subr.bf16.mxu0 0
    %1810 = vmatpush2.bf16.msra.mxu0 0
    %1811 = vmatprep.subr.bf16.mxu0 0
    %1812 = vmatpush2.bf16.msra.mxu0 0
    %1813 = vmatprep.subr.bf16.mxu0 0
    %1814 = vmatpush2.bf16.msra.mxu0 0
    %1815 = vmatprep.subr.bf16.mxu0 0
    %1816 = vmatpush2.bf16.msra.mxu0 0
    %1817 = vmatprep.subr.bf16.mxu0 0
    %1818 = vmatpush2.bf16.msra.mxu0 0
    %1819 = vmatprep.subr.bf16.mxu0 0
    %1820 = vmatpush2.bf16.msra.mxu0 0
    %1821 = vmatprep.subr.bf16.mxu0 0
    %1822 = vmatpush2.bf16.msra.mxu0 0
    %1823 = vmatprep.subr.bf16.mxu0 0
    %1824 = vmatpush2.bf16.msra.mxu0 0
    %1825 = vmatprep.mubr.bf16.mxu0 0
    %1826 = vmatmul.mubr.bf16.gmra.mxu0 %v1595
    %v1827 = vpop.f32.mrf.mxu0
    %v1828 = vadd.f32 0.0, %v1827
    %v1829 = vpop.f32.mrf.mxu0
    %v1830 = vadd.f32 0.0, %v1829
    %v1831 = vpop.f32.mrf.mxu0
    %v1832 = vpop.f32.mrf.mxu0
    %1833 = vdwg.mxu0
    %1834 = vmatprep.subr.bf16.mxu0 %v1760
    %1835 = vmatpush1.bf16.msra.mxu0 %v1759
    %1836 = vmatprep.subr.bf16.mxu0 %v1756
    %1837 = vmatpush1.bf16.msra.mxu0 %v1755
    %1838 = vmatprep.subr.bf16.mxu0 %v1752
    %1839 = vmatpush1.bf16.msra.mxu0 %v1751
    %1840 = vmatprep.subr.bf16.mxu0 %v1748
    %1841 = vmatpush1.bf16.msra.mxu0 %v1747
    %1842 = vmatprep.subr.bf16.mxu0 %v1744
    %1843 = vmatpush1.bf16.msra.mxu0 %v1743
    %1844 = vmatprep.subr.bf16.mxu0 %v1740
    %1845 = vmatpush1.bf16.msra.mxu0 %v1739
    %1846 = vmatprep.subr.bf16.mxu0 %v1736
    %1847 = vmatpush1.bf16.msra.mxu0 %v1735
    %1848 = vmatprep.subr.bf16.mxu0 %v1732
    %1849 = vmatpush1.bf16.msra.mxu0 %v1731
    %1850 = vmatprep.subr.bf16.mxu0 0
    %1851 = vmatpush2.bf16.msra.mxu0 0
    %1852 = vmatprep.subr.bf16.mxu0 0
    %1853 = vmatpush2.bf16.msra.mxu0 0
    %1854 = vmatprep.subr.bf16.mxu0 0
    %1855 = vmatpush2.bf16.msra.mxu0 0
    %1856 = vmatprep.subr.bf16.mxu0 0
    %1857 = vmatpush2.bf16.msra.mxu0 0
    %1858 = vmatprep.subr.bf16.mxu0 0
    %1859 = vmatpush2.bf16.msra.mxu0 0
    %1860 = vmatprep.subr.bf16.mxu0 0
    %1861 = vmatpush2.bf16.msra.mxu0 0
    %1862 = vmatprep.subr.bf16.mxu0 0
    %1863 = vmatpush2.bf16.msra.mxu0 0
    %1864 = vmatprep.subr.bf16.mxu0 0
    %1865 = vmatpush2.bf16.msra.mxu0 0
    %1866 = vmatprep.mubr.bf16.mxu0 0
    %1867 = vmatmul.mubr.bf16.gmra.mxu0 %v1595
    %v1868 = vpop.f32.mrf.mxu0
    %v1869 = vadd.f32 0.0, %v1868
    %v1870 = vpop.f32.mrf.mxu0
    %v1871 = vadd.f32 0.0, %v1870
    %v1872 = vpop.f32.mrf.mxu0
    %v1873 = vpop.f32.mrf.mxu0
    %1874 = vdwg.mxu0
    %v1875 = vadd.f32 %v1597, %v1828
    %v1876 = vadd.f32 %v1598, %v1830
    %v1877 = vadd.f32 %v1599, %v1869
    %v1878 = vadd.f32 %v1600, %v1871
    %v1879 = vxor.u32 %v1875, 2147483648
    %v1880 = vmul.f32 %v1879, 1.442695
    %v1881 = vpow.pop %v1880
    %v1882 = vadd.f32 %v1881, 1.0
    %v1883 = vrcp.pop %v1882
    %v1884 = vmul.f32 1.0, %v1883
    %v1885 = vxor.u32 %v1876, 2147483648
    %v1886 = vmul.f32 %v1885, 1.442695
    %v1887 = vpow.pop %v1886
    %v1888 = vadd.f32 %v1887, 1.0
    %v1889 = vrcp.pop %v1888
    %v1890 = vmul.f32 1.0, %v1889
    %v1891 = vtanh.pop %v1877
    %v1892 = vxor.u32 %v1878, 2147483648
    %v1893 = vmul.f32 %v1892, 1.442695
    %v1894 = vpow.pop %v1893
    %v1895 = vadd.f32 %v1894, 1.0
    %v1896 = vrcp.pop %v1895
    %v1897 = vmul.f32 1.0, %v1896
    %v1898 = vmul.f32 %v1890, %v1592
    %v1899 = vmul.f32 %v1884, %v1891
    %v1900 = vadd.f32 %v1898, %v1899
    %v1901 = vtanh.pop %v1900
    %v1902 = vmul.f32 %v1897, %v1901
    %v1903 = vpack.c.bf16 %v1902, %v1902
    %1904 = vst [vmem:[#allocation2 + $0x10] sm:$0xf] %v1903
    %v1905 = vld [vmem:[#allocation3 + $0xa0] sm:$0xff]
    %v1906 = vld [vmem:[#allocation3 + $0xa8] sm:$0xff]
    %v1907 = vld [vmem:[#allocation3 + $0xb0] sm:$0xff]
    %v1908 = vld [vmem:[#allocation3 + $0xb8] sm:$0xff]
    %v1909 = vld [vmem:[#allocation5] sm:$0xff]
    %v1910 = vld [vmem:[#allocation5 + $0x8] sm:$0xff]
    %v1911 = vld [vmem:[#allocation5 + $0x10] sm:$0xff]
    %v1912 = vld [vmem:[#allocation5 + $0x18] sm:$0xff]
    %v1913 = vld [vmem:[#allocation5 + $0x20] sm:$0xff]
    %v1914 = vld [vmem:[#allocation5 + $0x28] sm:$0xff]
    %v1915 = vld [vmem:[#allocation5 + $0x30] sm:$0xff]
    %v1916 = vld [vmem:[#allocation5 + $0x38] sm:$0xff]
    %v1917 = vld [vmem:[#allocation5 + $0x40] sm:$0xff]
    %v1918 = vld [vmem:[#allocation5 + $0x48] sm:$0xff]
    %v1919 = vld [vmem:[#allocation5 + $0x50] sm:$0xff]
    %v1920 = vld [vmem:[#allocation5 + $0x58] sm:$0xff]
    %v1921 = vld [vmem:[#allocation5 + $0x60] sm:$0xff]
    %v1922 = vld [vmem:[#allocation5 + $0x68] sm:$0xff]
    %v1923 = vld [vmem:[#allocation5 + $0x70] sm:$0xff]
    %v1924 = vld [vmem:[#allocation5 + $0x78] sm:$0xff]
    %v1925 = vld [vmem:[#allocation5 + $0x80] sm:$0xff]
    %v1926 = vld [vmem:[#allocation5 + $0x88] sm:$0xff]
    %v1927 = vld [vmem:[#allocation5 + $0x90] sm:$0xff]
    %v1928 = vld [vmem:[#allocation5 + $0x98] sm:$0xff]
    %v1929 = vld [vmem:[#allocation5 + $0xa0] sm:$0xff]
    %v1930 = vld [vmem:[#allocation5 + $0xa8] sm:$0xff]
    %v1931 = vld [vmem:[#allocation5 + $0xb0] sm:$0xff]
    %v1932 = vld [vmem:[#allocation5 + $0xb8] sm:$0xff]
    %v1933 = vld [vmem:[#allocation5 + $0xc0] sm:$0xff]
    %v1934 = vld [vmem:[#allocation5 + $0xc8] sm:$0xff]
    %v1935 = vld [vmem:[#allocation5 + $0xd0] sm:$0xff]
    %v1936 = vld [vmem:[#allocation5 + $0xd8] sm:$0xff]
    %v1937 = vld [vmem:[#allocation5 + $0xe0] sm:$0xff]
    %v1938 = vld [vmem:[#allocation5 + $0xe8] sm:$0xff]
    %v1939 = vld [vmem:[#allocation5 + $0xf0] sm:$0xff]
    %v1940 = vld [vmem:[#allocation5 + $0xf8] sm:$0xff]
    %v1973 = vunpack.c.l.b16 %v1909
    %v1974 = vunpack.c.h.b16 %v1909
    %v1975 = vunpack.c.l.b16 %v1910
    %v1976 = vunpack.c.h.b16 %v1910
    %v1977 = vunpack.c.l.b16 %v1911
    %v1978 = vunpack.c.h.b16 %v1911
    %v1979 = vunpack.c.l.b16 %v1912
    %v1980 = vunpack.c.h.b16 %v1912
    %v1981 = vunpack.c.l.b16 %v1913
    %v1982 = vunpack.c.h.b16 %v1913
    %v1983 = vunpack.c.l.b16 %v1914
    %v1984 = vunpack.c.h.b16 %v1914
    %v1985 = vunpack.c.l.b16 %v1915
    %v1986 = vunpack.c.h.b16 %v1915
    %v1987 = vunpack.c.l.b16 %v1916
    %v1988 = vunpack.c.h.b16 %v1916
    %v1989 = vunpack.c.l.b16 %v1917
    %v1990 = vunpack.c.h.b16 %v1917
    %v1991 = vunpack.c.l.b16 %v1918
    %v1992 = vunpack.c.h.b16 %v1918
    %v1993 = vunpack.c.l.b16 %v1919
    %v1994 = vunpack.c.h.b16 %v1919
    %v1995 = vunpack.c.l.b16 %v1920
    %v1996 = vunpack.c.h.b16 %v1920
    %v1997 = vunpack.c.l.b16 %v1921
    %v1998 = vunpack.c.h.b16 %v1921
    %v1999 = vunpack.c.l.b16 %v1922
    %v2000 = vunpack.c.h.b16 %v1922
    %v2001 = vunpack.c.l.b16 %v1923
    %v2002 = vunpack.c.h.b16 %v1923
    %v2003 = vunpack.c.l.b16 %v1924
    %v2004 = vunpack.c.h.b16 %v1924
    %v2005 = vunpack.c.l.b16 %v1925
    %v2006 = vunpack.c.h.b16 %v1925
    %v2007 = vunpack.c.l.b16 %v1926
    %v2008 = vunpack.c.h.b16 %v1926
    %v2009 = vunpack.c.l.b16 %v1927
    %v2010 = vunpack.c.h.b16 %v1927
    %v2011 = vunpack.c.l.b16 %v1928
    %v2012 = vunpack.c.h.b16 %v1928
    %v2013 = vunpack.c.l.b16 %v1929
    %v2014 = vunpack.c.h.b16 %v1929
    %v2015 = vunpack.c.l.b16 %v1930
    %v2016 = vunpack.c.h.b16 %v1930
    %v2017 = vunpack.c.l.b16 %v1931
    %v2018 = vunpack.c.h.b16 %v1931
    %v2019 = vunpack.c.l.b16 %v1932
    %v2020 = vunpack.c.h.b16 %v1932
    %v2021 = vunpack.c.l.b16 %v1933
    %v2022 = vunpack.c.h.b16 %v1933
    %v2023 = vunpack.c.l.b16 %v1934
    %v2024 = vunpack.c.h.b16 %v1934
    %v2025 = vunpack.c.l.b16 %v1935
    %v2026 = vunpack.c.h.b16 %v1935
    %v2027 = vunpack.c.l.b16 %v1936
    %v2028 = vunpack.c.h.b16 %v1936
    %v2029 = vunpack.c.l.b16 %v1937
    %v2030 = vunpack.c.h.b16 %v1937
    %v2031 = vunpack.c.l.b16 %v1938
    %v2032 = vunpack.c.h.b16 %v1938
    %v2033 = vunpack.c.l.b16 %v1939
    %v2034 = vunpack.c.h.b16 %v1939
    %v2035 = vunpack.c.l.b16 %v1940
    %v2036 = vunpack.c.h.b16 %v1940
    %v2037 = vpack.c.b16 %v1977, %v1973
    %v2038 = vpack.c.b16 %v1978, %v1974
    %v2039 = vpack.c.b16 %v1979, %v1975
    %v2040 = vpack.c.b16 %v1980, %v1976
    %v2041 = vpack.c.b16 %v1985, %v1981
    %v2042 = vpack.c.b16 %v1986, %v1982
    %v2043 = vpack.c.b16 %v1987, %v1983
    %v2044 = vpack.c.b16 %v1988, %v1984
    %v2045 = vpack.c.b16 %v1993, %v1989
    %v2046 = vpack.c.b16 %v1994, %v1990
    %v2047 = vpack.c.b16 %v1995, %v1991
    %v2048 = vpack.c.b16 %v1996, %v1992
    %v2049 = vpack.c.b16 %v2001, %v1997
    %v2050 = vpack.c.b16 %v2002, %v1998
    %v2051 = vpack.c.b16 %v2003, %v1999
    %v2052 = vpack.c.b16 %v2004, %v2000
    %v2053 = vpack.c.b16 %v2009, %v2005
    %v2054 = vpack.c.b16 %v2010, %v2006
    %v2055 = vpack.c.b16 %v2011, %v2007
    %v2056 = vpack.c.b16 %v2012, %v2008
    %v2057 = vpack.c.b16 %v2017, %v2013
    %v2058 = vpack.c.b16 %v2018, %v2014
    %v2059 = vpack.c.b16 %v2019, %v2015
    %v2060 = vpack.c.b16 %v2020, %v2016
    %v2061 = vpack.c.b16 %v2025, %v2021
    %v2062 = vpack.c.b16 %v2026, %v2022
    %v2063 = vpack.c.b16 %v2027, %v2023
    %v2064 = vpack.c.b16 %v2028, %v2024
    %v2065 = vpack.c.b16 %v2033, %v2029
    %v2066 = vpack.c.b16 %v2034, %v2030
    %v2067 = vpack.c.b16 %v2035, %v2031
    %v2068 = vpack.c.b16 %v2036, %v2032
    %2101 = vmatprep.subr.bf16.mxu0 %v2066
    %2102 = vmatpush1.bf16.msra.mxu0 %v2065
    %2103 = vmatprep.subr.bf16.mxu0 %v2062
    %2104 = vmatpush1.bf16.msra.mxu0 %v2061
    %2105 = vmatprep.subr.bf16.mxu0 %v2058
    %2106 = vmatpush1.bf16.msra.mxu0 %v2057
    %2107 = vmatprep.subr.bf16.mxu0 %v2054
    %2108 = vmatpush1.bf16.msra.mxu0 %v2053
    %2109 = vmatprep.subr.bf16.mxu0 %v2050
    %2110 = vmatpush1.bf16.msra.mxu0 %v2049
    %2111 = vmatprep.subr.bf16.mxu0 %v2046
    %2112 = vmatpush1.bf16.msra.mxu0 %v2045
    %2113 = vmatprep.subr.bf16.mxu0 %v2042
    %2114 = vmatpush1.bf16.msra.mxu0 %v2041
    %2115 = vmatprep.subr.bf16.mxu0 %v2038
    %2116 = vmatpush1.bf16.msra.mxu0 %v2037
    %2117 = vmatprep.subr.bf16.mxu0 0
    %2118 = vmatpush2.bf16.msra.mxu0 0
    %2119 = vmatprep.subr.bf16.mxu0 0
    %2120 = vmatpush2.bf16.msra.mxu0 0
    %2121 = vmatprep.subr.bf16.mxu0 0
    %2122 = vmatpush2.bf16.msra.mxu0 0
    %2123 = vmatprep.subr.bf16.mxu0 0
    %2124 = vmatpush2.bf16.msra.mxu0 0
    %2125 = vmatprep.subr.bf16.mxu0 0
    %2126 = vmatpush2.bf16.msra.mxu0 0
    %2127 = vmatprep.subr.bf16.mxu0 0
    %2128 = vmatpush2.bf16.msra.mxu0 0
    %2129 = vmatprep.subr.bf16.mxu0 0
    %2130 = vmatpush2.bf16.msra.mxu0 0
    %2131 = vmatprep.subr.bf16.mxu0 0
    %2132 = vmatpush2.bf16.msra.mxu0 0
    %2133 = vmatprep.mubr.bf16.mxu0 0
    %2134 = vmatmul.mubr.bf16.gmra.mxu0 %v1903
    %v2135 = vpop.f32.mrf.mxu0
    %v2136 = vadd.f32 0.0, %v2135
    %v2137 = vpop.f32.mrf.mxu0
    %v2138 = vadd.f32 0.0, %v2137
    %v2139 = vpop.f32.mrf.mxu0
    %v2140 = vpop.f32.mrf.mxu0
    %2141 = vdwg.mxu0
    %2142 = vmatprep.subr.bf16.mxu0 %v2068
    %2143 = vmatpush1.bf16.msra.mxu0 %v2067
    %2144 = vmatprep.subr.bf16.mxu0 %v2064
    %2145 = vmatpush1.bf16.msra.mxu0 %v2063
    %2146 = vmatprep.subr.bf16.mxu0 %v2060
    %2147 = vmatpush1.bf16.msra.mxu0 %v2059
    %2148 = vmatprep.subr.bf16.mxu0 %v2056
    %2149 = vmatpush1.bf16.msra.mxu0 %v2055
    %2150 = vmatprep.subr.bf16.mxu0 %v2052
    %2151 = vmatpush1.bf16.msra.mxu0 %v2051
    %2152 = vmatprep.subr.bf16.mxu0 %v2048
    %2153 = vmatpush1.bf16.msra.mxu0 %v2047
    %2154 = vmatprep.subr.bf16.mxu0 %v2044
    %2155 = vmatpush1.bf16.msra.mxu0 %v2043
    %2156 = vmatprep.subr.bf16.mxu0 %v2040
    %2157 = vmatpush1.bf16.msra.mxu0 %v2039
    %2158 = vmatprep.subr.bf16.mxu0 0
    %2159 = vmatpush2.bf16.msra.mxu0 0
    %2160 = vmatprep.subr.bf16.mxu0 0
    %2161 = vmatpush2.bf16.msra.mxu0 0
    %2162 = vmatprep.subr.bf16.mxu0 0
    %2163 = vmatpush2.bf16.msra.mxu0 0
    %2164 = vmatprep.subr.bf16.mxu0 0
    %2165 = vmatpush2.bf16.msra.mxu0 0
    %2166 = vmatprep.subr.bf16.mxu0 0
    %2167 = vmatpush2.bf16.msra.mxu0 0
    %2168 = vmatprep.subr.bf16.mxu0 0
    %2169 = vmatpush2.bf16.msra.mxu0 0
    %2170 = vmatprep.subr.bf16.mxu0 0
    %2171 = vmatpush2.bf16.msra.mxu0 0
    %2172 = vmatprep.subr.bf16.mxu0 0
    %2173 = vmatpush2.bf16.msra.mxu0 0
    %2174 = vmatprep.mubr.bf16.mxu0 0
    %2175 = vmatmul.mubr.bf16.gmra.mxu0 %v1903
    %v2176 = vpop.f32.mrf.mxu0
    %v2177 = vadd.f32 0.0, %v2176
    %v2178 = vpop.f32.mrf.mxu0
    %v2179 = vadd.f32 0.0, %v2178
    %v2180 = vpop.f32.mrf.mxu0
    %v2181 = vpop.f32.mrf.mxu0
    %2182 = vdwg.mxu0
    %v2183 = vadd.f32 %v1905, %v2136
    %v2184 = vadd.f32 %v1906, %v2138
    %v2185 = vadd.f32 %v1907, %v2177
    %v2186 = vadd.f32 %v1908, %v2179
    %v2187 = vxor.u32 %v2183, 2147483648
    %v2188 = vmul.f32 %v2187, 1.442695
    %v2189 = vpow.pop %v2188
    %v2190 = vadd.f32 %v2189, 1.0
    %v2191 = vrcp.pop %v2190
    %v2192 = vmul.f32 1.0, %v2191
    %v2193 = vxor.u32 %v2184, 2147483648
    %v2194 = vmul.f32 %v2193, 1.442695
    %v2195 = vpow.pop %v2194
    %v2196 = vadd.f32 %v2195, 1.0
    %v2197 = vrcp.pop %v2196
    %v2198 = vmul.f32 1.0, %v2197
    %v2199 = vtanh.pop %v2185
    %v2200 = vxor.u32 %v2186, 2147483648
    %v2201 = vmul.f32 %v2200, 1.442695
    %v2202 = vpow.pop %v2201
    %v2203 = vadd.f32 %v2202, 1.0
    %v2204 = vrcp.pop %v2203
    %v2205 = vmul.f32 1.0, %v2204
    %v2206 = vmul.f32 %v2198, %v1900
    %v2207 = vmul.f32 %v2192, %v2199
    %v2208 = vadd.f32 %v2206, %v2207
    %v2209 = vtanh.pop %v2208
    %v2210 = vmul.f32 %v2205, %v2209
    %v2211 = vpack.c.bf16 %v2210, %v2210
    %2212 = vst [vmem:[#allocation2 + $0x14] sm:$0xf] %v2211
    %v2213 = vld [vmem:[#allocation3 + $0xc0] sm:$0xff]
    %v2214 = vld [vmem:[#allocation3 + $0xc8] sm:$0xff]
    %v2215 = vld [vmem:[#allocation3 + $0xd0] sm:$0xff]
    %v2216 = vld [vmem:[#allocation3 + $0xd8] sm:$0xff]
    %v2217 = vld [vmem:[#allocation5] sm:$0xff]
    %v2218 = vld [vmem:[#allocation5 + $0x8] sm:$0xff]
    %v2219 = vld [vmem:[#allocation5 + $0x10] sm:$0xff]
    %v2220 = vld [vmem:[#allocation5 + $0x18] sm:$0xff]
    %v2221 = vld [vmem:[#allocation5 + $0x20] sm:$0xff]
    %v2222 = vld [vmem:[#allocation5 + $0x28] sm:$0xff]
    %v2223 = vld [vmem:[#allocation5 + $0x30] sm:$0xff]
    %v2224 = vld [vmem:[#allocation5 + $0x38] sm:$0xff]
    %v2225 = vld [vmem:[#allocation5 + $0x40] sm:$0xff]
    %v2226 = vld [vmem:[#allocation5 + $0x48] sm:$0xff]
    %v2227 = vld [vmem:[#allocation5 + $0x50] sm:$0xff]
    %v2228 = vld [vmem:[#allocation5 + $0x58] sm:$0xff]
    %v2229 = vld [vmem:[#allocation5 + $0x60] sm:$0xff]
    %v2230 = vld [vmem:[#allocation5 + $0x68] sm:$0xff]
    %v2231 = vld [vmem:[#allocation5 + $0x70] sm:$0xff]
    %v2232 = vld [vmem:[#allocation5 + $0x78] sm:$0xff]
    %v2233 = vld [vmem:[#allocation5 + $0x80] sm:$0xff]
    %v2234 = vld [vmem:[#allocation5 + $0x88] sm:$0xff]
    %v2235 = vld [vmem:[#allocation5 + $0x90] sm:$0xff]
    %v2236 = vld [vmem:[#allocation5 + $0x98] sm:$0xff]
    %v2237 = vld [vmem:[#allocation5 + $0xa0] sm:$0xff]
    %v2238 = vld [vmem:[#allocation5 + $0xa8] sm:$0xff]
    %v2239 = vld [vmem:[#allocation5 + $0xb0] sm:$0xff]
    %v2240 = vld [vmem:[#allocation5 + $0xb8] sm:$0xff]
    %v2241 = vld [vmem:[#allocation5 + $0xc0] sm:$0xff]
    %v2242 = vld [vmem:[#allocation5 + $0xc8] sm:$0xff]
    %v2243 = vld [vmem:[#allocation5 + $0xd0] sm:$0xff]
    %v2244 = vld [vmem:[#allocation5 + $0xd8] sm:$0xff]
    %v2245 = vld [vmem:[#allocation5 + $0xe0] sm:$0xff]
    %v2246 = vld [vmem:[#allocation5 + $0xe8] sm:$0xff]
    %v2247 = vld [vmem:[#allocation5 + $0xf0] sm:$0xff]
    %v2248 = vld [vmem:[#allocation5 + $0xf8] sm:$0xff]
    %v2281 = vunpack.c.l.b16 %v2217
    %v2282 = vunpack.c.h.b16 %v2217
    %v2283 = vunpack.c.l.b16 %v2218
    %v2284 = vunpack.c.h.b16 %v2218
    %v2285 = vunpack.c.l.b16 %v2219
    %v2286 = vunpack.c.h.b16 %v2219
    %v2287 = vunpack.c.l.b16 %v2220
    %v2288 = vunpack.c.h.b16 %v2220
    %v2289 = vunpack.c.l.b16 %v2221
    %v2290 = vunpack.c.h.b16 %v2221
    %v2291 = vunpack.c.l.b16 %v2222
    %v2292 = vunpack.c.h.b16 %v2222
    %v2293 = vunpack.c.l.b16 %v2223
    %v2294 = vunpack.c.h.b16 %v2223
    %v2295 = vunpack.c.l.b16 %v2224
    %v2296 = vunpack.c.h.b16 %v2224
    %v2297 = vunpack.c.l.b16 %v2225
    %v2298 = vunpack.c.h.b16 %v2225
    %v2299 = vunpack.c.l.b16 %v2226
    %v2300 = vunpack.c.h.b16 %v2226
    %v2301 = vunpack.c.l.b16 %v2227
    %v2302 = vunpack.c.h.b16 %v2227
    %v2303 = vunpack.c.l.b16 %v2228
    %v2304 = vunpack.c.h.b16 %v2228
    %v2305 = vunpack.c.l.b16 %v2229
    %v2306 = vunpack.c.h.b16 %v2229
    %v2307 = vunpack.c.l.b16 %v2230
    %v2308 = vunpack.c.h.b16 %v2230
    %v2309 = vunpack.c.l.b16 %v2231
    %v2310 = vunpack.c.h.b16 %v2231
    %v2311 = vunpack.c.l.b16 %v2232
    %v2312 = vunpack.c.h.b16 %v2232
    %v2313 = vunpack.c.l.b16 %v2233
    %v2314 = vunpack.c.h.b16 %v2233
    %v2315 = vunpack.c.l.b16 %v2234
    %v2316 = vunpack.c.h.b16 %v2234
    %v2317 = vunpack.c.l.b16 %v2235
    %v2318 = vunpack.c.h.b16 %v2235
    %v2319 = vunpack.c.l.b16 %v2236
    %v2320 = vunpack.c.h.b16 %v2236
    %v2321 = vunpack.c.l.b16 %v2237
    %v2322 = vunpack.c.h.b16 %v2237
    %v2323 = vunpack.c.l.b16 %v2238
    %v2324 = vunpack.c.h.b16 %v2238
    %v2325 = vunpack.c.l.b16 %v2239
    %v2326 = vunpack.c.h.b16 %v2239
    %v2327 = vunpack.c.l.b16 %v2240
    %v2328 = vunpack.c.h.b16 %v2240
    %v2329 = vunpack.c.l.b16 %v2241
    %v2330 = vunpack.c.h.b16 %v2241
    %v2331 = vunpack.c.l.b16 %v2242
    %v2332 = vunpack.c.h.b16 %v2242
    %v2333 = vunpack.c.l.b16 %v2243
    %v2334 = vunpack.c.h.b16 %v2243
    %v2335 = vunpack.c.l.b16 %v2244
    %v2336 = vunpack.c.h.b16 %v2244
    %v2337 = vunpack.c.l.b16 %v2245
    %v2338 = vunpack.c.h.b16 %v2245
    %v2339 = vunpack.c.l.b16 %v2246
    %v2340 = vunpack.c.h.b16 %v2246
    %v2341 = vunpack.c.l.b16 %v2247
    %v2342 = vunpack.c.h.b16 %v2247
    %v2343 = vunpack.c.l.b16 %v2248
    %v2344 = vunpack.c.h.b16 %v2248
    %v2345 = vpack.c.b16 %v2285, %v2281
    %v2346 = vpack.c.b16 %v2286, %v2282
    %v2347 = vpack.c.b16 %v2287, %v2283
    %v2348 = vpack.c.b16 %v2288, %v2284
    %v2349 = vpack.c.b16 %v2293, %v2289
    %v2350 = vpack.c.b16 %v2294, %v2290
    %v2351 = vpack.c.b16 %v2295, %v2291
    %v2352 = vpack.c.b16 %v2296, %v2292
    %v2353 = vpack.c.b16 %v2301, %v2297
    %v2354 = vpack.c.b16 %v2302, %v2298
    %v2355 = vpack.c.b16 %v2303, %v2299
    %v2356 = vpack.c.b16 %v2304, %v2300
    %v2357 = vpack.c.b16 %v2309, %v2305
    %v2358 = vpack.c.b16 %v2310, %v2306
    %v2359 = vpack.c.b16 %v2311, %v2307
    %v2360 = vpack.c.b16 %v2312, %v2308
    %v2361 = vpack.c.b16 %v2317, %v2313
    %v2362 = vpack.c.b16 %v2318, %v2314
    %v2363 = vpack.c.b16 %v2319, %v2315
    %v2364 = vpack.c.b16 %v2320, %v2316
    %v2365 = vpack.c.b16 %v2325, %v2321
    %v2366 = vpack.c.b16 %v2326, %v2322
    %v2367 = vpack.c.b16 %v2327, %v2323
    %v2368 = vpack.c.b16 %v2328, %v2324
    %v2369 = vpack.c.b16 %v2333, %v2329
    %v2370 = vpack.c.b16 %v2334, %v2330
    %v2371 = vpack.c.b16 %v2335, %v2331
    %v2372 = vpack.c.b16 %v2336, %v2332
    %v2373 = vpack.c.b16 %v2341, %v2337
    %v2374 = vpack.c.b16 %v2342, %v2338
    %v2375 = vpack.c.b16 %v2343, %v2339
    %v2376 = vpack.c.b16 %v2344, %v2340
    %2409 = vmatprep.subr.bf16.mxu0 %v2374
    %2410 = vmatpush1.bf16.msra.mxu0 %v2373
    %2411 = vmatprep.subr.bf16.mxu0 %v2370
    %2412 = vmatpush1.bf16.msra.mxu0 %v2369
    %2413 = vmatprep.subr.bf16.mxu0 %v2366
    %2414 = vmatpush1.bf16.msra.mxu0 %v2365
    %2415 = vmatprep.subr.bf16.mxu0 %v2362
    %2416 = vmatpush1.bf16.msra.mxu0 %v2361
    %2417 = vmatprep.subr.bf16.mxu0 %v2358
    %2418 = vmatpush1.bf16.msra.mxu0 %v2357
    %2419 = vmatprep.subr.bf16.mxu0 %v2354
    %2420 = vmatpush1.bf16.msra.mxu0 %v2353
    %2421 = vmatprep.subr.bf16.mxu0 %v2350
    %2422 = vmatpush1.bf16.msra.mxu0 %v2349
    %2423 = vmatprep.subr.bf16.mxu0 %v2346
    %2424 = vmatpush1.bf16.msra.mxu0 %v2345
    %2425 = vmatprep.subr.bf16.mxu0 0
    %2426 = vmatpush2.bf16.msra.mxu0 0
    %2427 = vmatprep.subr.bf16.mxu0 0
    %2428 = vmatpush2.bf16.msra.mxu0 0
    %2429 = vmatprep.subr.bf16.mxu0 0
    %2430 = vmatpush2.bf16.msra.mxu0 0
    %2431 = vmatprep.subr.bf16.mxu0 0
    %2432 = vmatpush2.bf16.msra.mxu0 0
    %2433 = vmatprep.subr.bf16.mxu0 0
    %2434 = vmatpush2.bf16.msra.mxu0 0
    %2435 = vmatprep.subr.bf16.mxu0 0
    %2436 = vmatpush2.bf16.msra.mxu0 0
    %2437 = vmatprep.subr.bf16.mxu0 0
    %2438 = vmatpush2.bf16.msra.mxu0 0
    %2439 = vmatprep.subr.bf16.mxu0 0
    %2440 = vmatpush2.bf16.msra.mxu0 0
    %2441 = vmatprep.mubr.bf16.mxu0 0
    %2442 = vmatmul.mubr.bf16.gmra.mxu0 %v2211
    %v2443 = vpop.f32.mrf.mxu0
    %v2444 = vadd.f32 0.0, %v2443
    %v2445 = vpop.f32.mrf.mxu0
    %v2446 = vadd.f32 0.0, %v2445
    %v2447 = vpop.f32.mrf.mxu0
    %v2448 = vpop.f32.mrf.mxu0
    %2449 = vdwg.mxu0
    %2450 = vmatprep.subr.bf16.mxu0 %v2376
    %2451 = vmatpush1.bf16.msra.mxu0 %v2375
    %2452 = vmatprep.subr.bf16.mxu0 %v2372
    %2453 = vmatpush1.bf16.msra.mxu0 %v2371
    %2454 = vmatprep.subr.bf16.mxu0 %v2368
    %2455 = vmatpush1.bf16.msra.mxu0 %v2367
    %2456 = vmatprep.subr.bf16.mxu0 %v2364
    %2457 = vmatpush1.bf16.msra.mxu0 %v2363
    %2458 = vmatprep.subr.bf16.mxu0 %v2360
    %2459 = vmatpush1.bf16.msra.mxu0 %v2359
    %2460 = vmatprep.subr.bf16.mxu0 %v2356
    %2461 = vmatpush1.bf16.msra.mxu0 %v2355
    %2462 = vmatprep.subr.bf16.mxu0 %v2352
    %2463 = vmatpush1.bf16.msra.mxu0 %v2351
    %2464 = vmatprep.subr.bf16.mxu0 %v2348
    %2465 = vmatpush1.bf16.msra.mxu0 %v2347
    %2466 = vmatprep.subr.bf16.mxu0 0
    %2467 = vmatpush2.bf16.msra.mxu0 0
    %2468 = vmatprep.subr.bf16.mxu0 0
    %2469 = vmatpush2.bf16.msra.mxu0 0
    %2470 = vmatprep.subr.bf16.mxu0 0
    %2471 = vmatpush2.bf16.msra.mxu0 0
    %2472 = vmatprep.subr.bf16.mxu0 0
    %2473 = vmatpush2.bf16.msra.mxu0 0
    %2474 = vmatprep.subr.bf16.mxu0 0
    %2475 = vmatpush2.bf16.msra.mxu0 0
    %2476 = vmatprep.subr.bf16.mxu0 0
    %2477 = vmatpush2.bf16.msra.mxu0 0
    %2478 = vmatprep.subr.bf16.mxu0 0
    %2479 = vmatpush2.bf16.msra.mxu0 0
    %2480 = vmatprep.subr.bf16.mxu0 0
    %2481 = vmatpush2.bf16.msra.mxu0 0
    %2482 = vmatprep.mubr.bf16.mxu0 0
    %2483 = vmatmul.mubr.bf16.gmra.mxu0 %v2211
    %v2484 = vpop.f32.mrf.mxu0
    %v2485 = vadd.f32 0.0, %v2484
    %v2486 = vpop.f32.mrf.mxu0
    %v2487 = vadd.f32 0.0, %v2486
    %v2488 = vpop.f32.mrf.mxu0
    %v2489 = vpop.f32.mrf.mxu0
    %2490 = vdwg.mxu0
    %v2491 = vadd.f32 %v2213, %v2444
    %v2492 = vadd.f32 %v2214, %v2446
    %v2493 = vadd.f32 %v2215, %v2485
    %v2494 = vadd.f32 %v2216, %v2487
    %v2495 = vxor.u32 %v2491, 2147483648
    %v2496 = vmul.f32 %v2495, 1.442695
    %v2497 = vpow.pop %v2496
    %v2498 = vadd.f32 %v2497, 1.0
    %v2499 = vrcp.pop %v2498
    %v2500 = vmul.f32 1.0, %v2499
    %v2501 = vxor.u32 %v2492, 2147483648
    %v2502 = vmul.f32 %v2501, 1.442695
    %v2503 = vpow.pop %v2502
    %v2504 = vadd.f32 %v2503, 1.0
    %v2505 = vrcp.pop %v2504
    %v2506 = vmul.f32 1.0, %v2505
    %v2507 = vtanh.pop %v2493
    %v2508 = vxor.u32 %v2494, 2147483648
    %v2509 = vmul.f32 %v2508, 1.442695
    %v2510 = vpow.pop %v2509
    %v2511 = vadd.f32 %v2510, 1.0
    %v2512 = vrcp.pop %v2511
    %v2513 = vmul.f32 1.0, %v2512
    %v2514 = vmul.f32 %v2506, %v2208
    %v2515 = vmul.f32 %v2500, %v2507
    %v2516 = vadd.f32 %v2514, %v2515
    %v2517 = vtanh.pop %v2516
    %v2518 = vmul.f32 %v2513, %v2517
    %v2519 = vpack.c.bf16 %v2518, %v2518
    %2520 = vst [vmem:[#allocation2 + $0x18] sm:$0xf] %v2519
    %v2521 = vld [vmem:[#allocation3 + $0xe0] sm:$0xff]
    %v2522 = vld [vmem:[#allocation3 + $0xe8] sm:$0xff]
    %v2523 = vld [vmem:[#allocation3 + $0xf0] sm:$0xff]
    %v2524 = vld [vmem:[#allocation3 + $0xf8] sm:$0xff]
    %v2525 = vld [vmem:[#allocation5] sm:$0xff]
    %v2526 = vld [vmem:[#allocation5 + $0x8] sm:$0xff]
    %v2527 = vld [vmem:[#allocation5 + $0x10] sm:$0xff]
    %v2528 = vld [vmem:[#allocation5 + $0x18] sm:$0xff]
    %v2529 = vld [vmem:[#allocation5 + $0x20] sm:$0xff]
    %v2530 = vld [vmem:[#allocation5 + $0x28] sm:$0xff]
    %v2531 = vld [vmem:[#allocation5 + $0x30] sm:$0xff]
    %v2532 = vld [vmem:[#allocation5 + $0x38] sm:$0xff]
    %v2533 = vld [vmem:[#allocation5 + $0x40] sm:$0xff]
    %v2534 = vld [vmem:[#allocation5 + $0x48] sm:$0xff]
    %v2535 = vld [vmem:[#allocation5 + $0x50] sm:$0xff]
    %v2536 = vld [vmem:[#allocation5 + $0x58] sm:$0xff]
    %v2537 = vld [vmem:[#allocation5 + $0x60] sm:$0xff]
    %v2538 = vld [vmem:[#allocation5 + $0x68] sm:$0xff]
    %v2539 = vld [vmem:[#allocation5 + $0x70] sm:$0xff]
    %v2540 = vld [vmem:[#allocation5 + $0x78] sm:$0xff]
    %v2541 = vld [vmem:[#allocation5 + $0x80] sm:$0xff]
    %v2542 = vld [vmem:[#allocation5 + $0x88] sm:$0xff]
    %v2543 = vld [vmem:[#allocation5 + $0x90] sm:$0xff]
    %v2544 = vld [vmem:[#allocation5 + $0x98] sm:$0xff]
    %v2545 = vld [vmem:[#allocation5 + $0xa0] sm:$0xff]
    %v2546 = vld [vmem:[#allocation5 + $0xa8] sm:$0xff]
    %v2547 = vld [vmem:[#allocation5 + $0xb0] sm:$0xff]
    %v2548 = vld [vmem:[#allocation5 + $0xb8] sm:$0xff]
    %v2549 = vld [vmem:[#allocation5 + $0xc0] sm:$0xff]
    %v2550 = vld [vmem:[#allocation5 + $0xc8] sm:$0xff]
    %v2551 = vld [vmem:[#allocation5 + $0xd0] sm:$0xff]
    %v2552 = vld [vmem:[#allocation5 + $0xd8] sm:$0xff]
    %v2553 = vld [vmem:[#allocation5 + $0xe0] sm:$0xff]
    %v2554 = vld [vmem:[#allocation5 + $0xe8] sm:$0xff]
    %v2555 = vld [vmem:[#allocation5 + $0xf0] sm:$0xff]
    %v2556 = vld [vmem:[#allocation5 + $0xf8] sm:$0xff]
    %v2589 = vunpack.c.l.b16 %v2525
    %v2590 = vunpack.c.h.b16 %v2525
    %v2591 = vunpack.c.l.b16 %v2526
    %v2592 = vunpack.c.h.b16 %v2526
    %v2593 = vunpack.c.l.b16 %v2527
    %v2594 = vunpack.c.h.b16 %v2527
    %v2595 = vunpack.c.l.b16 %v2528
    %v2596 = vunpack.c.h.b16 %v2528
    %v2597 = vunpack.c.l.b16 %v2529
    %v2598 = vunpack.c.h.b16 %v2529
    %v2599 = vunpack.c.l.b16 %v2530
    %v2600 = vunpack.c.h.b16 %v2530
    %v2601 = vunpack.c.l.b16 %v2531
    %v2602 = vunpack.c.h.b16 %v2531
    %v2603 = vunpack.c.l.b16 %v2532
    %v2604 = vunpack.c.h.b16 %v2532
    %v2605 = vunpack.c.l.b16 %v2533
    %v2606 = vunpack.c.h.b16 %v2533
    %v2607 = vunpack.c.l.b16 %v2534
    %v2608 = vunpack.c.h.b16 %v2534
    %v2609 = vunpack.c.l.b16 %v2535
    %v2610 = vunpack.c.h.b16 %v2535
    %v2611 = vunpack.c.l.b16 %v2536
    %v2612 = vunpack.c.h.b16 %v2536
    %v2613 = vunpack.c.l.b16 %v2537
    %v2614 = vunpack.c.h.b16 %v2537
    %v2615 = vunpack.c.l.b16 %v2538
    %v2616 = vunpack.c.h.b16 %v2538
    %v2617 = vunpack.c.l.b16 %v2539
    %v2618 = vunpack.c.h.b16 %v2539
    %v2619 = vunpack.c.l.b16 %v2540
    %v2620 = vunpack.c.h.b16 %v2540
    %v2621 = vunpack.c.l.b16 %v2541
    %v2622 = vunpack.c.h.b16 %v2541
    %v2623 = vunpack.c.l.b16 %v2542
    %v2624 = vunpack.c.h.b16 %v2542
    %v2625 = vunpack.c.l.b16 %v2543
    %v2626 = vunpack.c.h.b16 %v2543
    %v2627 = vunpack.c.l.b16 %v2544
    %v2628 = vunpack.c.h.b16 %v2544
    %v2629 = vunpack.c.l.b16 %v2545
    %v2630 = vunpack.c.h.b16 %v2545
    %v2631 = vunpack.c.l.b16 %v2546
    %v2632 = vunpack.c.h.b16 %v2546
    %v2633 = vunpack.c.l.b16 %v2547
    %v2634 = vunpack.c.h.b16 %v2547
    %v2635 = vunpack.c.l.b16 %v2548
    %v2636 = vunpack.c.h.b16 %v2548
    %v2637 = vunpack.c.l.b16 %v2549
    %v2638 = vunpack.c.h.b16 %v2549
    %v2639 = vunpack.c.l.b16 %v2550
    %v2640 = vunpack.c.h.b16 %v2550
    %v2641 = vunpack.c.l.b16 %v2551
    %v2642 = vunpack.c.h.b16 %v2551
    %v2643 = vunpack.c.l.b16 %v2552
    %v2644 = vunpack.c.h.b16 %v2552
    %v2645 = vunpack.c.l.b16 %v2553
    %v2646 = vunpack.c.h.b16 %v2553
    %v2647 = vunpack.c.l.b16 %v2554
    %v2648 = vunpack.c.h.b16 %v2554
    %v2649 = vunpack.c.l.b16 %v2555
    %v2650 = vunpack.c.h.b16 %v2555
    %v2651 = vunpack.c.l.b16 %v2556
    %v2652 = vunpack.c.h.b16 %v2556
    %v2653 = vpack.c.b16 %v2593, %v2589
    %v2654 = vpack.c.b16 %v2594, %v2590
    %v2655 = vpack.c.b16 %v2595, %v2591
    %v2656 = vpack.c.b16 %v2596, %v2592
    %v2657 = vpack.c.b16 %v2601, %v2597
    %v2658 = vpack.c.b16 %v2602, %v2598
    %v2659 = vpack.c.b16 %v2603, %v2599
    %v2660 = vpack.c.b16 %v2604, %v2600
    %v2661 = vpack.c.b16 %v2609, %v2605
    %v2662 = vpack.c.b16 %v2610, %v2606
    %v2663 = vpack.c.b16 %v2611, %v2607
    %v2664 = vpack.c.b16 %v2612, %v2608
    %v2665 = vpack.c.b16 %v2617, %v2613
    %v2666 = vpack.c.b16 %v2618, %v2614
    %v2667 = vpack.c.b16 %v2619, %v2615
    %v2668 = vpack.c.b16 %v2620, %v2616
    %v2669 = vpack.c.b16 %v2625, %v2621
    %v2670 = vpack.c.b16 %v2626, %v2622
    %v2671 = vpack.c.b16 %v2627, %v2623
    %v2672 = vpack.c.b16 %v2628, %v2624
    %v2673 = vpack.c.b16 %v2633, %v2629
    %v2674 = vpack.c.b16 %v2634, %v2630
    %v2675 = vpack.c.b16 %v2635, %v2631
    %v2676 = vpack.c.b16 %v2636, %v2632
    %v2677 = vpack.c.b16 %v2641, %v2637
    %v2678 = vpack.c.b16 %v2642, %v2638
    %v2679 = vpack.c.b16 %v2643, %v2639
    %v2680 = vpack.c.b16 %v2644, %v2640
    %v2681 = vpack.c.b16 %v2649, %v2645
    %v2682 = vpack.c.b16 %v2650, %v2646
    %v2683 = vpack.c.b16 %v2651, %v2647
    %v2684 = vpack.c.b16 %v2652, %v2648
    %2717 = vmatprep.subr.bf16.mxu0 %v2682
    %2718 = vmatpush1.bf16.msra.mxu0 %v2681
    %2719 = vmatprep.subr.bf16.mxu0 %v2678
    %2720 = vmatpush1.bf16.msra.mxu0 %v2677
    %2721 = vmatprep.subr.bf16.mxu0 %v2674
    %2722 = vmatpush1.bf16.msra.mxu0 %v2673
    %2723 = vmatprep.subr.bf16.mxu0 %v2670
    %2724 = vmatpush1.bf16.msra.mxu0 %v2669
    %2725 = vmatprep.subr.bf16.mxu0 %v2666
    %2726 = vmatpush1.bf16.msra.mxu0 %v2665
    %2727 = vmatprep.subr.bf16.mxu0 %v2662
    %2728 = vmatpush1.bf16.msra.mxu0 %v2661
    %2729 = vmatprep.subr.bf16.mxu0 %v2658
    %2730 = vmatpush1.bf16.msra.mxu0 %v2657
    %2731 = vmatprep.subr.bf16.mxu0 %v2654
    %2732 = vmatpush1.bf16.msra.mxu0 %v2653
    %2733 = vmatprep.subr.bf16.mxu0 0
    %2734 = vmatpush2.bf16.msra.mxu0 0
    %2735 = vmatprep.subr.bf16.mxu0 0
    %2736 = vmatpush2.bf16.msra.mxu0 0
    %2737 = vmatprep.subr.bf16.mxu0 0
    %2738 = vmatpush2.bf16.msra.mxu0 0
    %2739 = vmatprep.subr.bf16.mxu0 0
    %2740 = vmatpush2.bf16.msra.mxu0 0
    %2741 = vmatprep.subr.bf16.mxu0 0
    %2742 = vmatpush2.bf16.msra.mxu0 0
    %2743 = vmatprep.subr.bf16.mxu0 0
    %2744 = vmatpush2.bf16.msra.mxu0 0
    %2745 = vmatprep.subr.bf16.mxu0 0
    %2746 = vmatpush2.bf16.msra.mxu0 0
    %2747 = vmatprep.subr.bf16.mxu0 0
    %2748 = vmatpush2.bf16.msra.mxu0 0
    %2749 = vmatprep.mubr.bf16.mxu0 0
    %2750 = vmatmul.mubr.bf16.gmra.mxu0 %v2519
    %v2751 = vpop.f32.mrf.mxu0
    %v2752 = vadd.f32 0.0, %v2751
    %v2753 = vpop.f32.mrf.mxu0
    %v2754 = vadd.f32 0.0, %v2753
    %v2755 = vpop.f32.mrf.mxu0
    %v2756 = vpop.f32.mrf.mxu0
    %2757 = vdwg.mxu0
    %2758 = vmatprep.subr.bf16.mxu0 %v2684
    %2759 = vmatpush1.bf16.msra.mxu0 %v2683
    %2760 = vmatprep.subr.bf16.mxu0 %v2680
    %2761 = vmatpush1.bf16.msra.mxu0 %v2679
    %2762 = vmatprep.subr.bf16.mxu0 %v2676
    %2763 = vmatpush1.bf16.msra.mxu0 %v2675
    %2764 = vmatprep.subr.bf16.mxu0 %v2672
    %2765 = vmatpush1.bf16.msra.mxu0 %v2671
    %2766 = vmatprep.subr.bf16.mxu0 %v2668
    %2767 = vmatpush1.bf16.msra.mxu0 %v2667
    %2768 = vmatprep.subr.bf16.mxu0 %v2664
    %2769 = vmatpush1.bf16.msra.mxu0 %v2663
    %2770 = vmatprep.subr.bf16.mxu0 %v2660
    %2771 = vmatpush1.bf16.msra.mxu0 %v2659
    %2772 = vmatprep.subr.bf16.mxu0 %v2656
    %2773 = vmatpush1.bf16.msra.mxu0 %v2655
    %2774 = vmatprep.subr.bf16.mxu0 0
    %2775 = vmatpush2.bf16.msra.mxu0 0
    %2776 = vmatprep.subr.bf16.mxu0 0
    %2777 = vmatpush2.bf16.msra.mxu0 0
    %2778 = vmatprep.subr.bf16.mxu0 0
    %2779 = vmatpush2.bf16.msra.mxu0 0
    %2780 = vmatprep.subr.bf16.mxu0 0
    %2781 = vmatpush2.bf16.msra.mxu0 0
    %2782 = vmatprep.subr.bf16.mxu0 0
    %2783 = vmatpush2.bf16.msra.mxu0 0
    %2784 = vmatprep.subr.bf16.mxu0 0
    %2785 = vmatpush2.bf16.msra.mxu0 0
    %2786 = vmatprep.subr.bf16.mxu0 0
    %2787 = vmatpush2.bf16.msra.mxu0 0
    %2788 = vmatprep.subr.bf16.mxu0 0
    %2789 = vmatpush2.bf16.msra.mxu0 0
    %2790 = vmatprep.mubr.bf16.mxu0 0
    %2791 = vmatmul.mubr.bf16.gmra.mxu0 %v2519
    %v2792 = vpop.f32.mrf.mxu0
    %v2793 = vadd.f32 0.0, %v2792
    %v2794 = vpop.f32.mrf.mxu0
    %v2795 = vadd.f32 0.0, %v2794
    %v2796 = vpop.f32.mrf.mxu0
    %v2797 = vpop.f32.mrf.mxu0
    %2798 = vdwg.mxu0
    %v2799 = vadd.f32 %v2521, %v2752
    %v2800 = vadd.f32 %v2522, %v2754
    %v2801 = vadd.f32 %v2523, %v2793
    %v2802 = vadd.f32 %v2524, %v2795
    %v2803 = vxor.u32 %v2799, 2147483648
    %v2804 = vmul.f32 %v2803, 1.442695
    %v2805 = vpow.pop %v2804
    %v2806 = vadd.f32 %v2805, 1.0
    %v2807 = vrcp.pop %v2806
    %v2808 = vmul.f32 1.0, %v2807
    %v2809 = vxor.u32 %v2800, 2147483648
    %v2810 = vmul.f32 %v2809, 1.442695
    %v2811 = vpow.pop %v2810
    %v2812 = vadd.f32 %v2811, 1.0
    %v2813 = vrcp.pop %v2812
    %v2814 = vmul.f32 1.0, %v2813
    %v2815 = vtanh.pop %v2801
    %v2816 = vxor.u32 %v2802, 2147483648
    %v2817 = vmul.f32 %v2816, 1.442695
    %v2818 = vpow.pop %v2817
    %v2819 = vadd.f32 %v2818, 1.0
    %v2820 = vrcp.pop %v2819
    %v2821 = vmul.f32 1.0, %v2820
    %v2822 = vmul.f32 %v2814, %v2516
    %v2823 = vmul.f32 %v2808, %v2815
    %v2824 = vadd.f32 %v2822, %v2823
    %v2825 = vtanh.pop %v2824
    %v2826 = vmul.f32 %v2821, %v2825
    %v2827 = vpack.c.bf16 %v2826, %v2826
    %2828 = vst [vmem:[#allocation2 + $0x1c] sm:$0xf] %v2827
    %v2829 = vld [vmem:[#allocation2] sm:$0xf]
    %v2830 = vld [vmem:[#allocation2 + $0x4] sm:$0xf]
    %v2831 = vld [vmem:[#allocation2 + $0x8] sm:$0xf]
    %v2832 = vld [vmem:[#allocation2 + $0xc] sm:$0xf]
    %v2833 = vld [vmem:[#allocation2 + $0x10] sm:$0xf]
    %v2834 = vld [vmem:[#allocation2 + $0x14] sm:$0xf]
    %v2835 = vld [vmem:[#allocation2 + $0x18] sm:$0xf]
    %v2836 = vld [vmem:[#allocation2 + $0x1c] sm:$0xf]
    %v2837 = vld [vmem:[#allocation7] sm:$0xff]
    %v2838 = vld [vmem:[#allocation7 + $0x8] sm:$0xff]
    %v2839 = vld [vmem:[#allocation7 + $0x10] sm:$0xff]
    %v2840 = vld [vmem:[#allocation7 + $0x18] sm:$0xff]
    %v2841 = vld [vmem:[#allocation7 + $0x20] sm:$0xff]
    %v2842 = vld [vmem:[#allocation7 + $0x28] sm:$0xff]
    %v2843 = vld [vmem:[#allocation7 + $0x30] sm:$0xff]
    %v2844 = vld [vmem:[#allocation7 + $0x38] sm:$0xff]
    %v2845 = vld [vmem:[#allocation7 + $0x40] sm:$0xff]
    %v2846 = vld [vmem:[#allocation7 + $0x48] sm:$0xff]
    %v2847 = vld [vmem:[#allocation7 + $0x50] sm:$0xff]
    %v2848 = vld [vmem:[#allocation7 + $0x58] sm:$0xff]
    %v2849 = vld [vmem:[#allocation7 + $0x60] sm:$0xff]
    %v2850 = vld [vmem:[#allocation7 + $0x68] sm:$0xff]
    %v2851 = vld [vmem:[#allocation7 + $0x70] sm:$0xff]
    %v2852 = vld [vmem:[#allocation7 + $0x78] sm:$0xff]
    %v2853 = vld [vmem:[#allocation7 + $0x80] sm:$0xff]
    %v2854 = vld [vmem:[#allocation7 + $0x88] sm:$0xff]
    %v2855 = vld [vmem:[#allocation7 + $0x90] sm:$0xff]
    %v2856 = vld [vmem:[#allocation7 + $0x98] sm:$0xff]
    %v2857 = vld [vmem:[#allocation7 + $0xa0] sm:$0xff]
    %v2858 = vld [vmem:[#allocation7 + $0xa8] sm:$0xff]
    %v2859 = vld [vmem:[#allocation7 + $0xb0] sm:$0xff]
    %v2860 = vld [vmem:[#allocation7 + $0xb8] sm:$0xff]
    %v2861 = vld [vmem:[#allocation7 + $0xc0] sm:$0xff]
    %v2862 = vld [vmem:[#allocation7 + $0xc8] sm:$0xff]
    %v2863 = vld [vmem:[#allocation7 + $0xd0] sm:$0xff]
    %v2864 = vld [vmem:[#allocation7 + $0xd8] sm:$0xff]
    %v2865 = vld [vmem:[#allocation7 + $0xe0] sm:$0xff]
    %v2866 = vld [vmem:[#allocation7 + $0xe8] sm:$0xff]
    %v2867 = vld [vmem:[#allocation7 + $0xf0] sm:$0xff]
    %v2868 = vld [vmem:[#allocation7 + $0xf8] sm:$0xff]
    %v2869 = vld [vmem:[%s6] sm:$0xf]
    %v2871 = vlaneseq
    %v2872 = vshrl.u32 %v2871, 7
    %v2873 = vsub.s32 0, %v2872
    %v2874 = vrot.slane %v2869, %v2873
    %v2875 = vlaneseq
    %v2876 = vshrl.u32 %v2875, 7
    %v2877 = vsub.s32 1, %v2876
    %v2878 = vrot.slane %v2869, %v2877
    %v2879 = vlaneseq
    %v2880 = vshrl.u32 %v2879, 7
    %v2881 = vsub.s32 2, %v2880
    %v2882 = vrot.slane %v2869, %v2881
    %v2883 = vlaneseq
    %v2884 = vshrl.u32 %v2883, 7
    %v2885 = vsub.s32 3, %v2884
    %v2886 = vrot.slane %v2869, %v2885
    %v2899 = vunpack.c.l.b16 %v2829
    %v2900 = vunpack.c.l.b16 %v2830
    %v2901 = vunpack.c.l.b16 %v2831
    %v2902 = vunpack.c.l.b16 %v2832
    %v2903 = vunpack.c.l.b16 %v2833
    %v2904 = vunpack.c.l.b16 %v2834
    %v2905 = vunpack.c.l.b16 %v2835
    %v2906 = vunpack.c.l.b16 %v2836
    %v2907 = vpack.c.b16 %v2900, %v2899
    %v2908 = vpack.c.b16 %v2902, %v2901
    %v2909 = vpack.c.b16 %v2904, %v2903
    %v2910 = vpack.c.b16 %v2906, %v2905
    %v2947 = vunpack.c.l.b16 %v2837
    %v2948 = vunpack.c.h.b16 %v2837
    %v2949 = vunpack.c.l.b16 %v2838
    %v2950 = vunpack.c.h.b16 %v2838
    %v2951 = vunpack.c.l.b16 %v2839
    %v2952 = vunpack.c.h.b16 %v2839
    %v2953 = vunpack.c.l.b16 %v2840
    %v2954 = vunpack.c.h.b16 %v2840
    %v2955 = vunpack.c.l.b16 %v2841
    %v2956 = vunpack.c.h.b16 %v2841
    %v2957 = vunpack.c.l.b16 %v2842
    %v2958 = vunpack.c.h.b16 %v2842
    %v2959 = vunpack.c.l.b16 %v2843
    %v2960 = vunpack.c.h.b16 %v2843
    %v2961 = vunpack.c.l.b16 %v2844
    %v2962 = vunpack.c.h.b16 %v2844
    %v2963 = vunpack.c.l.b16 %v2845
    %v2964 = vunpack.c.h.b16 %v2845
    %v2965 = vunpack.c.l.b16 %v2846
    %v2966 = vunpack.c.h.b16 %v2846
    %v2967 = vunpack.c.l.b16 %v2847
    %v2968 = vunpack.c.h.b16 %v2847
    %v2969 = vunpack.c.l.b16 %v2848
    %v2970 = vunpack.c.h.b16 %v2848
    %v2971 = vunpack.c.l.b16 %v2849
    %v2972 = vunpack.c.h.b16 %v2849
    %v2973 = vunpack.c.l.b16 %v2850
    %v2974 = vunpack.c.h.b16 %v2850
    %v2975 = vunpack.c.l.b16 %v2851
    %v2976 = vunpack.c.h.b16 %v2851
    %v2977 = vunpack.c.l.b16 %v2852
    %v2978 = vunpack.c.h.b16 %v2852
    %v2979 = vunpack.c.l.b16 %v2853
    %v2980 = vunpack.c.h.b16 %v2853
    %v2981 = vunpack.c.l.b16 %v2854
    %v2982 = vunpack.c.h.b16 %v2854
    %v2983 = vunpack.c.l.b16 %v2855
    %v2984 = vunpack.c.h.b16 %v2855
    %v2985 = vunpack.c.l.b16 %v2856
    %v2986 = vunpack.c.h.b16 %v2856
    %v2987 = vunpack.c.l.b16 %v2857
    %v2988 = vunpack.c.h.b16 %v2857
    %v2989 = vunpack.c.l.b16 %v2858
    %v2990 = vunpack.c.h.b16 %v2858
    %v2991 = vunpack.c.l.b16 %v2859
    %v2992 = vunpack.c.h.b16 %v2859
    %v2993 = vunpack.c.l.b16 %v2860
    %v2994 = vunpack.c.h.b16 %v2860
    %v2995 = vunpack.c.l.b16 %v2861
    %v2996 = vunpack.c.h.b16 %v2861
    %v2997 = vunpack.c.l.b16 %v2862
    %v2998 = vunpack.c.h.b16 %v2862
    %v2999 = vunpack.c.l.b16 %v2863
    %v3000 = vunpack.c.h.b16 %v2863
    %v3001 = vunpack.c.l.b16 %v2864
    %v3002 = vunpack.c.h.b16 %v2864
    %v3003 = vunpack.c.l.b16 %v2865
    %v3004 = vunpack.c.h.b16 %v2865
    %v3005 = vunpack.c.l.b16 %v2866
    %v3006 = vunpack.c.h.b16 %v2866
    %v3007 = vunpack.c.l.b16 %v2867
    %v3008 = vunpack.c.h.b16 %v2867
    %v3009 = vunpack.c.l.b16 %v2868
    %v3010 = vunpack.c.h.b16 %v2868
    %v3011 = vpack.c.b16 %v2951, %v2947
    %v3012 = vpack.c.b16 %v2952, %v2948
    %v3013 = vpack.c.b16 %v2953, %v2949
    %v3014 = vpack.c.b16 %v2954, %v2950
    %v3015 = vpack.c.b16 %v2959, %v2955
    %v3016 = vpack.c.b16 %v2960, %v2956
    %v3017 = vpack.c.b16 %v2961, %v2957
    %v3018 = vpack.c.b16 %v2962, %v2958
    %v3019 = vpack.c.b16 %v2967, %v2963
    %v3020 = vpack.c.b16 %v2968, %v2964
    %v3021 = vpack.c.b16 %v2969, %v2965
    %v3022 = vpack.c.b16 %v2970, %v2966
    %v3023 = vpack.c.b16 %v2975, %v2971
    %v3024 = vpack.c.b16 %v2976, %v2972
    %v3025 = vpack.c.b16 %v2977, %v2973
    %v3026 = vpack.c.b16 %v2978, %v2974
    %v3027 = vpack.c.b16 %v2983, %v2979
    %v3028 = vpack.c.b16 %v2984, %v2980
    %v3029 = vpack.c.b16 %v2985, %v2981
    %v3030 = vpack.c.b16 %v2986, %v2982
    %v3031 = vpack.c.b16 %v2991, %v2987
    %v3032 = vpack.c.b16 %v2992, %v2988
    %v3033 = vpack.c.b16 %v2993, %v2989
    %v3034 = vpack.c.b16 %v2994, %v2990
    %v3035 = vpack.c.b16 %v2999, %v2995
    %v3036 = vpack.c.b16 %v3000, %v2996
    %v3037 = vpack.c.b16 %v3001, %v2997
    %v3038 = vpack.c.b16 %v3002, %v2998
    %v3039 = vpack.c.b16 %v3007, %v3003
    %v3040 = vpack.c.b16 %v3008, %v3004
    %v3041 = vpack.c.b16 %v3009, %v3005
    %v3042 = vpack.c.b16 %v3010, %v3006
    %3075 = vmatprep.subr.bf16.mxu0 %v3040
    %3076 = vmatpush1.bf16.msra.mxu0 %v3039
    %3077 = vmatprep.subr.bf16.mxu0 %v3036
    %3078 = vmatpush1.bf16.msra.mxu0 %v3035
    %3079 = vmatprep.subr.bf16.mxu0 %v3032
    %3080 = vmatpush1.bf16.msra.mxu0 %v3031
    %3081 = vmatprep.subr.bf16.mxu0 %v3028
    %3082 = vmatpush1.bf16.msra.mxu0 %v3027
    %3083 = vmatprep.subr.bf16.mxu0 %v3024
    %3084 = vmatpush1.bf16.msra.mxu0 %v3023
    %3085 = vmatprep.subr.bf16.mxu0 %v3020
    %3086 = vmatpush1.bf16.msra.mxu0 %v3019
    %3087 = vmatprep.subr.bf16.mxu0 %v3016
    %3088 = vmatpush1.bf16.msra.mxu0 %v3015
    %3089 = vmatprep.subr.bf16.mxu0 %v3012
    %3090 = vmatpush1.bf16.msra.mxu0 %v3011
    %3091 = vmatprep.subr.bf16.mxu0 0
    %3092 = vmatpush2.bf16.msra.mxu0 0
    %3093 = vmatprep.subr.bf16.mxu0 0
    %3094 = vmatpush2.bf16.msra.mxu0 0
    %3095 = vmatprep.subr.bf16.mxu0 0
    %3096 = vmatpush2.bf16.msra.mxu0 0
    %3097 = vmatprep.subr.bf16.mxu0 0
    %3098 = vmatpush2.bf16.msra.mxu0 0
    %3099 = vmatprep.subr.bf16.mxu0 0
    %3100 = vmatpush2.bf16.msra.mxu0 0
    %3101 = vmatprep.subr.bf16.mxu0 0
    %3102 = vmatpush2.bf16.msra.mxu0 0
    %3103 = vmatprep.subr.bf16.mxu0 0
    %3104 = vmatpush2.bf16.msra.mxu0 0
    %3105 = vmatprep.subr.bf16.mxu0 0
    %3106 = vmatpush2.bf16.msra.mxu0 0
    %3107 = vmatprep.mubr.bf16.mxu0 0
    %3108 = vmatmul.mubr.bf16.gmra.mxu0 %v2907
    %v3109 = vpop.f32.mrf.mxu0
    %v3110 = vadd.f32 %v2874, %v3109
    %v3111 = vpop.f32.mrf.mxu0
    %v3112 = vadd.f32 %v2878, %v3111
    %v3113 = vpop.f32.mrf.mxu0
    %v3114 = vadd.f32 %v2874, %v3113
    %v3115 = vpop.f32.mrf.mxu0
    %v3116 = vadd.f32 %v2878, %v3115
    %3117 = vmatprep.mubr.bf16.mxu0 0
    %3118 = vmatmul.mubr.bf16.gmra.mxu0 %v2908
    %v3119 = vpop.f32.mrf.mxu0
    %v3120 = vadd.f32 %v2874, %v3119
    %v3121 = vpop.f32.mrf.mxu0
    %v3122 = vadd.f32 %v2878, %v3121
    %v3123 = vpop.f32.mrf.mxu0
    %v3124 = vadd.f32 %v2874, %v3123
    %v3125 = vpop.f32.mrf.mxu0
    %v3126 = vadd.f32 %v2878, %v3125
    %3127 = vmatprep.mubr.bf16.mxu0 0
    %3128 = vmatmul.mubr.bf16.gmra.mxu0 %v2909
    %v3129 = vpop.f32.mrf.mxu0
    %v3130 = vadd.f32 %v2874, %v3129
    %v3131 = vpop.f32.mrf.mxu0
    %v3132 = vadd.f32 %v2878, %v3131
    %v3133 = vpop.f32.mrf.mxu0
    %v3134 = vadd.f32 %v2874, %v3133
    %v3135 = vpop.f32.mrf.mxu0
    %v3136 = vadd.f32 %v2878, %v3135
    %3137 = vmatprep.mubr.bf16.mxu0 0
    %3138 = vmatmul.mubr.bf16.gmra.mxu0 %v2910
    %v3139 = vpop.f32.mrf.mxu0
    %v3140 = vadd.f32 %v2874, %v3139
    %v3141 = vpop.f32.mrf.mxu0
    %v3142 = vadd.f32 %v2878, %v3141
    %v3143 = vpop.f32.mrf.mxu0
    %v3144 = vadd.f32 %v2874, %v3143
    %v3145 = vpop.f32.mrf.mxu0
    %v3146 = vadd.f32 %v2878, %v3145
    %3147 = vdwg.mxu0
    %3148 = vmatprep.subr.bf16.mxu0 %v3042
    %3149 = vmatpush1.bf16.msra.mxu0 %v3041
    %3150 = vmatprep.subr.bf16.mxu0 %v3038
    %3151 = vmatpush1.bf16.msra.mxu0 %v3037
    %3152 = vmatprep.subr.bf16.mxu0 %v3034
    %3153 = vmatpush1.bf16.msra.mxu0 %v3033
    %3154 = vmatprep.subr.bf16.mxu0 %v3030
    %3155 = vmatpush1.bf16.msra.mxu0 %v3029
    %3156 = vmatprep.subr.bf16.mxu0 %v3026
    %3157 = vmatpush1.bf16.msra.mxu0 %v3025
    %3158 = vmatprep.subr.bf16.mxu0 %v3022
    %3159 = vmatpush1.bf16.msra.mxu0 %v3021
    %3160 = vmatprep.subr.bf16.mxu0 %v3018
    %3161 = vmatpush1.bf16.msra.mxu0 %v3017
    %3162 = vmatprep.subr.bf16.mxu0 %v3014
    %3163 = vmatpush1.bf16.msra.mxu0 %v3013
    %3164 = vmatprep.subr.bf16.mxu0 0
    %3165 = vmatpush2.bf16.msra.mxu0 0
    %3166 = vmatprep.subr.bf16.mxu0 0
    %3167 = vmatpush2.bf16.msra.mxu0 0
    %3168 = vmatprep.subr.bf16.mxu0 0
    %3169 = vmatpush2.bf16.msra.mxu0 0
    %3170 = vmatprep.subr.bf16.mxu0 0
    %3171 = vmatpush2.bf16.msra.mxu0 0
    %3172 = vmatprep.subr.bf16.mxu0 0
    %3173 = vmatpush2.bf16.msra.mxu0 0
    %3174 = vmatprep.subr.bf16.mxu0 0
    %3175 = vmatpush2.bf16.msra.mxu0 0
    %3176 = vmatprep.subr.bf16.mxu0 0
    %3177 = vmatpush2.bf16.msra.mxu0 0
    %3178 = vmatprep.subr.bf16.mxu0 0
    %3179 = vmatpush2.bf16.msra.mxu0 0
    %3180 = vmatprep.mubr.bf16.mxu0 0
    %3181 = vmatmul.mubr.bf16.gmra.mxu0 %v2907
    %v3182 = vpop.f32.mrf.mxu0
    %v3183 = vadd.f32 %v2882, %v3182
    %v3184 = vpop.f32.mrf.mxu0
    %v3185 = vadd.f32 %v2886, %v3184
    %v3186 = vpop.f32.mrf.mxu0
    %v3187 = vadd.f32 %v2882, %v3186
    %v3188 = vpop.f32.mrf.mxu0
    %v3189 = vadd.f32 %v2886, %v3188
    %3190 = vmatprep.mubr.bf16.mxu0 0
    %3191 = vmatmul.mubr.bf16.gmra.mxu0 %v2908
    %v3192 = vpop.f32.mrf.mxu0
    %v3193 = vadd.f32 %v2882, %v3192
    %v3194 = vpop.f32.mrf.mxu0
    %v3195 = vadd.f32 %v2886, %v3194
    %v3196 = vpop.f32.mrf.mxu0
    %v3197 = vadd.f32 %v2882, %v3196
    %v3198 = vpop.f32.mrf.mxu0
    %v3199 = vadd.f32 %v2886, %v3198
    %3200 = vmatprep.mubr.bf16.mxu0 0
    %3201 = vmatmul.mubr.bf16.gmra.mxu0 %v2909
    %v3202 = vpop.f32.mrf.mxu0
    %v3203 = vadd.f32 %v2882, %v3202
    %v3204 = vpop.f32.mrf.mxu0
    %v3205 = vadd.f32 %v2886, %v3204
    %v3206 = vpop.f32.mrf.mxu0
    %v3207 = vadd.f32 %v2882, %v3206
    %v3208 = vpop.f32.mrf.mxu0
    %v3209 = vadd.f32 %v2886, %v3208
    %3210 = vmatprep.mubr.bf16.mxu0 0
    %3211 = vmatmul.mubr.bf16.gmra.mxu0 %v2910
    %v3212 = vpop.f32.mrf.mxu0
    %v3213 = vadd.f32 %v2882, %v3212
    %v3214 = vpop.f32.mrf.mxu0
    %v3215 = vadd.f32 %v2886, %v3214
    %v3216 = vpop.f32.mrf.mxu0
    %v3217 = vadd.f32 %v2882, %v3216
    %v3218 = vpop.f32.mrf.mxu0
    %v3219 = vadd.f32 %v2886, %v3218
    %3220 = vdwg.mxu0
    %3221 = vst [vmem:[#allocation3] sm:$0xff] %v3110
    %3222 = vst [vmem:[#allocation3 + $0x8] sm:$0xff] %v3112
    %3223 = vst [vmem:[#allocation3 + $0x10] sm:$0xff] %v3183
    %3224 = vst [vmem:[#allocation3 + $0x18] sm:$0xff] %v3185
    %3225 = vst [vmem:[#allocation3 + $0x20] sm:$0xff] %v3114
    %3226 = vst [vmem:[#allocation3 + $0x28] sm:$0xff] %v3116
    %3227 = vst [vmem:[#allocation3 + $0x30] sm:$0xff] %v3187
    %3228 = vst [vmem:[#allocation3 + $0x38] sm:$0xff] %v3189
    %3229 = vst [vmem:[#allocation3 + $0x40] sm:$0xff] %v3120
    %3230 = vst [vmem:[#allocation3 + $0x48] sm:$0xff] %v3122
    %3231 = vst [vmem:[#allocation3 + $0x50] sm:$0xff] %v3193
    %3232 = vst [vmem:[#allocation3 + $0x58] sm:$0xff] %v3195
    %3233 = vst [vmem:[#allocation3 + $0x60] sm:$0xff] %v3124
    %3234 = vst [vmem:[#allocation3 + $0x68] sm:$0xff] %v3126
    %3235 = vst [vmem:[#allocation3 + $0x70] sm:$0xff] %v3197
    %3236 = vst [vmem:[#allocation3 + $0x78] sm:$0xff] %v3199
    %3237 = vst [vmem:[#allocation3 + $0x80] sm:$0xff] %v3130
    %3238 = vst [vmem:[#allocation3 + $0x88] sm:$0xff] %v3132
    %3239 = vst [vmem:[#allocation3 + $0x90] sm:$0xff] %v3203
    %3240 = vst [vmem:[#allocation3 + $0x98] sm:$0xff] %v3205
    %3241 = vst [vmem:[#allocation3 + $0xa0] sm:$0xff] %v3134
    %3242 = vst [vmem:[#allocation3 + $0xa8] sm:$0xff] %v3136
    %3243 = vst [vmem:[#allocation3 + $0xb0] sm:$0xff] %v3207
    %3244 = vst [vmem:[#allocation3 + $0xb8] sm:$0xff] %v3209
    %3245 = vst [vmem:[#allocation3 + $0xc0] sm:$0xff] %v3140
    %3246 = vst [vmem:[#allocation3 + $0xc8] sm:$0xff] %v3142
    %3247 = vst [vmem:[#allocation3 + $0xd0] sm:$0xff] %v3213
    %3248 = vst [vmem:[#allocation3 + $0xd8] sm:$0xff] %v3215
    %3249 = vst [vmem:[#allocation3 + $0xe0] sm:$0xff] %v3144
    %3250 = vst [vmem:[#allocation3 + $0xe8] sm:$0xff] %v3146
    %3251 = vst [vmem:[#allocation3 + $0xf0] sm:$0xff] %v3217
    %3252 = vst [vmem:[#allocation3 + $0xf8] sm:$0xff] %v3219
    %v3253 = vld [vmem:[#allocation3] sm:$0xff]
    %v3254 = vld [vmem:[#allocation3 + $0x8] sm:$0xff]
    %v3255 = vld [vmem:[#allocation3 + $0x10] sm:$0xff]
    %v3256 = vld [vmem:[#allocation3 + $0x18] sm:$0xff]
    %v3257 = vld [vmem:[#allocation9] sm:$0xff]
    %v3258 = vld [vmem:[#allocation9 + $0x8] sm:$0xff]
    %v3259 = vld [vmem:[#allocation9 + $0x10] sm:$0xff]
    %v3260 = vld [vmem:[#allocation9 + $0x18] sm:$0xff]
    %v3261 = vld [vmem:[#allocation9 + $0x20] sm:$0xff]
    %v3262 = vld [vmem:[#allocation9 + $0x28] sm:$0xff]
    %v3263 = vld [vmem:[#allocation9 + $0x30] sm:$0xff]
    %v3264 = vld [vmem:[#allocation9 + $0x38] sm:$0xff]
    %v3265 = vld [vmem:[#allocation9 + $0x40] sm:$0xff]
    %v3266 = vld [vmem:[#allocation9 + $0x48] sm:$0xff]
    %v3267 = vld [vmem:[#allocation9 + $0x50] sm:$0xff]
    %v3268 = vld [vmem:[#allocation9 + $0x58] sm:$0xff]
    %v3269 = vld [vmem:[#allocation9 + $0x60] sm:$0xff]
    %v3270 = vld [vmem:[#allocation9 + $0x68] sm:$0xff]
    %v3271 = vld [vmem:[#allocation9 + $0x70] sm:$0xff]
    %v3272 = vld [vmem:[#allocation9 + $0x78] sm:$0xff]
    %v3273 = vld [vmem:[#allocation9 + $0x80] sm:$0xff]
    %v3274 = vld [vmem:[#allocation9 + $0x88] sm:$0xff]
    %v3275 = vld [vmem:[#allocation9 + $0x90] sm:$0xff]
    %v3276 = vld [vmem:[#allocation9 + $0x98] sm:$0xff]
    %v3277 = vld [vmem:[#allocation9 + $0xa0] sm:$0xff]
    %v3278 = vld [vmem:[#allocation9 + $0xa8] sm:$0xff]
    %v3279 = vld [vmem:[#allocation9 + $0xb0] sm:$0xff]
    %v3280 = vld [vmem:[#allocation9 + $0xb8] sm:$0xff]
    %v3281 = vld [vmem:[#allocation9 + $0xc0] sm:$0xff]
    %v3282 = vld [vmem:[#allocation9 + $0xc8] sm:$0xff]
    %v3283 = vld [vmem:[#allocation9 + $0xd0] sm:$0xff]
    %v3284 = vld [vmem:[#allocation9 + $0xd8] sm:$0xff]
    %v3285 = vld [vmem:[#allocation9 + $0xe0] sm:$0xff]
    %v3286 = vld [vmem:[#allocation9 + $0xe8] sm:$0xff]
    %v3287 = vld [vmem:[#allocation9 + $0xf0] sm:$0xff]
    %v3288 = vld [vmem:[#allocation9 + $0xf8] sm:$0xff]
    %v3321 = vunpack.c.l.b16 %v3257
    %v3322 = vunpack.c.h.b16 %v3257
    %v3323 = vunpack.c.l.b16 %v3258
    %v3324 = vunpack.c.h.b16 %v3258
    %v3325 = vunpack.c.l.b16 %v3259
    %v3326 = vunpack.c.h.b16 %v3259
    %v3327 = vunpack.c.l.b16 %v3260
    %v3328 = vunpack.c.h.b16 %v3260
    %v3329 = vunpack.c.l.b16 %v3261
    %v3330 = vunpack.c.h.b16 %v3261
    %v3331 = vunpack.c.l.b16 %v3262
    %v3332 = vunpack.c.h.b16 %v3262
    %v3333 = vunpack.c.l.b16 %v3263
    %v3334 = vunpack.c.h.b16 %v3263
    %v3335 = vunpack.c.l.b16 %v3264
    %v3336 = vunpack.c.h.b16 %v3264
    %v3337 = vunpack.c.l.b16 %v3265
    %v3338 = vunpack.c.h.b16 %v3265
    %v3339 = vunpack.c.l.b16 %v3266
    %v3340 = vunpack.c.h.b16 %v3266
    %v3341 = vunpack.c.l.b16 %v3267
    %v3342 = vunpack.c.h.b16 %v3267
    %v3343 = vunpack.c.l.b16 %v3268
    %v3344 = vunpack.c.h.b16 %v3268
    %v3345 = vunpack.c.l.b16 %v3269
    %v3346 = vunpack.c.h.b16 %v3269
    %v3347 = vunpack.c.l.b16 %v3270
    %v3348 = vunpack.c.h.b16 %v3270
    %v3349 = vunpack.c.l.b16 %v3271
    %v3350 = vunpack.c.h.b16 %v3271
    %v3351 = vunpack.c.l.b16 %v3272
    %v3352 = vunpack.c.h.b16 %v3272
    %v3353 = vunpack.c.l.b16 %v3273
    %v3354 = vunpack.c.h.b16 %v3273
    %v3355 = vunpack.c.l.b16 %v3274
    %v3356 = vunpack.c.h.b16 %v3274
    %v3357 = vunpack.c.l.b16 %v3275
    %v3358 = vunpack.c.h.b16 %v3275
    %v3359 = vunpack.c.l.b16 %v3276
    %v3360 = vunpack.c.h.b16 %v3276
    %v3361 = vunpack.c.l.b16 %v3277
    %v3362 = vunpack.c.h.b16 %v3277
    %v3363 = vunpack.c.l.b16 %v3278
    %v3364 = vunpack.c.h.b16 %v3278
    %v3365 = vunpack.c.l.b16 %v3279
    %v3366 = vunpack.c.h.b16 %v3279
    %v3367 = vunpack.c.l.b16 %v3280
    %v3368 = vunpack.c.h.b16 %v3280
    %v3369 = vunpack.c.l.b16 %v3281
    %v3370 = vunpack.c.h.b16 %v3281
    %v3371 = vunpack.c.l.b16 %v3282
    %v3372 = vunpack.c.h.b16 %v3282
    %v3373 = vunpack.c.l.b16 %v3283
    %v3374 = vunpack.c.h.b16 %v3283
    %v3375 = vunpack.c.l.b16 %v3284
    %v3376 = vunpack.c.h.b16 %v3284
    %v3377 = vunpack.c.l.b16 %v3285
    %v3378 = vunpack.c.h.b16 %v3285
    %v3379 = vunpack.c.l.b16 %v3286
    %v3380 = vunpack.c.h.b16 %v3286
    %v3381 = vunpack.c.l.b16 %v3287
    %v3382 = vunpack.c.h.b16 %v3287
    %v3383 = vunpack.c.l.b16 %v3288
    %v3384 = vunpack.c.h.b16 %v3288
    %v3385 = vpack.c.b16 %v3325, %v3321
    %v3386 = vpack.c.b16 %v3326, %v3322
    %v3387 = vpack.c.b16 %v3327, %v3323
    %v3388 = vpack.c.b16 %v3328, %v3324
    %v3389 = vpack.c.b16 %v3333, %v3329
    %v3390 = vpack.c.b16 %v3334, %v3330
    %v3391 = vpack.c.b16 %v3335, %v3331
    %v3392 = vpack.c.b16 %v3336, %v3332
    %v3393 = vpack.c.b16 %v3341, %v3337
    %v3394 = vpack.c.b16 %v3342, %v3338
    %v3395 = vpack.c.b16 %v3343, %v3339
    %v3396 = vpack.c.b16 %v3344, %v3340
    %v3397 = vpack.c.b16 %v3349, %v3345
    %v3398 = vpack.c.b16 %v3350, %v3346
    %v3399 = vpack.c.b16 %v3351, %v3347
    %v3400 = vpack.c.b16 %v3352, %v3348
    %v3401 = vpack.c.b16 %v3357, %v3353
    %v3402 = vpack.c.b16 %v3358, %v3354
    %v3403 = vpack.c.b16 %v3359, %v3355
    %v3404 = vpack.c.b16 %v3360, %v3356
    %v3405 = vpack.c.b16 %v3365, %v3361
    %v3406 = vpack.c.b16 %v3366, %v3362
    %v3407 = vpack.c.b16 %v3367, %v3363
    %v3408 = vpack.c.b16 %v3368, %v3364
    %v3409 = vpack.c.b16 %v3373, %v3369
    %v3410 = vpack.c.b16 %v3374, %v3370
    %v3411 = vpack.c.b16 %v3375, %v3371
    %v3412 = vpack.c.b16 %v3376, %v3372
    %v3413 = vpack.c.b16 %v3381, %v3377
    %v3414 = vpack.c.b16 %v3382, %v3378
    %v3415 = vpack.c.b16 %v3383, %v3379
    %v3416 = vpack.c.b16 %v3384, %v3380
    %3449 = vmatprep.subr.bf16.mxu0 %v3414
    %3450 = vmatpush1.bf16.msra.mxu0 %v3413
    %3451 = vmatprep.subr.bf16.mxu0 %v3410
    %3452 = vmatpush1.bf16.msra.mxu0 %v3409
    %3453 = vmatprep.subr.bf16.mxu0 %v3406
    %3454 = vmatpush1.bf16.msra.mxu0 %v3405
    %3455 = vmatprep.subr.bf16.mxu0 %v3402
    %3456 = vmatpush1.bf16.msra.mxu0 %v3401
    %3457 = vmatprep.subr.bf16.mxu0 %v3398
    %3458 = vmatpush1.bf16.msra.mxu0 %v3397
    %3459 = vmatprep.subr.bf16.mxu0 %v3394
    %3460 = vmatpush1.bf16.msra.mxu0 %v3393
    %3461 = vmatprep.subr.bf16.mxu0 %v3390
    %3462 = vmatpush1.bf16.msra.mxu0 %v3389
    %3463 = vmatprep.subr.bf16.mxu0 %v3386
    %3464 = vmatpush1.bf16.msra.mxu0 %v3385
    %3465 = vmatprep.subr.bf16.mxu0 0
    %3466 = vmatpush2.bf16.msra.mxu0 0
    %3467 = vmatprep.subr.bf16.mxu0 0
    %3468 = vmatpush2.bf16.msra.mxu0 0
    %3469 = vmatprep.subr.bf16.mxu0 0
    %3470 = vmatpush2.bf16.msra.mxu0 0
    %3471 = vmatprep.subr.bf16.mxu0 0
    %3472 = vmatpush2.bf16.msra.mxu0 0
    %3473 = vmatprep.subr.bf16.mxu0 0
    %3474 = vmatpush2.bf16.msra.mxu0 0
    %3475 = vmatprep.subr.bf16.mxu0 0
    %3476 = vmatpush2.bf16.msra.mxu0 0
    %3477 = vmatprep.subr.bf16.mxu0 0
    %3478 = vmatpush2.bf16.msra.mxu0 0
    %3479 = vmatprep.subr.bf16.mxu0 0
    %3480 = vmatpush2.bf16.msra.mxu0 0
    %3481 = vmatprep.mubr.bf16.mxu0 0
    %3482 = vmatmul.mubr.bf16.gmra.mxu0 0
    %v3483 = vpop.f32.mrf.mxu0
    %v3484 = vadd.f32 0.0, %v3483
    %v3485 = vpop.f32.mrf.mxu0
    %v3486 = vadd.f32 0.0, %v3485
    %v3487 = vpop.f32.mrf.mxu0
    %v3488 = vpop.f32.mrf.mxu0
    %3489 = vdwg.mxu0
    %3490 = vmatprep.subr.bf16.mxu0 %v3416
    %3491 = vmatpush1.bf16.msra.mxu0 %v3415
    %3492 = vmatprep.subr.bf16.mxu0 %v3412
    %3493 = vmatpush1.bf16.msra.mxu0 %v3411
    %3494 = vmatprep.subr.bf16.mxu0 %v3408
    %3495 = vmatpush1.bf16.msra.mxu0 %v3407
    %3496 = vmatprep.subr.bf16.mxu0 %v3404
    %3497 = vmatpush1.bf16.msra.mxu0 %v3403
    %3498 = vmatprep.subr.bf16.mxu0 %v3400
    %3499 = vmatpush1.bf16.msra.mxu0 %v3399
    %3500 = vmatprep.subr.bf16.mxu0 %v3396
    %3501 = vmatpush1.bf16.msra.mxu0 %v3395
    %3502 = vmatprep.subr.bf16.mxu0 %v3392
    %3503 = vmatpush1.bf16.msra.mxu0 %v3391
    %3504 = vmatprep.subr.bf16.mxu0 %v3388
    %3505 = vmatpush1.bf16.msra.mxu0 %v3387
    %3506 = vmatprep.subr.bf16.mxu0 0
    %3507 = vmatpush2.bf16.msra.mxu0 0
    %3508 = vmatprep.subr.bf16.mxu0 0
    %3509 = vmatpush2.bf16.msra.mxu0 0
    %3510 = vmatprep.subr.bf16.mxu0 0
    %3511 = vmatpush2.bf16.msra.mxu0 0
    %3512 = vmatprep.subr.bf16.mxu0 0
    %3513 = vmatpush2.bf16.msra.mxu0 0
    %3514 = vmatprep.subr.bf16.mxu0 0
    %3515 = vmatpush2.bf16.msra.mxu0 0
    %3516 = vmatprep.subr.bf16.mxu0 0
    %3517 = vmatpush2.bf16.msra.mxu0 0
    %3518 = vmatprep.subr.bf16.mxu0 0
    %3519 = vmatpush2.bf16.msra.mxu0 0
    %3520 = vmatprep.subr.bf16.mxu0 0
    %3521 = vmatpush2.bf16.msra.mxu0 0
    %3522 = vmatprep.mubr.bf16.mxu0 0
    %3523 = vmatmul.mubr.bf16.gmra.mxu0 0
    %v3524 = vpop.f32.mrf.mxu0
    %v3525 = vadd.f32 0.0, %v3524
    %v3526 = vpop.f32.mrf.mxu0
    %v3527 = vadd.f32 0.0, %v3526
    %v3528 = vpop.f32.mrf.mxu0
    %v3529 = vpop.f32.mrf.mxu0
    %3530 = vdwg.mxu0
    %v3531 = vadd.f32 %v3253, %v3484
    %v3532 = vadd.f32 %v3254, %v3486
    %v3533 = vadd.f32 %v3255, %v3525
    %v3534 = vadd.f32 %v3256, %v3527
    %v3535 = vxor.u32 %v3531, 2147483648
    %v3536 = vmul.f32 %v3535, 1.442695
    %v3537 = vpow.pop %v3536
    %v3538 = vadd.f32 %v3537, 1.0
    %v3539 = vrcp.pop %v3538
    %v3540 = vmul.f32 1.0, %v3539
    %v3541 = vxor.u32 %v3532, 2147483648
    %v3542 = vmul.f32 %v3541, 1.442695
    %v3543 = vpow.pop %v3542
    %v3544 = vadd.f32 %v3543, 1.0
    %v3545 = vrcp.pop %v3544
    %v3546 = vmul.f32 1.0, %v3545
    %v3547 = vtanh.pop %v3533
    %v3548 = vxor.u32 %v3534, 2147483648
    %v3549 = vmul.f32 %v3548, 1.442695
    %v3550 = vpow.pop %v3549
    %v3551 = vadd.f32 %v3550, 1.0
    %v3552 = vrcp.pop %v3551
    %v3553 = vmul.f32 1.0, %v3552
    %v3554 = vmul.f32 %v3546, 0.0
    %v3555 = vmul.f32 %v3540, %v3547
    %v3556 = vadd.f32 %v3554, %v3555
    %v3557 = vtanh.pop %v3556
    %v3558 = vmul.f32 %v3553, %v3557
    %v3559 = vld [vmem:[#allocation3 + $0x20] sm:$0xff]
    %v3560 = vld [vmem:[#allocation3 + $0x28] sm:$0xff]
    %v3561 = vld [vmem:[#allocation3 + $0x30] sm:$0xff]
    %v3562 = vld [vmem:[#allocation3 + $0x38] sm:$0xff]
    %v3563 = vpack.c.bf16 %v3558, %v3558
    %3564 = vmatprep.subr.bf16.mxu0 %v3414
    %3565 = vmatpush1.bf16.msra.mxu0 %v3413
    %3566 = vmatprep.subr.bf16.mxu0 %v3410
    %3567 = vmatpush1.bf16.msra.mxu0 %v3409
    %3568 = vmatprep.subr.bf16.mxu0 %v3406
    %3569 = vmatpush1.bf16.msra.mxu0 %v3405
    %3570 = vmatprep.subr.bf16.mxu0 %v3402
    %3571 = vmatpush1.bf16.msra.mxu0 %v3401
    %3572 = vmatprep.subr.bf16.mxu0 %v3398
    %3573 = vmatpush1.bf16.msra.mxu0 %v3397
    %3574 = vmatprep.subr.bf16.mxu0 %v3394
    %3575 = vmatpush1.bf16.msra.mxu0 %v3393
    %3576 = vmatprep.subr.bf16.mxu0 %v3390
    %3577 = vmatpush1.bf16.msra.mxu0 %v3389
    %3578 = vmatprep.subr.bf16.mxu0 %v3386
    %3579 = vmatpush1.bf16.msra.mxu0 %v3385
    %3580 = vmatprep.subr.bf16.mxu0 0
    %3581 = vmatpush2.bf16.msra.mxu0 0
    %3582 = vmatprep.subr.bf16.mxu0 0
    %3583 = vmatpush2.bf16.msra.mxu0 0
    %3584 = vmatprep.subr.bf16.mxu0 0
    %3585 = vmatpush2.bf16.msra.mxu0 0
    %3586 = vmatprep.subr.bf16.mxu0 0
    %3587 = vmatpush2.bf16.msra.mxu0 0
    %3588 = vmatprep.subr.bf16.mxu0 0
    %3589 = vmatpush2.bf16.msra.mxu0 0
    %3590 = vmatprep.subr.bf16.mxu0 0
    %3591 = vmatpush2.bf16.msra.mxu0 0
    %3592 = vmatprep.subr.bf16.mxu0 0
    %3593 = vmatpush2.bf16.msra.mxu0 0
    %3594 = vmatprep.subr.bf16.mxu0 0
    %3595 = vmatpush2.bf16.msra.mxu0 0
    %3596 = vmatprep.mubr.bf16.mxu0 0
    %3597 = vmatmul.mubr.bf16.gmra.mxu0 %v3563
    %v3598 = vpop.f32.mrf.mxu0
    %v3599 = vadd.f32 0.0, %v3598
    %v3600 = vpop.f32.mrf.mxu0
    %v3601 = vadd.f32 0.0, %v3600
    %v3602 = vpop.f32.mrf.mxu0
    %v3603 = vpop.f32.mrf.mxu0
    %3604 = vdwg.mxu0
    %3605 = vmatprep.subr.bf16.mxu0 %v3416
    %3606 = vmatpush1.bf16.msra.mxu0 %v3415
    %3607 = vmatprep.subr.bf16.mxu0 %v3412
    %3608 = vmatpush1.bf16.msra.mxu0 %v3411
    %3609 = vmatprep.subr.bf16.mxu0 %v3408
    %3610 = vmatpush1.bf16.msra.mxu0 %v3407
    %3611 = vmatprep.subr.bf16.mxu0 %v3404
    %3612 = vmatpush1.bf16.msra.mxu0 %v3403
    %3613 = vmatprep.subr.bf16.mxu0 %v3400
    %3614 = vmatpush1.bf16.msra.mxu0 %v3399
    %3615 = vmatprep.subr.bf16.mxu0 %v3396
    %3616 = vmatpush1.bf16.msra.mxu0 %v3395
    %3617 = vmatprep.subr.bf16.mxu0 %v3392
    %3618 = vmatpush1.bf16.msra.mxu0 %v3391
    %3619 = vmatprep.subr.bf16.mxu0 %v3388
    %3620 = vmatpush1.bf16.msra.mxu0 %v3387
    %3621 = vmatprep.subr.bf16.mxu0 0
    %3622 = vmatpush2.bf16.msra.mxu0 0
    %3623 = vmatprep.subr.bf16.mxu0 0
    %3624 = vmatpush2.bf16.msra.mxu0 0
    %3625 = vmatprep.subr.bf16.mxu0 0
    %3626 = vmatpush2.bf16.msra.mxu0 0
    %3627 = vmatprep.subr.bf16.mxu0 0
    %3628 = vmatpush2.bf16.msra.mxu0 0
    %3629 = vmatprep.subr.bf16.mxu0 0
    %3630 = vmatpush2.bf16.msra.mxu0 0
    %3631 = vmatprep.subr.bf16.mxu0 0
    %3632 = vmatpush2.bf16.msra.mxu0 0
    %3633 = vmatprep.subr.bf16.mxu0 0
    %3634 = vmatpush2.bf16.msra.mxu0 0
    %3635 = vmatprep.subr.bf16.mxu0 0
    %3636 = vmatpush2.bf16.msra.mxu0 0
    %3637 = vmatprep.mubr.bf16.mxu0 0
    %3638 = vmatmul.mubr.bf16.gmra.mxu0 %v3563
    %v3639 = vpop.f32.mrf.mxu0
    %v3640 = vadd.f32 0.0, %v3639
    %v3641 = vpop.f32.mrf.mxu0
    %v3642 = vadd.f32 0.0, %v3641
    %v3643 = vpop.f32.mrf.mxu0
    %v3644 = vpop.f32.mrf.mxu0
    %3645 = vdwg.mxu0
    %v3646 = vadd.f32 %v3559, %v3599
    %v3647 = vadd.f32 %v3560, %v3601
    %v3648 = vadd.f32 %v3561, %v3640
    %v3649 = vadd.f32 %v3562, %v3642
    %v3650 = vxor.u32 %v3646, 2147483648
    %v3651 = vmul.f32 %v3650, 1.442695
    %v3652 = vpow.pop %v3651
    %v3653 = vadd.f32 %v3652, 1.0
    %v3654 = vrcp.pop %v3653
    %v3655 = vmul.f32 1.0, %v3654
    %v3656 = vxor.u32 %v3647, 2147483648
    %v3657 = vmul.f32 %v3656, 1.442695
    %v3658 = vpow.pop %v3657
    %v3659 = vadd.f32 %v3658, 1.0
    %v3660 = vrcp.pop %v3659
    %v3661 = vmul.f32 1.0, %v3660
    %v3662 = vtanh.pop %v3648
    %v3663 = vxor.u32 %v3649, 2147483648
    %v3664 = vmul.f32 %v3663, 1.442695
    %v3665 = vpow.pop %v3664
    %v3666 = vadd.f32 %v3665, 1.0
    %v3667 = vrcp.pop %v3666
    %v3668 = vmul.f32 1.0, %v3667
    %v3669 = vmul.f32 %v3661, %v3556
    %v3670 = vmul.f32 %v3655, %v3662
    %v3671 = vadd.f32 %v3669, %v3670
    %v3672 = vtanh.pop %v3671
    %v3673 = vmul.f32 %v3668, %v3672
    %v3674 = vld [vmem:[#allocation3 + $0x40] sm:$0xff]
    %v3675 = vld [vmem:[#allocation3 + $0x48] sm:$0xff]
    %v3676 = vld [vmem:[#allocation3 + $0x50] sm:$0xff]
    %v3677 = vld [vmem:[#allocation3 + $0x58] sm:$0xff]
    %v3678 = vpack.c.bf16 %v3673, %v3673
    %3679 = vmatprep.subr.bf16.mxu0 %v3414
    %3680 = vmatpush1.bf16.msra.mxu0 %v3413
    %3681 = vmatprep.subr.bf16.mxu0 %v3410
    %3682 = vmatpush1.bf16.msra.mxu0 %v3409
    %3683 = vmatprep.subr.bf16.mxu0 %v3406
    %3684 = vmatpush1.bf16.msra.mxu0 %v3405
    %3685 = vmatprep.subr.bf16.mxu0 %v3402
    %3686 = vmatpush1.bf16.msra.mxu0 %v3401
    %3687 = vmatprep.subr.bf16.mxu0 %v3398
    %3688 = vmatpush1.bf16.msra.mxu0 %v3397
    %3689 = vmatprep.subr.bf16.mxu0 %v3394
    %3690 = vmatpush1.bf16.msra.mxu0 %v3393
    %3691 = vmatprep.subr.bf16.mxu0 %v3390
    %3692 = vmatpush1.bf16.msra.mxu0 %v3389
    %3693 = vmatprep.subr.bf16.mxu0 %v3386
    %3694 = vmatpush1.bf16.msra.mxu0 %v3385
    %3695 = vmatprep.subr.bf16.mxu0 0
    %3696 = vmatpush2.bf16.msra.mxu0 0
    %3697 = vmatprep.subr.bf16.mxu0 0
    %3698 = vmatpush2.bf16.msra.mxu0 0
    %3699 = vmatprep.subr.bf16.mxu0 0
    %3700 = vmatpush2.bf16.msra.mxu0 0
    %3701 = vmatprep.subr.bf16.mxu0 0
    %3702 = vmatpush2.bf16.msra.mxu0 0
    %3703 = vmatprep.subr.bf16.mxu0 0
    %3704 = vmatpush2.bf16.msra.mxu0 0
    %3705 = vmatprep.subr.bf16.mxu0 0
    %3706 = vmatpush2.bf16.msra.mxu0 0
    %3707 = vmatprep.subr.bf16.mxu0 0
    %3708 = vmatpush2.bf16.msra.mxu0 0
    %3709 = vmatprep.subr.bf16.mxu0 0
    %3710 = vmatpush2.bf16.msra.mxu0 0
    %3711 = vmatprep.mubr.bf16.mxu0 0
    %3712 = vmatmul.mubr.bf16.gmra.mxu0 %v3678
    %v3713 = vpop.f32.mrf.mxu0
    %v3714 = vadd.f32 0.0, %v3713
    %v3715 = vpop.f32.mrf.mxu0
    %v3716 = vadd.f32 0.0, %v3715
    %v3717 = vpop.f32.mrf.mxu0
    %v3718 = vpop.f32.mrf.mxu0
    %3719 = vdwg.mxu0
    %3720 = vmatprep.subr.bf16.mxu0 %v3416
    %3721 = vmatpush1.bf16.msra.mxu0 %v3415
    %3722 = vmatprep.subr.bf16.mxu0 %v3412
    %3723 = vmatpush1.bf16.msra.mxu0 %v3411
    %3724 = vmatprep.subr.bf16.mxu0 %v3408
    %3725 = vmatpush1.bf16.msra.mxu0 %v3407
    %3726 = vmatprep.subr.bf16.mxu0 %v3404
    %3727 = vmatpush1.bf16.msra.mxu0 %v3403
    %3728 = vmatprep.subr.bf16.mxu0 %v3400
    %3729 = vmatpush1.bf16.msra.mxu0 %v3399
    %3730 = vmatprep.subr.bf16.mxu0 %v3396
    %3731 = vmatpush1.bf16.msra.mxu0 %v3395
    %3732 = vmatprep.subr.bf16.mxu0 %v3392
    %3733 = vmatpush1.bf16.msra.mxu0 %v3391
    %3734 = vmatprep.subr.bf16.mxu0 %v3388
    %3735 = vmatpush1.bf16.msra.mxu0 %v3387
    %3736 = vmatprep.subr.bf16.mxu0 0
    %3737 = vmatpush2.bf16.msra.mxu0 0
    %3738 = vmatprep.subr.bf16.mxu0 0
    %3739 = vmatpush2.bf16.msra.mxu0 0
    %3740 = vmatprep.subr.bf16.mxu0 0
    %3741 = vmatpush2.bf16.msra.mxu0 0
    %3742 = vmatprep.subr.bf16.mxu0 0
    %3743 = vmatpush2.bf16.msra.mxu0 0
    %3744 = vmatprep.subr.bf16.mxu0 0
    %3745 = vmatpush2.bf16.msra.mxu0 0
    %3746 = vmatprep.subr.bf16.mxu0 0
    %3747 = vmatpush2.bf16.msra.mxu0 0
    %3748 = vmatprep.subr.bf16.mxu0 0
    %3749 = vmatpush2.bf16.msra.mxu0 0
    %3750 = vmatprep.subr.bf16.mxu0 0
    %3751 = vmatpush2.bf16.msra.mxu0 0
    %3752 = vmatprep.mubr.bf16.mxu0 0
    %3753 = vmatmul.mubr.bf16.gmra.mxu0 %v3678
    %v3754 = vpop.f32.mrf.mxu0
    %v3755 = vadd.f32 0.0, %v3754
    %v3756 = vpop.f32.mrf.mxu0
    %v3757 = vadd.f32 0.0, %v3756
    %v3758 = vpop.f32.mrf.mxu0
    %v3759 = vpop.f32.mrf.mxu0
    %3760 = vdwg.mxu0
    %v3761 = vadd.f32 %v3674, %v3714
    %v3762 = vadd.f32 %v3675, %v3716
    %v3763 = vadd.f32 %v3676, %v3755
    %v3764 = vadd.f32 %v3677, %v3757
    %v3765 = vxor.u32 %v3761, 2147483648
    %v3766 = vmul.f32 %v3765, 1.442695
    %v3767 = vpow.pop %v3766
    %v3768 = vadd.f32 %v3767, 1.0
    %v3769 = vrcp.pop %v3768
    %v3770 = vmul.f32 1.0, %v3769
    %v3771 = vxor.u32 %v3762, 2147483648
    %v3772 = vmul.f32 %v3771, 1.442695
    %v3773 = vpow.pop %v3772
    %v3774 = vadd.f32 %v3773, 1.0
    %v3775 = vrcp.pop %v3774
    %v3776 = vmul.f32 1.0, %v3775
    %v3777 = vtanh.pop %v3763
    %v3778 = vxor.u32 %v3764, 2147483648
    %v3779 = vmul.f32 %v3778, 1.442695
    %v3780 = vpow.pop %v3779
    %v3781 = vadd.f32 %v3780, 1.0
    %v3782 = vrcp.pop %v3781
    %v3783 = vmul.f32 1.0, %v3782
    %v3784 = vmul.f32 %v3776, %v3671
    %v3785 = vmul.f32 %v3770, %v3777
    %v3786 = vadd.f32 %v3784, %v3785
    %v3787 = vtanh.pop %v3786
    %v3788 = vmul.f32 %v3783, %v3787
    %v3789 = vld [vmem:[#allocation3 + $0x60] sm:$0xff]
    %v3790 = vld [vmem:[#allocation3 + $0x68] sm:$0xff]
    %v3791 = vld [vmem:[#allocation3 + $0x70] sm:$0xff]
    %v3792 = vld [vmem:[#allocation3 + $0x78] sm:$0xff]
    %v3793 = vpack.c.bf16 %v3788, %v3788
    %3794 = vmatprep.subr.bf16.mxu0 %v3414
    %3795 = vmatpush1.bf16.msra.mxu0 %v3413
    %3796 = vmatprep.subr.bf16.mxu0 %v3410
    %3797 = vmatpush1.bf16.msra.mxu0 %v3409
    %3798 = vmatprep.subr.bf16.mxu0 %v3406
    %3799 = vmatpush1.bf16.msra.mxu0 %v3405
    %3800 = vmatprep.subr.bf16.mxu0 %v3402
    %3801 = vmatpush1.bf16.msra.mxu0 %v3401
    %3802 = vmatprep.subr.bf16.mxu0 %v3398
    %3803 = vmatpush1.bf16.msra.mxu0 %v3397
    %3804 = vmatprep.subr.bf16.mxu0 %v3394
    %3805 = vmatpush1.bf16.msra.mxu0 %v3393
    %3806 = vmatprep.subr.bf16.mxu0 %v3390
    %3807 = vmatpush1.bf16.msra.mxu0 %v3389
    %3808 = vmatprep.subr.bf16.mxu0 %v3386
    %3809 = vmatpush1.bf16.msra.mxu0 %v3385
    %3810 = vmatprep.subr.bf16.mxu0 0
    %3811 = vmatpush2.bf16.msra.mxu0 0
    %3812 = vmatprep.subr.bf16.mxu0 0
    %3813 = vmatpush2.bf16.msra.mxu0 0
    %3814 = vmatprep.subr.bf16.mxu0 0
    %3815 = vmatpush2.bf16.msra.mxu0 0
    %3816 = vmatprep.subr.bf16.mxu0 0
    %3817 = vmatpush2.bf16.msra.mxu0 0
    %3818 = vmatprep.subr.bf16.mxu0 0
    %3819 = vmatpush2.bf16.msra.mxu0 0
    %3820 = vmatprep.subr.bf16.mxu0 0
    %3821 = vmatpush2.bf16.msra.mxu0 0
    %3822 = vmatprep.subr.bf16.mxu0 0
    %3823 = vmatpush2.bf16.msra.mxu0 0
    %3824 = vmatprep.subr.bf16.mxu0 0
    %3825 = vmatpush2.bf16.msra.mxu0 0
    %3826 = vmatprep.mubr.bf16.mxu0 0
    %3827 = vmatmul.mubr.bf16.gmra.mxu0 %v3793
    %v3828 = vpop.f32.mrf.mxu0
    %v3829 = vadd.f32 0.0, %v3828
    %v3830 = vpop.f32.mrf.mxu0
    %v3831 = vadd.f32 0.0, %v3830
    %v3832 = vpop.f32.mrf.mxu0
    %v3833 = vpop.f32.mrf.mxu0
    %3834 = vdwg.mxu0
    %3835 = vmatprep.subr.bf16.mxu0 %v3416
    %3836 = vmatpush1.bf16.msra.mxu0 %v3415
    %3837 = vmatprep.subr.bf16.mxu0 %v3412
    %3838 = vmatpush1.bf16.msra.mxu0 %v3411
    %3839 = vmatprep.subr.bf16.mxu0 %v3408
    %3840 = vmatpush1.bf16.msra.mxu0 %v3407
    %3841 = vmatprep.subr.bf16.mxu0 %v3404
    %3842 = vmatpush1.bf16.msra.mxu0 %v3403
    %3843 = vmatprep.subr.bf16.mxu0 %v3400
    %3844 = vmatpush1.bf16.msra.mxu0 %v3399
    %3845 = vmatprep.subr.bf16.mxu0 %v3396
    %3846 = vmatpush1.bf16.msra.mxu0 %v3395
    %3847 = vmatprep.subr.bf16.mxu0 %v3392
    %3848 = vmatpush1.bf16.msra.mxu0 %v3391
    %3849 = vmatprep.subr.bf16.mxu0 %v3388
    %3850 = vmatpush1.bf16.msra.mxu0 %v3387
    %3851 = vmatprep.subr.bf16.mxu0 0
    %3852 = vmatpush2.bf16.msra.mxu0 0
    %3853 = vmatprep.subr.bf16.mxu0 0
    %3854 = vmatpush2.bf16.msra.mxu0 0
    %3855 = vmatprep.subr.bf16.mxu0 0
    %3856 = vmatpush2.bf16.msra.mxu0 0
    %3857 = vmatprep.subr.bf16.mxu0 0
    %3858 = vmatpush2.bf16.msra.mxu0 0
    %3859 = vmatprep.subr.bf16.mxu0 0
    %3860 = vmatpush2.bf16.msra.mxu0 0
    %3861 = vmatprep.subr.bf16.mxu0 0
    %3862 = vmatpush2.bf16.msra.mxu0 0
    %3863 = vmatprep.subr.bf16.mxu0 0
    %3864 = vmatpush2.bf16.msra.mxu0 0
    %3865 = vmatprep.subr.bf16.mxu0 0
    %3866 = vmatpush2.bf16.msra.mxu0 0
    %3867 = vmatprep.mubr.bf16.mxu0 0
    %3868 = vmatmul.mubr.bf16.gmra.mxu0 %v3793
    %v3869 = vpop.f32.mrf.mxu0
    %v3870 = vadd.f32 0.0, %v3869
    %v3871 = vpop.f32.mrf.mxu0
    %v3872 = vadd.f32 0.0, %v3871
    %v3873 = vpop.f32.mrf.mxu0
    %v3874 = vpop.f32.mrf.mxu0
    %3875 = vdwg.mxu0
    %v3876 = vadd.f32 %v3789, %v3829
    %v3877 = vadd.f32 %v3790, %v3831
    %v3878 = vadd.f32 %v3791, %v3870
    %v3879 = vadd.f32 %v3792, %v3872
    %v3880 = vxor.u32 %v3876, 2147483648
    %v3881 = vmul.f32 %v3880, 1.442695
    %v3882 = vpow.pop %v3881
    %v3883 = vadd.f32 %v3882, 1.0
    %v3884 = vrcp.pop %v3883
    %v3885 = vmul.f32 1.0, %v3884
    %v3886 = vxor.u32 %v3877, 2147483648
    %v3887 = vmul.f32 %v3886, 1.442695
    %v3888 = vpow.pop %v3887
    %v3889 = vadd.f32 %v3888, 1.0
    %v3890 = vrcp.pop %v3889
    %v3891 = vmul.f32 1.0, %v3890
    %v3892 = vtanh.pop %v3878
    %v3893 = vxor.u32 %v3879, 2147483648
    %v3894 = vmul.f32 %v3893, 1.442695
    %v3895 = vpow.pop %v3894
    %v3896 = vadd.f32 %v3895, 1.0
    %v3897 = vrcp.pop %v3896
    %v3898 = vmul.f32 1.0, %v3897
    %v3899 = vmul.f32 %v3891, %v3786
    %v3900 = vmul.f32 %v3885, %v3892
    %v3901 = vadd.f32 %v3899, %v3900
    %v3902 = vtanh.pop %v3901
    %v3903 = vmul.f32 %v3898, %v3902
    %v3904 = vld [vmem:[#allocation3 + $0x80] sm:$0xff]
    %v3905 = vld [vmem:[#allocation3 + $0x88] sm:$0xff]
    %v3906 = vld [vmem:[#allocation3 + $0x90] sm:$0xff]
    %v3907 = vld [vmem:[#allocation3 + $0x98] sm:$0xff]
    %v3908 = vpack.c.bf16 %v3903, %v3903
    %3909 = vmatprep.subr.bf16.mxu0 %v3414
    %3910 = vmatpush1.bf16.msra.mxu0 %v3413
    %3911 = vmatprep.subr.bf16.mxu0 %v3410
    %3912 = vmatpush1.bf16.msra.mxu0 %v3409
    %3913 = vmatprep.subr.bf16.mxu0 %v3406
    %3914 = vmatpush1.bf16.msra.mxu0 %v3405
    %3915 = vmatprep.subr.bf16.mxu0 %v3402
    %3916 = vmatpush1.bf16.msra.mxu0 %v3401
    %3917 = vmatprep.subr.bf16.mxu0 %v3398
    %3918 = vmatpush1.bf16.msra.mxu0 %v3397
    %3919 = vmatprep.subr.bf16.mxu0 %v3394
    %3920 = vmatpush1.bf16.msra.mxu0 %v3393
    %3921 = vmatprep.subr.bf16.mxu0 %v3390
    %3922 = vmatpush1.bf16.msra.mxu0 %v3389
    %3923 = vmatprep.subr.bf16.mxu0 %v3386
    %3924 = vmatpush1.bf16.msra.mxu0 %v3385
    %3925 = vmatprep.subr.bf16.mxu0 0
    %3926 = vmatpush2.bf16.msra.mxu0 0
    %3927 = vmatprep.subr.bf16.mxu0 0
    %3928 = vmatpush2.bf16.msra.mxu0 0
    %3929 = vmatprep.subr.bf16.mxu0 0
    %3930 = vmatpush2.bf16.msra.mxu0 0
    %3931 = vmatprep.subr.bf16.mxu0 0
    %3932 = vmatpush2.bf16.msra.mxu0 0
    %3933 = vmatprep.subr.bf16.mxu0 0
    %3934 = vmatpush2.bf16.msra.mxu0 0
    %3935 = vmatprep.subr.bf16.mxu0 0
    %3936 = vmatpush2.bf16.msra.mxu0 0
    %3937 = vmatprep.subr.bf16.mxu0 0
    %3938 = vmatpush2.bf16.msra.mxu0 0
    %3939 = vmatprep.subr.bf16.mxu0 0
    %3940 = vmatpush2.bf16.msra.mxu0 0
    %3941 = vmatprep.mubr.bf16.mxu0 0
    %3942 = vmatmul.mubr.bf16.gmra.mxu0 %v3908
    %v3943 = vpop.f32.mrf.mxu0
    %v3944 = vadd.f32 0.0, %v3943
    %v3945 = vpop.f32.mrf.mxu0
    %v3946 = vadd.f32 0.0, %v3945
    %v3947 = vpop.f32.mrf.mxu0
    %v3948 = vpop.f32.mrf.mxu0
    %3949 = vdwg.mxu0
    %3950 = vmatprep.subr.bf16.mxu0 %v3416
    %3951 = vmatpush1.bf16.msra.mxu0 %v3415
    %3952 = vmatprep.subr.bf16.mxu0 %v3412
    %3953 = vmatpush1.bf16.msra.mxu0 %v3411
    %3954 = vmatprep.subr.bf16.mxu0 %v3408
    %3955 = vmatpush1.bf16.msra.mxu0 %v3407
    %3956 = vmatprep.subr.bf16.mxu0 %v3404
    %3957 = vmatpush1.bf16.msra.mxu0 %v3403
    %3958 = vmatprep.subr.bf16.mxu0 %v3400
    %3959 = vmatpush1.bf16.msra.mxu0 %v3399
    %3960 = vmatprep.subr.bf16.mxu0 %v3396
    %3961 = vmatpush1.bf16.msra.mxu0 %v3395
    %3962 = vmatprep.subr.bf16.mxu0 %v3392
    %3963 = vmatpush1.bf16.msra.mxu0 %v3391
    %3964 = vmatprep.subr.bf16.mxu0 %v3388
    %3965 = vmatpush1.bf16.msra.mxu0 %v3387
    %3966 = vmatprep.subr.bf16.mxu0 0
    %3967 = vmatpush2.bf16.msra.mxu0 0
    %3968 = vmatprep.subr.bf16.mxu0 0
    %3969 = vmatpush2.bf16.msra.mxu0 0
    %3970 = vmatprep.subr.bf16.mxu0 0
    %3971 = vmatpush2.bf16.msra.mxu0 0
    %3972 = vmatprep.subr.bf16.mxu0 0
    %3973 = vmatpush2.bf16.msra.mxu0 0
    %3974 = vmatprep.subr.bf16.mxu0 0
    %3975 = vmatpush2.bf16.msra.mxu0 0
    %3976 = vmatprep.subr.bf16.mxu0 0
    %3977 = vmatpush2.bf16.msra.mxu0 0
    %3978 = vmatprep.subr.bf16.mxu0 0
    %3979 = vmatpush2.bf16.msra.mxu0 0
    %3980 = vmatprep.subr.bf16.mxu0 0
    %3981 = vmatpush2.bf16.msra.mxu0 0
    %3982 = vmatprep.mubr.bf16.mxu0 0
    %3983 = vmatmul.mubr.bf16.gmra.mxu0 %v3908
    %v3984 = vpop.f32.mrf.mxu0
    %v3985 = vadd.f32 0.0, %v3984
    %v3986 = vpop.f32.mrf.mxu0
    %v3987 = vadd.f32 0.0, %v3986
    %v3988 = vpop.f32.mrf.mxu0
    %v3989 = vpop.f32.mrf.mxu0
    %3990 = vdwg.mxu0
    %v3991 = vadd.f32 %v3904, %v3944
    %v3992 = vadd.f32 %v3905, %v3946
    %v3993 = vadd.f32 %v3906, %v3985
    %v3994 = vadd.f32 %v3907, %v3987
    %v3995 = vxor.u32 %v3991, 2147483648
    %v3996 = vmul.f32 %v3995, 1.442695
    %v3997 = vpow.pop %v3996
    %v3998 = vadd.f32 %v3997, 1.0
    %v3999 = vrcp.pop %v3998
    %v4000 = vmul.f32 1.0, %v3999
    %v4001 = vxor.u32 %v3992, 2147483648
    %v4002 = vmul.f32 %v4001, 1.442695
    %v4003 = vpow.pop %v4002
    %v4004 = vadd.f32 %v4003, 1.0
    %v4005 = vrcp.pop %v4004
    %v4006 = vmul.f32 1.0, %v4005
    %v4007 = vtanh.pop %v3993
    %v4008 = vxor.u32 %v3994, 2147483648
    %v4009 = vmul.f32 %v4008, 1.442695
    %v4010 = vpow.pop %v4009
    %v4011 = vadd.f32 %v4010, 1.0
    %v4012 = vrcp.pop %v4011
    %v4013 = vmul.f32 1.0, %v4012
    %v4014 = vmul.f32 %v4006, %v3901
    %v4015 = vmul.f32 %v4000, %v4007
    %v4016 = vadd.f32 %v4014, %v4015
    %v4017 = vtanh.pop %v4016
    %v4018 = vmul.f32 %v4013, %v4017
    %v4019 = vld [vmem:[#allocation3 + $0xa0] sm:$0xff]
    %v4020 = vld [vmem:[#allocation3 + $0xa8] sm:$0xff]
    %v4021 = vld [vmem:[#allocation3 + $0xb0] sm:$0xff]
    %v4022 = vld [vmem:[#allocation3 + $0xb8] sm:$0xff]
    %v4023 = vpack.c.bf16 %v4018, %v4018
    %4024 = vmatprep.subr.bf16.mxu0 %v3414
    %4025 = vmatpush1.bf16.msra.mxu0 %v3413
    %4026 = vmatprep.subr.bf16.mxu0 %v3410
    %4027 = vmatpush1.bf16.msra.mxu0 %v3409
    %4028 = vmatprep.subr.bf16.mxu0 %v3406
    %4029 = vmatpush1.bf16.msra.mxu0 %v3405
    %4030 = vmatprep.subr.bf16.mxu0 %v3402
    %4031 = vmatpush1.bf16.msra.mxu0 %v3401
    %4032 = vmatprep.subr.bf16.mxu0 %v3398
    %4033 = vmatpush1.bf16.msra.mxu0 %v3397
    %4034 = vmatprep.subr.bf16.mxu0 %v3394
    %4035 = vmatpush1.bf16.msra.mxu0 %v3393
    %4036 = vmatprep.subr.bf16.mxu0 %v3390
    %4037 = vmatpush1.bf16.msra.mxu0 %v3389
    %4038 = vmatprep.subr.bf16.mxu0 %v3386
    %4039 = vmatpush1.bf16.msra.mxu0 %v3385
    %4040 = vmatprep.subr.bf16.mxu0 0
    %4041 = vmatpush2.bf16.msra.mxu0 0
    %4042 = vmatprep.subr.bf16.mxu0 0
    %4043 = vmatpush2.bf16.msra.mxu0 0
    %4044 = vmatprep.subr.bf16.mxu0 0
    %4045 = vmatpush2.bf16.msra.mxu0 0
    %4046 = vmatprep.subr.bf16.mxu0 0
    %4047 = vmatpush2.bf16.msra.mxu0 0
    %4048 = vmatprep.subr.bf16.mxu0 0
    %4049 = vmatpush2.bf16.msra.mxu0 0
    %4050 = vmatprep.subr.bf16.mxu0 0
    %4051 = vmatpush2.bf16.msra.mxu0 0
    %4052 = vmatprep.subr.bf16.mxu0 0
    %4053 = vmatpush2.bf16.msra.mxu0 0
    %4054 = vmatprep.subr.bf16.mxu0 0
    %4055 = vmatpush2.bf16.msra.mxu0 0
    %4056 = vmatprep.mubr.bf16.mxu0 0
    %4057 = vmatmul.mubr.bf16.gmra.mxu0 %v4023
    %v4058 = vpop.f32.mrf.mxu0
    %v4059 = vadd.f32 0.0, %v4058
    %v4060 = vpop.f32.mrf.mxu0
    %v4061 = vadd.f32 0.0, %v4060
    %v4062 = vpop.f32.mrf.mxu0
    %v4063 = vpop.f32.mrf.mxu0
    %4064 = vdwg.mxu0
    %4065 = vmatprep.subr.bf16.mxu0 %v3416
    %4066 = vmatpush1.bf16.msra.mxu0 %v3415
    %4067 = vmatprep.subr.bf16.mxu0 %v3412
    %4068 = vmatpush1.bf16.msra.mxu0 %v3411
    %4069 = vmatprep.subr.bf16.mxu0 %v3408
    %4070 = vmatpush1.bf16.msra.mxu0 %v3407
    %4071 = vmatprep.subr.bf16.mxu0 %v3404
    %4072 = vmatpush1.bf16.msra.mxu0 %v3403
    %4073 = vmatprep.subr.bf16.mxu0 %v3400
    %4074 = vmatpush1.bf16.msra.mxu0 %v3399
    %4075 = vmatprep.subr.bf16.mxu0 %v3396
    %4076 = vmatpush1.bf16.msra.mxu0 %v3395
    %4077 = vmatprep.subr.bf16.mxu0 %v3392
    %4078 = vmatpush1.bf16.msra.mxu0 %v3391
    %4079 = vmatprep.subr.bf16.mxu0 %v3388
    %4080 = vmatpush1.bf16.msra.mxu0 %v3387
    %4081 = vmatprep.subr.bf16.mxu0 0
    %4082 = vmatpush2.bf16.msra.mxu0 0
    %4083 = vmatprep.subr.bf16.mxu0 0
    %4084 = vmatpush2.bf16.msra.mxu0 0
    %4085 = vmatprep.subr.bf16.mxu0 0
    %4086 = vmatpush2.bf16.msra.mxu0 0
    %4087 = vmatprep.subr.bf16.mxu0 0
    %4088 = vmatpush2.bf16.msra.mxu0 0
    %4089 = vmatprep.subr.bf16.mxu0 0
    %4090 = vmatpush2.bf16.msra.mxu0 0
    %4091 = vmatprep.subr.bf16.mxu0 0
    %4092 = vmatpush2.bf16.msra.mxu0 0
    %4093 = vmatprep.subr.bf16.mxu0 0
    %4094 = vmatpush2.bf16.msra.mxu0 0
    %4095 = vmatprep.subr.bf16.mxu0 0
    %4096 = vmatpush2.bf16.msra.mxu0 0
    %4097 = vmatprep.mubr.bf16.mxu0 0
    %4098 = vmatmul.mubr.bf16.gmra.mxu0 %v4023
    %v4099 = vpop.f32.mrf.mxu0
    %v4100 = vadd.f32 0.0, %v4099
    %v4101 = vpop.f32.mrf.mxu0
    %v4102 = vadd.f32 0.0, %v4101
    %v4103 = vpop.f32.mrf.mxu0
    %v4104 = vpop.f32.mrf.mxu0
    %4105 = vdwg.mxu0
    %v4106 = vadd.f32 %v4019, %v4059
    %v4107 = vadd.f32 %v4020, %v4061
    %v4108 = vadd.f32 %v4021, %v4100
    %v4109 = vadd.f32 %v4022, %v4102
    %v4110 = vxor.u32 %v4106, 2147483648
    %v4111 = vmul.f32 %v4110, 1.442695
    %v4112 = vpow.pop %v4111
    %v4113 = vadd.f32 %v4112, 1.0
    %v4114 = vrcp.pop %v4113
    %v4115 = vmul.f32 1.0, %v4114
    %v4116 = vxor.u32 %v4107, 2147483648
    %v4117 = vmul.f32 %v4116, 1.442695
    %v4118 = vpow.pop %v4117
    %v4119 = vadd.f32 %v4118, 1.0
    %v4120 = vrcp.pop %v4119
    %v4121 = vmul.f32 1.0, %v4120
    %v4122 = vtanh.pop %v4108
    %v4123 = vxor.u32 %v4109, 2147483648
    %v4124 = vmul.f32 %v4123, 1.442695
    %v4125 = vpow.pop %v4124
    %v4126 = vadd.f32 %v4125, 1.0
    %v4127 = vrcp.pop %v4126
    %v4128 = vmul.f32 1.0, %v4127
    %v4129 = vmul.f32 %v4121, %v4016
    %v4130 = vmul.f32 %v4115, %v4122
    %v4131 = vadd.f32 %v4129, %v4130
    %v4132 = vtanh.pop %v4131
    %v4133 = vmul.f32 %v4128, %v4132
    %v4134 = vld [vmem:[#allocation3 + $0xc0] sm:$0xff]
    %v4135 = vld [vmem:[#allocation3 + $0xc8] sm:$0xff]
    %v4136 = vld [vmem:[#allocation3 + $0xd0] sm:$0xff]
    %v4137 = vld [vmem:[#allocation3 + $0xd8] sm:$0xff]
    %v4138 = vpack.c.bf16 %v4133, %v4133
    %4139 = vmatprep.subr.bf16.mxu0 %v3414
    %4140 = vmatpush1.bf16.msra.mxu0 %v3413
    %4141 = vmatprep.subr.bf16.mxu0 %v3410
    %4142 = vmatpush1.bf16.msra.mxu0 %v3409
    %4143 = vmatprep.subr.bf16.mxu0 %v3406
    %4144 = vmatpush1.bf16.msra.mxu0 %v3405
    %4145 = vmatprep.subr.bf16.mxu0 %v3402
    %4146 = vmatpush1.bf16.msra.mxu0 %v3401
    %4147 = vmatprep.subr.bf16.mxu0 %v3398
    %4148 = vmatpush1.bf16.msra.mxu0 %v3397
    %4149 = vmatprep.subr.bf16.mxu0 %v3394
    %4150 = vmatpush1.bf16.msra.mxu0 %v3393
    %4151 = vmatprep.subr.bf16.mxu0 %v3390
    %4152 = vmatpush1.bf16.msra.mxu0 %v3389
    %4153 = vmatprep.subr.bf16.mxu0 %v3386
    %4154 = vmatpush1.bf16.msra.mxu0 %v3385
    %4155 = vmatprep.subr.bf16.mxu0 0
    %4156 = vmatpush2.bf16.msra.mxu0 0
    %4157 = vmatprep.subr.bf16.mxu0 0
    %4158 = vmatpush2.bf16.msra.mxu0 0
    %4159 = vmatprep.subr.bf16.mxu0 0
    %4160 = vmatpush2.bf16.msra.mxu0 0
    %4161 = vmatprep.subr.bf16.mxu0 0
    %4162 = vmatpush2.bf16.msra.mxu0 0
    %4163 = vmatprep.subr.bf16.mxu0 0
    %4164 = vmatpush2.bf16.msra.mxu0 0
    %4165 = vmatprep.subr.bf16.mxu0 0
    %4166 = vmatpush2.bf16.msra.mxu0 0
    %4167 = vmatprep.subr.bf16.mxu0 0
    %4168 = vmatpush2.bf16.msra.mxu0 0
    %4169 = vmatprep.subr.bf16.mxu0 0
    %4170 = vmatpush2.bf16.msra.mxu0 0
    %4171 = vmatprep.mubr.bf16.mxu0 0
    %4172 = vmatmul.mubr.bf16.gmra.mxu0 %v4138
    %v4173 = vpop.f32.mrf.mxu0
    %v4174 = vadd.f32 0.0, %v4173
    %v4175 = vpop.f32.mrf.mxu0
    %v4176 = vadd.f32 0.0, %v4175
    %v4177 = vpop.f32.mrf.mxu0
    %v4178 = vpop.f32.mrf.mxu0
    %4179 = vdwg.mxu0
    %4180 = vmatprep.subr.bf16.mxu0 %v3416
    %4181 = vmatpush1.bf16.msra.mxu0 %v3415
    %4182 = vmatprep.subr.bf16.mxu0 %v3412
    %4183 = vmatpush1.bf16.msra.mxu0 %v3411
    %4184 = vmatprep.subr.bf16.mxu0 %v3408
    %4185 = vmatpush1.bf16.msra.mxu0 %v3407
    %4186 = vmatprep.subr.bf16.mxu0 %v3404
    %4187 = vmatpush1.bf16.msra.mxu0 %v3403
    %4188 = vmatprep.subr.bf16.mxu0 %v3400
    %4189 = vmatpush1.bf16.msra.mxu0 %v3399
    %4190 = vmatprep.subr.bf16.mxu0 %v3396
    %4191 = vmatpush1.bf16.msra.mxu0 %v3395
    %4192 = vmatprep.subr.bf16.mxu0 %v3392
    %4193 = vmatpush1.bf16.msra.mxu0 %v3391
    %4194 = vmatprep.subr.bf16.mxu0 %v3388
    %4195 = vmatpush1.bf16.msra.mxu0 %v3387
    %4196 = vmatprep.subr.bf16.mxu0 0
    %4197 = vmatpush2.bf16.msra.mxu0 0
    %4198 = vmatprep.subr.bf16.mxu0 0
    %4199 = vmatpush2.bf16.msra.mxu0 0
    %4200 = vmatprep.subr.bf16.mxu0 0
    %4201 = vmatpush2.bf16.msra.mxu0 0
    %4202 = vmatprep.subr.bf16.mxu0 0
    %4203 = vmatpush2.bf16.msra.mxu0 0
    %4204 = vmatprep.subr.bf16.mxu0 0
    %4205 = vmatpush2.bf16.msra.mxu0 0
    %4206 = vmatprep.subr.bf16.mxu0 0
    %4207 = vmatpush2.bf16.msra.mxu0 0
    %4208 = vmatprep.subr.bf16.mxu0 0
    %4209 = vmatpush2.bf16.msra.mxu0 0
    %4210 = vmatprep.subr.bf16.mxu0 0
    %4211 = vmatpush2.bf16.msra.mxu0 0
    %4212 = vmatprep.mubr.bf16.mxu0 0
    %4213 = vmatmul.mubr.bf16.gmra.mxu0 %v4138
    %v4214 = vpop.f32.mrf.mxu0
    %v4215 = vadd.f32 0.0, %v4214
    %v4216 = vpop.f32.mrf.mxu0
    %v4217 = vadd.f32 0.0, %v4216
    %v4218 = vpop.f32.mrf.mxu0
    %v4219 = vpop.f32.mrf.mxu0
    %4220 = vdwg.mxu0
    %v4221 = vadd.f32 %v4134, %v4174
    %v4222 = vadd.f32 %v4135, %v4176
    %v4223 = vadd.f32 %v4136, %v4215
    %v4224 = vadd.f32 %v4137, %v4217
    %v4225 = vxor.u32 %v4221, 2147483648
    %v4226 = vmul.f32 %v4225, 1.442695
    %v4227 = vpow.pop %v4226
    %v4228 = vadd.f32 %v4227, 1.0
    %v4229 = vrcp.pop %v4228
    %v4230 = vmul.f32 1.0, %v4229
    %v4231 = vxor.u32 %v4222, 2147483648
    %v4232 = vmul.f32 %v4231, 1.442695
    %v4233 = vpow.pop %v4232
    %v4234 = vadd.f32 %v4233, 1.0
    %v4235 = vrcp.pop %v4234
    %v4236 = vmul.f32 1.0, %v4235
    %v4237 = vtanh.pop %v4223
    %v4238 = vxor.u32 %v4224, 2147483648
    %v4239 = vmul.f32 %v4238, 1.442695
    %v4240 = vpow.pop %v4239
    %v4241 = vadd.f32 %v4240, 1.0
    %v4242 = vrcp.pop %v4241
    %v4243 = vmul.f32 1.0, %v4242
    %v4244 = vmul.f32 %v4236, %v4131
    %v4245 = vmul.f32 %v4230, %v4237
    %v4246 = vadd.f32 %v4244, %v4245
    %v4247 = vtanh.pop %v4246
    %v4248 = vmul.f32 %v4243, %v4247
    %v4249 = vld [vmem:[#allocation3 + $0xe0] sm:$0xff]
    %v4250 = vld [vmem:[#allocation3 + $0xe8] sm:$0xff]
    %v4251 = vld [vmem:[#allocation3 + $0xf0] sm:$0xff]
    %v4252 = vld [vmem:[#allocation3 + $0xf8] sm:$0xff]
    %v4253 = vpack.c.bf16 %v4248, %v4248
    %4254 = vmatprep.subr.bf16.mxu0 %v3414
    %4255 = vmatpush1.bf16.msra.mxu0 %v3413
    %4256 = vmatprep.subr.bf16.mxu0 %v3410
    %4257 = vmatpush1.bf16.msra.mxu0 %v3409
    %4258 = vmatprep.subr.bf16.mxu0 %v3406
    %4259 = vmatpush1.bf16.msra.mxu0 %v3405
    %4260 = vmatprep.subr.bf16.mxu0 %v3402
    %4261 = vmatpush1.bf16.msra.mxu0 %v3401
    %4262 = vmatprep.subr.bf16.mxu0 %v3398
    %4263 = vmatpush1.bf16.msra.mxu0 %v3397
    %4264 = vmatprep.subr.bf16.mxu0 %v3394
    %4265 = vmatpush1.bf16.msra.mxu0 %v3393
    %4266 = vmatprep.subr.bf16.mxu0 %v3390
    %4267 = vmatpush1.bf16.msra.mxu0 %v3389
    %4268 = vmatprep.subr.bf16.mxu0 %v3386
    %4269 = vmatpush1.bf16.msra.mxu0 %v3385
    %4270 = vmatprep.subr.bf16.mxu0 0
    %4271 = vmatpush2.bf16.msra.mxu0 0
    %4272 = vmatprep.subr.bf16.mxu0 0
    %4273 = vmatpush2.bf16.msra.mxu0 0
    %4274 = vmatprep.subr.bf16.mxu0 0
    %4275 = vmatpush2.bf16.msra.mxu0 0
    %4276 = vmatprep.subr.bf16.mxu0 0
    %4277 = vmatpush2.bf16.msra.mxu0 0
    %4278 = vmatprep.subr.bf16.mxu0 0
    %4279 = vmatpush2.bf16.msra.mxu0 0
    %4280 = vmatprep.subr.bf16.mxu0 0
    %4281 = vmatpush2.bf16.msra.mxu0 0
    %4282 = vmatprep.subr.bf16.mxu0 0
    %4283 = vmatpush2.bf16.msra.mxu0 0
    %4284 = vmatprep.subr.bf16.mxu0 0
    %4285 = vmatpush2.bf16.msra.mxu0 0
    %4286 = vmatprep.mubr.bf16.mxu0 0
    %4287 = vmatmul.mubr.bf16.gmra.mxu0 %v4253
    %v4288 = vpop.f32.mrf.mxu0
    %v4289 = vadd.f32 0.0, %v4288
    %v4290 = vpop.f32.mrf.mxu0
    %v4291 = vadd.f32 0.0, %v4290
    %v4292 = vpop.f32.mrf.mxu0
    %v4293 = vpop.f32.mrf.mxu0
    %4294 = vdwg.mxu0
    %4295 = vmatprep.subr.bf16.mxu0 %v3416
    %4296 = vmatpush1.bf16.msra.mxu0 %v3415
    %4297 = vmatprep.subr.bf16.mxu0 %v3412
    %4298 = vmatpush1.bf16.msra.mxu0 %v3411
    %4299 = vmatprep.subr.bf16.mxu0 %v3408
    %4300 = vmatpush1.bf16.msra.mxu0 %v3407
    %4301 = vmatprep.subr.bf16.mxu0 %v3404
    %4302 = vmatpush1.bf16.msra.mxu0 %v3403
    %4303 = vmatprep.subr.bf16.mxu0 %v3400
    %4304 = vmatpush1.bf16.msra.mxu0 %v3399
    %4305 = vmatprep.subr.bf16.mxu0 %v3396
    %4306 = vmatpush1.bf16.msra.mxu0 %v3395
    %4307 = vmatprep.subr.bf16.mxu0 %v3392
    %4308 = vmatpush1.bf16.msra.mxu0 %v3391
    %4309 = vmatprep.subr.bf16.mxu0 %v3388
    %4310 = vmatpush1.bf16.msra.mxu0 %v3387
    %4311 = vmatprep.subr.bf16.mxu0 0
    %4312 = vmatpush2.bf16.msra.mxu0 0
    %4313 = vmatprep.subr.bf16.mxu0 0
    %4314 = vmatpush2.bf16.msra.mxu0 0
    %4315 = vmatprep.subr.bf16.mxu0 0
    %4316 = vmatpush2.bf16.msra.mxu0 0
    %4317 = vmatprep.subr.bf16.mxu0 0
    %4318 = vmatpush2.bf16.msra.mxu0 0
    %4319 = vmatprep.subr.bf16.mxu0 0
    %4320 = vmatpush2.bf16.msra.mxu0 0
    %4321 = vmatprep.subr.bf16.mxu0 0
    %4322 = vmatpush2.bf16.msra.mxu0 0
    %4323 = vmatprep.subr.bf16.mxu0 0
    %4324 = vmatpush2.bf16.msra.mxu0 0
    %4325 = vmatprep.subr.bf16.mxu0 0
    %4326 = vmatpush2.bf16.msra.mxu0 0
    %4327 = vmatprep.mubr.bf16.mxu0 0
    %4328 = vmatmul.mubr.bf16.gmra.mxu0 %v4253
    %v4329 = vpop.f32.mrf.mxu0
    %v4330 = vadd.f32 0.0, %v4329
    %v4331 = vpop.f32.mrf.mxu0
    %v4332 = vadd.f32 0.0, %v4331
    %v4333 = vpop.f32.mrf.mxu0
    %v4334 = vpop.f32.mrf.mxu0
    %4335 = vdwg.mxu0
    %v4336 = vadd.f32 %v4249, %v4289
    %v4337 = vadd.f32 %v4250, %v4291
    %v4338 = vadd.f32 %v4251, %v4330
    %v4339 = vadd.f32 %v4252, %v4332
    %v4340 = vxor.u32 %v4336, 2147483648
    %v4341 = vmul.f32 %v4340, 1.442695
    %v4342 = vpow.pop %v4341
    %v4343 = vadd.f32 %v4342, 1.0
    %v4344 = vrcp.pop %v4343
    %v4345 = vmul.f32 1.0, %v4344
    %v4346 = vxor.u32 %v4337, 2147483648
    %v4347 = vmul.f32 %v4346, 1.442695
    %v4348 = vpow.pop %v4347
    %v4349 = vadd.f32 %v4348, 1.0
    %v4350 = vrcp.pop %v4349
    %v4351 = vmul.f32 1.0, %v4350
    %v4352 = vtanh.pop %v4338
    %v4353 = vxor.u32 %v4339, 2147483648
    %v4354 = vmul.f32 %v4353, 1.442695
    %v4355 = vpow.pop %v4354
    %v4356 = vadd.f32 %v4355, 1.0
    %v4357 = vrcp.pop %v4356
    %v4358 = vmul.f32 1.0, %v4357
    %v4359 = vmul.f32 %v4351, %v4246
    %v4360 = vmul.f32 %v4345, %v4352
    %v4361 = vadd.f32 %v4359, %v4360
    %v4362 = vtanh.pop %v4361
    %v4363 = vmul.f32 %v4358, %v4362
    %v4364 = vld [vmem:[%s7] sm:$0x1]
    %v4366 = vlaneseq
    %v4367 = vshrl.u32 %v4366, 7
    %v4368 = vsub.s32 0, %v4367
    %v4369 = vrot.slane %v4364, %v4368
    %v4371 = vmul.f32 %v4363, %v4369
    %4372 = vadd.xlane.f32.xlu0 %v4371
    %v4373 = vpop.xlane.xlu0 %4372
    %v4374 = vld [vmem:[#allocation4] sm:$0x1]
    %v4376 = vlaneseq
    %v4377 = vshrl.u32 %v4376, 7
    %v4378 = vsub.s32 0, %v4377
    %v4379 = vrot.slane %v4374, %v4378
    %v4381 = vadd.f32 %v4373, %v4379
    %v4382 = vxor.u32 %v4381, 2147483648
    %v4383 = vmul.f32 %v4382, 1.442695
    %v4384 = vpow.pop %v4383
    %v4385 = vadd.f32 %v4384, 1.0
    %v4386 = vrcp.pop %v4385
    %v4387 = vmul.f32 1.0, %v4386
    %vm4388 = vcmask 7168
    %4389 = vst.msk [vmem:[%s9] sm:$0xff] %vm4388, %v4387
    // Predicated region
    $region50: #{rnn_model_forward.1} parent=1 // pred_check
      _
    $region51: #{rnn_model_forward.1} parent=1 // pred_check_branch
      %4391 = sbr.rel (0) target = $region53
    $region52: #{rnn_model_forward.1} parent=1 // pred_region
      _
    $region53: #{rnn_model_forward.1} parent=1 // pred_fallthru
      _
    // Predicated region
    $region54: #{rnn_model_forward.1} parent=1 // pred_check
      _
    $region55: #{rnn_model_forward.1} parent=1 // pred_check_branch
      %4393 = sbr.rel (0) target = $region57
    $region56: #{rnn_model_forward.1} parent=1 // pred_region
      _
    $region57: #{rnn_model_forward.1} parent=1 // pred_fallthru
      _
    %4394 = vsyncpa [#allocation6], 1
    %4395 = vsyncpa [#allocation8], 1

</llo_original>
